<compile_context>
chip_gen: v6e
topology: v6e:2x2x1
jax: 0.10.0
libtpu: 0.0.40
codegen_flags: <defaults>
</compile_context>

<pallas_src>
import functools

import jax
import jax.numpy as jnp
from jax import lax
from jax.experimental import pallas as pl
from jax.experimental.pallas import tpu as pltpu


def dkvmn_kernel(q_ref, qa_ref, qk_w_ref, gate_w_ref, gate_b_ref,
                 init_vmem_ref, read_wv_ref, read_b_ref,
                 h_ref,
                 w_bc_scr, decay_scr, addend_scr, reads_scr,
                 *, B, S, M, Vd, F, unroll):
    """Whole-sequence DKVMN forward: fused batched matmuls + register-carried recurrence."""
    SB = S * B

    q = q_ref[...]    # [S*B, Kd]
    qa = qa_ref[...]  # [S*B, Vd]

    # --- fused, state-independent batched matmuls (all timesteps at once) ---
    # q @ [key_memory^T | read_W_q]  -> attention logits (M lanes) + q projection (F lanes)
    qm = jnp.dot(q, qk_w_ref[...], preferred_element_type=jnp.float32)   # [S*B, M+F]
    sim = qm[:, :M]
    qproj = qm[:, M:M + F]

    # softmax over memory slots (off the serial path)
    sim = sim - jnp.max(sim, axis=1, keepdims=True)
    e = jnp.exp(sim)
    # approx=False keeps tight (1e-4) parity with the reference.
    w = e * pl.reciprocal(jnp.sum(e, axis=1, keepdims=True), approx=False)  # [S*B, M]

    # qa @ [erase_W | add_W] + [erase_b | add_b]  -> erase / add gates
    g = (jnp.dot(qa, gate_w_ref[...], preferred_element_type=jnp.float32)
         + gate_b_ref[...])                                              # [S*B, 2*Vd]
    erase = jax.nn.sigmoid(g[:, :Vd])
    add = jnp.tanh(g[:, Vd:])

    # --- hoisted outer products: bulk, pipelineable prologue work ---
    wb = w[:, :, None]                                                   # [S*B, M, 1]
    w_bc_scr[...] = jnp.broadcast_to(wb, (SB, M, Vd))
    decay_scr[...] = 1.0 - erase[:, None, :] * wb
    addend_scr[...] = add[:, None, :] * wb

    # --- serial recurrence: value memory carried in vregs (16 vregs) ---
    init_mem = jnp.broadcast_to(init_vmem_ref[...][None, :, :], (B, M, Vd))

    def step(s, mem):
        off = pl.multiple_of(s * B, B)
        w_s = w_bc_scr[pl.ds(off, B), :, :]                              # [B, M, Vd]
        # read from OLD memory (matches reference ordering)
        reads_scr[pl.ds(off, B), :] = jnp.sum(w_s * mem, axis=1)         # [B, Vd]
        # write: erase then add (precomputed decay/addend, no per-step relayout)
        return (mem * decay_scr[pl.ds(off, B), :, :]
                + addend_scr[pl.ds(off, B), :, :])

    lax.fori_loop(0, S, step, init_mem, unroll=unroll)

    # --- final fused read-embed: one batched matmul + tanh, single dense store ---
    h = jnp.tanh(
        jnp.dot(reads_scr[...], read_wv_ref[...], preferred_element_type=jnp.float32)
        + qproj + read_b_ref[...])                                       # [S*B, F]
    h_ref[...] = h.astype(h_ref.dtype)


def dkvmn_forward(q_embed, qa_embed, params):
    """q_embed: [B, S, Kd], qa_embed: [B, S, Vd] -> read_content_embed [B, S, F]."""
    B, S, Kd = q_embed.shape
    Vd = qa_embed.shape[2]
    M = params["init_value_memory"].shape[0]
    F = params["read_w_q"].shape[1]

    # Pad batch to a multiple of 8 so every vreg sublane is used in the loop.
    B_pad = ((B + 7) // 8) * 8
    pad = B_pad - B
    q = q_embed.astype(jnp.float32)
    qa = qa_embed.astype(jnp.float32)
    if pad:
        q = jnp.pad(q, ((0, pad), (0, 0), (0, 0)))
        qa = jnp.pad(qa, ((0, pad), (0, 0), (0, 0)))

    # Time-major + flattened to [S*B_pad, D] for batched MXU matmuls.
    q_flat = jnp.transpose(q, (1, 0, 2)).reshape(S * B_pad, Kd)
    qa_flat = jnp.transpose(qa, (1, 0, 2)).reshape(S * B_pad, Vd)

    # Fuse matmuls that share an operand (halves MXU weight pushes).
    qk_w = jnp.concatenate([params["key_memory_t"], params["read_w_q"]], axis=1)  # [Kd, M+F]
    gate_w = jnp.concatenate([params["erase_wt"], params["add_wt"]], axis=1)       # [Vd, 2*Vd]
    gate_b = jnp.concatenate([params["erase_b"], params["add_b"]], axis=1)         # [1, 2*Vd]

    vmem_spec = pl.BlockSpec(memory_space=pltpu.MemorySpace.VMEM)

    kernel = functools.partial(
        dkvmn_kernel, B=B_pad, S=S, M=M, Vd=Vd, F=F, unroll=min(S, 8))

    h_flat = pl.pallas_call(
        kernel,
        out_shape=jax.ShapeDtypeStruct((S * B_pad, F), jnp.float32),
        in_specs=[vmem_spec] * 8,
        out_specs=vmem_spec,
        scratch_shapes=[
            pltpu.VMEM((S * B_pad, M, Vd), jnp.float32),   # broadcast attention weights
            pltpu.VMEM((S * B_pad, M, Vd), jnp.float32),   # decay  = 1 - erase*w
            pltpu.VMEM((S * B_pad, M, Vd), jnp.float32),   # addend = add*w
            pltpu.VMEM((S * B_pad, Vd), jnp.float32),      # per-step read contents
        ],
        compiler_params=pltpu.CompilerParams(vmem_limit_bytes=32 * 1024 * 1024),
    )(q_flat, qa_flat, qk_w, gate_w, gate_b,
      params["init_value_memory"], params["read_w_v"], params["read_b"])

    h = h_flat.reshape(S, B_pad, F)[:, :B, :]
    return jnp.transpose(h, (1, 0, 2))  # back to [B, S, F]


def dkvmn_reference(q_embed, qa_embed, params):
    """Pure-JAX reference mirroring the PyTorch forward exactly."""
    B, S, _ = q_embed.shape
    vmem = jnp.broadcast_to(params["init_value_memory"][None],
                            (B,) + params["init_value_memory"].shape)
    hs = []
    for i in range(S):
        q = q_embed[:, i, :]
        qa = qa_embed[:, i, :]
        w = jax.nn.softmax(q @ params["key_memory_t"], axis=1)
        read = jnp.einsum("bm,bmv->bv", w, vmem)
        h = jnp.tanh(read @ params["read_w_v"] + q @ params["read_w_q"]
                     + params["read_b"])
        hs.append(h)
        erase = jax.nn.sigmoid(qa @ params["erase_wt"] + params["erase_b"])
        add = jnp.tanh(qa @ params["add_wt"] + params["add_b"])
        vmem = (vmem * (1.0 - erase[:, None, :] * w[:, :, None])
                + add[:, None, :] * w[:, :, None])
    return jnp.stack(hs, axis=1)


def init_params(key, memory_size, key_dim, value_dim, final_fc_dim):
    """Deterministic kaiming-normal-style init for all DKVMN parameters."""
    ks = jax.random.split(key, 8)

    def kaiming(k, shape, fan_in):
        return jax.random.normal(k, shape, jnp.float32) * jnp.sqrt(2.0 / fan_in)

    key_memory = kaiming(ks[0], (memory_size, key_dim), key_dim)
    init_value_memory = kaiming(ks[1], (memory_size, value_dim), value_dim)
    # Linear weights stored pre-transposed ([in, out]) so the kernel does x @ W.
    erase_wt = kaiming(ks[2], (value_dim, value_dim), value_dim)
    add_wt = kaiming(ks[3], (value_dim, value_dim), value_dim)
    read_w = kaiming(ks[4], (value_dim + final_fc_dim, final_fc_dim),
                     value_dim + final_fc_dim)
    return {
        "key_memory_t": key_memory.T,                 # [Kd, M]
        "init_value_memory": init_value_memory,       # [M, Vd]
        "erase_wt": erase_wt,                         # [Vd, Vd]
        "erase_b": jnp.zeros((1, value_dim), jnp.float32),
        "add_wt": add_wt,                             # [Vd, Vd]
        "add_b": jnp.zeros((1, value_dim), jnp.float32),
        "read_w_v": read_w[:value_dim, :],            # [Vd, F]
        "read_w_q": read_w[value_dim:, :],            # [Kd, F]
        "read_b": jnp.zeros((1, final_fc_dim), jnp.float32),
    }


if __name__ == "__main__":
    # Small shapes consistent with the module (key_embedding_dim == final_fc_dim
    # as required by read_embed_linear's input dimension).
    B, S = 4, 8
    memory_size = 16
    key_dim = 32          # key_embedding_dim == key_memory_state_dim == final_fc_dim
    value_dim = 128       # value_embedding_dim == value_memory_state_dim
    final_fc_dim = 32

    root = jax.random.PRNGKey(0)
    k_params, k_q, k_qa = jax.random.split(root, 3)

    params = init_params(k_params, memory_size, key_dim, value_dim, final_fc_dim)

    # forward() consumes already-embedded data (q_embed_data, qa_embed_data).
    # TODO(synk): nn.Embedding lookup / predict_linear / BCE loss live outside
    # forward(); only the forward pass is kernelized here.
    q_embed_data = jax.random.normal(k_q, (B, S, key_dim), jnp.float32)
    qa_embed_data = jax.random.normal(k_qa, (B, S, value_dim), jnp.float32)

    out = dkvmn_forward(q_embed_data, qa_embed_data, params)
    out = jax.block_until_ready(out)

    ref = dkvmn_reference(q_embed_data, qa_embed_data, params)
    assert out.shape == (B, S, final_fc_dim)
    assert jnp.allclose(out, ref, rtol=1e-4, atol=1e-4), (
        f"max abs err = {jnp.max(jnp.abs(out - ref))}")

    print("KERNEL_OK")
</pallas_src>

<mosaic_0001>
module attributes {stable_mosaic.version = 11 : i64} {
  func.func @dkvmn_kernel(%arg0: memref<64x32xf32, #tpu.memory_space<vmem>>, %arg1: memref<64x128xf32, #tpu.memory_space<vmem>>, %arg2: memref<32x48xf32, #tpu.memory_space<vmem>>, %arg3: memref<128x256xf32, #tpu.memory_space<vmem>>, %arg4: memref<1x256xf32, #tpu.memory_space<vmem>>, %arg5: memref<16x128xf32, #tpu.memory_space<vmem>>, %arg6: memref<128x32xf32, #tpu.memory_space<vmem>>, %arg7: memref<1x32xf32, #tpu.memory_space<vmem>>, %arg8: memref<64x32xf32, #tpu.memory_space<vmem>>, %arg9: memref<64x16x128xf32, #tpu.memory_space<vmem>>, %arg10: memref<64x16x128xf32, #tpu.memory_space<vmem>>, %arg11: memref<64x16x128xf32, #tpu.memory_space<vmem>>, %arg12: memref<64x128xf32, #tpu.memory_space<vmem>>) attributes {dimension_semantics = [], scalar_prefetch = 0 : i64, scratch_operands = 4 : i64, tpu.core_type = #tpu.core_type<tc>} {
    %c0 = arith.constant 0 : index
    %c0_0 = arith.constant 0 : index
    %0 = vector.load %arg0[%c0, %c0_0] : memref<64x32xf32, #tpu.memory_space<vmem>>, vector<64x32xf32>
    %c0_1 = arith.constant 0 : index
    %c0_2 = arith.constant 0 : index
    %1 = vector.load %arg1[%c0_1, %c0_2] : memref<64x128xf32, #tpu.memory_space<vmem>>, vector<64x128xf32>
    %c0_3 = arith.constant 0 : index
    %c0_4 = arith.constant 0 : index
    %2 = vector.load %arg2[%c0_3, %c0_4] : memref<32x48xf32, #tpu.memory_space<vmem>>, vector<32x48xf32>
    %cst = arith.constant dense<0.000000e+00> : vector<64x48xf32>
    %3 = tpu.matmul %0, %2, %cst {dimension_numbers = #tpu.dot_dimension_numbers<[1], [0], [0], [1], [0, 0, 1, 1], [], []>} : vector<64x32xf32>, vector<32x48xf32>, vector<64x48xf32> -> vector<64x48xf32>
    %4 = vector.extract_strided_slice %3 {offsets = [0, 0], sizes = [64, 16], strides = [1, 1]} : vector<64x48xf32> to vector<64x16xf32>
    %5 = vector.extract_strided_slice %3 {offsets = [0, 16], sizes = [64, 32], strides = [1, 1]} : vector<64x48xf32> to vector<64x32xf32>
    %cst_5 = arith.constant dense<0xFF800000> : vector<64xf32>
    %6 = vector.multi_reduction <maximumf>, %4, %cst_5 [1] : vector<64x16xf32> to vector<64xf32>
    %7 = vector.shape_cast %6 : vector<64xf32> to vector<64x1xf32>
    %8 = vector.broadcast %7 : vector<64x1xf32> to vector<64x16xf32>
    %9 = arith.subf %4, %8 : vector<64x16xf32>
    %10 = math.exp %9 : vector<64x16xf32>
    %cst_6 = arith.constant dense<0.000000e+00> : vector<64xf32>
    %11 = vector.multi_reduction <add>, %10, %cst_6 [1] : vector<64x16xf32> to vector<64xf32>
    %12 = vector.shape_cast %11 : vector<64xf32> to vector<64x1xf32>
    %13 = tpu.reciprocal %12 : vector<64x1xf32> -> vector<64x1xf32>
    %14 = vector.broadcast %13 : vector<64x1xf32> to vector<64x16xf32>
    %15 = arith.mulf %10, %14 : vector<64x16xf32>
    %c0_7 = arith.constant 0 : index
    %c0_8 = arith.constant 0 : index
    %16 = vector.load %arg3[%c0_7, %c0_8] : memref<128x256xf32, #tpu.memory_space<vmem>>, vector<128x256xf32>
    %cst_9 = arith.constant dense<0.000000e+00> : vector<64x256xf32>
    %17 = tpu.matmul %1, %16, %cst_9 {dimension_numbers = #tpu.dot_dimension_numbers<[1], [0], [0], [1], [0, 0, 1, 1], [], []>} : vector<64x128xf32>, vector<128x256xf32>, vector<64x256xf32> -> vector<64x256xf32>
    %c0_10 = arith.constant 0 : index
    %c0_11 = arith.constant 0 : index
    %18 = vector.load %arg4[%c0_10, %c0_11] : memref<1x256xf32, #tpu.memory_space<vmem>>, vector<1x256xf32>
    %19 = vector.broadcast %18 : vector<1x256xf32> to vector<64x256xf32>
    %20 = arith.addf %17, %19 : vector<64x256xf32>
    %21 = vector.extract_strided_slice %20 {offsets = [0, 0], sizes = [64, 128], strides = [1, 1]} : vector<64x256xf32> to vector<64x128xf32>
    %22 = arith.negf %21 : vector<64x128xf32>
    %23 = math.exp %22 : vector<64x128xf32>
    %cst_12 = arith.constant 1.000000e+00 : f32
    %24 = vector.broadcast %cst_12 : f32 to vector<64x128xf32>
    %25 = arith.addf %24, %23 : vector<64x128xf32>
    %26 = arith.divf %24, %25 : vector<64x128xf32>
    %27 = vector.extract_strided_slice %20 {offsets = [0, 128], sizes = [64, 128], strides = [1, 1]} : vector<64x256xf32> to vector<64x128xf32>
    %28 = math.tanh %27 : vector<64x128xf32>
    %29 = vector.shape_cast %15 : vector<64x16xf32> to vector<64x16x1xf32>
    %30 = vector.shape_cast %29 : vector<64x16x1xf32> to vector<64x16x1xf32>
    %31 = vector.broadcast %30 : vector<64x16x1xf32> to vector<64x16x128xf32>
    %c0_13 = arith.constant 0 : index
    %c0_14 = arith.constant 0 : index
    %c0_15 = arith.constant 0 : index
    %32 = vector.load %arg9[%c0_13, %c0_14, %c0_15] : memref<64x16x128xf32, #tpu.memory_space<vmem>>, vector<64x16x128xf32>
    tpu.vector_store %arg9[%c0_13, %c0_14, %c0_15], %31 {strides = array<i32>} : memref<64x16x128xf32, #tpu.memory_space<vmem>>, vector<64x16x128xf32>,
    %33 = vector.shape_cast %26 : vector<64x128xf32> to vector<64x1x128xf32>
    %34 = vector.broadcast %33 : vector<64x1x128xf32> to vector<64x16x128xf32>
    %35 = vector.broadcast %29 : vector<64x16x1xf32> to vector<64x16x128xf32>
    %36 = arith.mulf %34, %35 : vector<64x16x128xf32>
    %cst_16 = arith.constant 1.000000e+00 : f32
    %37 = vector.broadcast %cst_16 : f32 to vector<64x16x128xf32>
    %38 = arith.subf %37, %36 : vector<64x16x128xf32>
    %c0_17 = arith.constant 0 : index
    %c0_18 = arith.constant 0 : index
    %c0_19 = arith.constant 0 : index
    %39 = vector.load %arg10[%c0_17, %c0_18, %c0_19] : memref<64x16x128xf32, #tpu.memory_space<vmem>>, vector<64x16x128xf32>
    tpu.vector_store %arg10[%c0_17, %c0_18, %c0_19], %38 {strides = array<i32>} : memref<64x16x128xf32, #tpu.memory_space<vmem>>, vector<64x16x128xf32>,
    %40 = vector.shape_cast %28 : vector<64x128xf32> to vector<64x1x128xf32>
    %41 = vector.broadcast %40 : vector<64x1x128xf32> to vector<64x16x128xf32>
    %42 = vector.broadcast %29 : vector<64x16x1xf32> to vector<64x16x128xf32>
    %43 = arith.mulf %41, %42 : vector<64x16x128xf32>
    %c0_20 = arith.constant 0 : index
    %c0_21 = arith.constant 0 : index
    %c0_22 = arith.constant 0 : index
    %44 = vector.load %arg11[%c0_20, %c0_21, %c0_22] : memref<64x16x128xf32, #tpu.memory_space<vmem>>, vector<64x16x128xf32>
    tpu.vector_store %arg11[%c0_20, %c0_21, %c0_22], %43 {strides = array<i32>} : memref<64x16x128xf32, #tpu.memory_space<vmem>>, vector<64x16x128xf32>,
    %c0_23 = arith.constant 0 : index
    %c0_24 = arith.constant 0 : index
    %45 = vector.load %arg5[%c0_23, %c0_24] : memref<16x128xf32, #tpu.memory_space<vmem>>, vector<16x128xf32>
    %46 = vector.shape_cast %45 : vector<16x128xf32> to vector<1x16x128xf32>
    %47 = vector.shape_cast %46 : vector<1x16x128xf32> to vector<1x16x128xf32>
    %48 = vector.broadcast %47 : vector<1x16x128xf32> to vector<8x16x128xf32>
    %c0_i32 = arith.constant 0 : i32
    %c8_i32 = arith.constant 8 : i32
    %49 = arith.muli %c0_i32, %c8_i32 : i32
    %50 = tpu.assume_multiple %49, 8 : i32
    %51 = arith.index_cast %50 : i32 to index
    %c0_25 = arith.constant 0 : index
    %c0_26 = arith.constant 0 : index
    %52 = vector.load %arg9[%51, %c0_25, %c0_26] : memref<64x16x128xf32, #tpu.memory_space<vmem>>, vector<8x16x128xf32>
    %53 = arith.mulf %52, %48 : vector<8x16x128xf32>
    %cst_27 = arith.constant dense<0.000000e+00> : vector<8x128xf32>
    %54 = vector.multi_reduction <add>, %53, %cst_27 [1] : vector<8x16x128xf32> to vector<8x128xf32>
    %55 = arith.index_cast %50 : i32 to index
    %c0_28 = arith.constant 0 : index
    %56 = vector.load %arg12[%55, %c0_28] : memref<64x128xf32, #tpu.memory_space<vmem>>, vector<8x128xf32>
    tpu.vector_store %arg12[%55, %c0_28], %54 {strides = array<i32>} : memref<64x128xf32, #tpu.memory_space<vmem>>, vector<8x128xf32>,
    %57 = arith.index_cast %50 : i32 to index
    %c0_29 = arith.constant 0 : index
    %c0_30 = arith.constant 0 : index
    %58 = vector.load %arg10[%57, %c0_29, %c0_30] : memref<64x16x128xf32, #tpu.memory_space<vmem>>, vector<8x16x128xf32>
    %59 = arith.mulf %48, %58 : vector<8x16x128xf32>
    %60 = arith.index_cast %50 : i32 to index
    %c0_31 = arith.constant 0 : index
    %c0_32 = arith.constant 0 : index
    %61 = vector.load %arg11[%60, %c0_31, %c0_32] : memref<64x16x128xf32, #tpu.memory_space<vmem>>, vector<8x16x128xf32>
    %62 = arith.addf %59, %61 : vector<8x16x128xf32>
    %c1_i32 = arith.constant 1 : i32
    %c8_i32_33 = arith.constant 8 : i32
    %63 = arith.muli %c1_i32, %c8_i32_33 : i32
    %64 = tpu.assume_multiple %63, 8 : i32
    %65 = arith.index_cast %64 : i32 to index
    %c0_34 = arith.constant 0 : index
    %c0_35 = arith.constant 0 : index
    %66 = vector.load %arg9[%65, %c0_34, %c0_35] : memref<64x16x128xf32, #tpu.memory_space<vmem>>, vector<8x16x128xf32>
    %67 = arith.mulf %66, %62 : vector<8x16x128xf32>
    %cst_36 = arith.constant dense<0.000000e+00> : vector<8x128xf32>
    %68 = vector.multi_reduction <add>, %67, %cst_36 [1] : vector<8x16x128xf32> to vector<8x128xf32>
    %69 = arith.index_cast %64 : i32 to index
    %c0_37 = arith.constant 0 : index
    %70 = vector.load %arg12[%69, %c0_37] : memref<64x128xf32, #tpu.memory_space<vmem>>, vector<8x128xf32>
    tpu.vector_store %arg12[%69, %c0_37], %68 {strides = array<i32>} : memref<64x128xf32, #tpu.memory_space<vmem>>, vector<8x128xf32>,
    %71 = arith.index_cast %64 : i32 to index
    %c0_38 = arith.constant 0 : index
    %c0_39 = arith.constant 0 : index
    %72 = vector.load %arg10[%71, %c0_38, %c0_39] : memref<64x16x128xf32, #tpu.memory_space<vmem>>, vector<8x16x128xf32>
    %73 = arith.mulf %62, %72 : vector<8x16x128xf32>
    %74 = arith.index_cast %64 : i32 to index
    %c0_40 = arith.constant 0 : index
    %c0_41 = arith.constant 0 : index
    %75 = vector.load %arg11[%74, %c0_40, %c0_41] : memref<64x16x128xf32, #tpu.memory_space<vmem>>, vector<8x16x128xf32>
    %76 = arith.addf %73, %75 : vector<8x16x128xf32>
    %c2_i32 = arith.constant 2 : i32
    %c8_i32_42 = arith.constant 8 : i32
    %77 = arith.muli %c2_i32, %c8_i32_42 : i32
    %78 = tpu.assume_multiple %77, 8 : i32
    %79 = arith.index_cast %78 : i32 to index
    %c0_43 = arith.constant 0 : index
    %c0_44 = arith.constant 0 : index
    %80 = vector.load %arg9[%79, %c0_43, %c0_44] : memref<64x16x128xf32, #tpu.memory_space<vmem>>, vector<8x16x128xf32>
    %81 = arith.mulf %80, %76 : vector<8x16x128xf32>
    %cst_45 = arith.constant dense<0.000000e+00> : vector<8x128xf32>
    %82 = vector.multi_reduction <add>, %81, %cst_45 [1] : vector<8x16x128xf32> to vector<8x128xf32>
    %83 = arith.index_cast %78 : i32 to index
    %c0_46 = arith.constant 0 : index
    %84 = vector.load %arg12[%83, %c0_46] : memref<64x128xf32, #tpu.memory_space<vmem>>, vector<8x128xf32>
    tpu.vector_store %arg12[%83, %c0_46], %82 {strides = array<i32>} : memref<64x128xf32, #tpu.memory_space<vmem>>, vector<8x128xf32>,
    %85 = arith.index_cast %78 : i32 to index
    %c0_47 = arith.constant 0 : index
    %c0_48 = arith.constant 0 : index
    %86 = vector.load %arg10[%85, %c0_47, %c0_48] : memref<64x16x128xf32, #tpu.memory_space<vmem>>, vector<8x16x128xf32>
    %87 = arith.mulf %76, %86 : vector<8x16x128xf32>
    %88 = arith.index_cast %78 : i32 to index
    %c0_49 = arith.constant 0 : index
    %c0_50 = arith.constant 0 : index
    %89 = vector.load %arg11[%88, %c0_49, %c0_50] : memref<64x16x128xf32, #tpu.memory_space<vmem>>, vector<8x16x128xf32>
    %90 = arith.addf %87, %89 : vector<8x16x128xf32>
    %c3_i32 = arith.constant 3 : i32
    %c8_i32_51 = arith.constant 8 : i32
    %91 = arith.muli %c3_i32, %c8_i32_51 : i32
    %92 = tpu.assume_multiple %91, 8 : i32
    %93 = arith.index_cast %92 : i32 to index
    %c0_52 = arith.constant 0 : index
    %c0_53 = arith.constant 0 : index
    %94 = vector.load %arg9[%93, %c0_52, %c0_53] : memref<64x16x128xf32, #tpu.memory_space<vmem>>, vector<8x16x128xf32>
    %95 = arith.mulf %94, %90 : vector<8x16x128xf32>
    %cst_54 = arith.constant dense<0.000000e+00> : vector<8x128xf32>
    %96 = vector.multi_reduction <add>, %95, %cst_54 [1] : vector<8x16x128xf32> to vector<8x128xf32>
    %97 = arith.index_cast %92 : i32 to index
    %c0_55 = arith.constant 0 : index
    %98 = vector.load %arg12[%97, %c0_55] : memref<64x128xf32, #tpu.memory_space<vmem>>, vector<8x128xf32>
    tpu.vector_store %arg12[%97, %c0_55], %96 {strides = array<i32>} : memref<64x128xf32, #tpu.memory_space<vmem>>, vector<8x128xf32>,
    %99 = arith.index_cast %92 : i32 to index
    %c0_56 = arith.constant 0 : index
    %c0_57 = arith.constant 0 : index
    %100 = vector.load %arg10[%99, %c0_56, %c0_57] : memref<64x16x128xf32, #tpu.memory_space<vmem>>, vector<8x16x128xf32>
    %101 = arith.mulf %90, %100 : vector<8x16x128xf32>
    %102 = arith.index_cast %92 : i32 to index
    %c0_58 = arith.constant 0 : index
    %c0_59 = arith.constant 0 : index
    %103 = vector.load %arg11[%102, %c0_58, %c0_59] : memref<64x16x128xf32, #tpu.memory_space<vmem>>, vector<8x16x128xf32>
    %104 = arith.addf %101, %103 : vector<8x16x128xf32>
    %c4_i32 = arith.constant 4 : i32
    %c8_i32_60 = arith.constant 8 : i32
    %105 = arith.muli %c4_i32, %c8_i32_60 : i32
    %106 = tpu.assume_multiple %105, 8 : i32
    %107 = arith.index_cast %106 : i32 to index
    %c0_61 = arith.constant 0 : index
    %c0_62 = arith.constant 0 : index
    %108 = vector.load %arg9[%107, %c0_61, %c0_62] : memref<64x16x128xf32, #tpu.memory_space<vmem>>, vector<8x16x128xf32>
    %109 = arith.mulf %108, %104 : vector<8x16x128xf32>
    %cst_63 = arith.constant dense<0.000000e+00> : vector<8x128xf32>
    %110 = vector.multi_reduction <add>, %109, %cst_63 [1] : vector<8x16x128xf32> to vector<8x128xf32>
    %111 = arith.index_cast %106 : i32 to index
    %c0_64 = arith.constant 0 : index
    %112 = vector.load %arg12[%111, %c0_64] : memref<64x128xf32, #tpu.memory_space<vmem>>, vector<8x128xf32>
    tpu.vector_store %arg12[%111, %c0_64], %110 {strides = array<i32>} : memref<64x128xf32, #tpu.memory_space<vmem>>, vector<8x128xf32>,
    %113 = arith.index_cast %106 : i32 to index
    %c0_65 = arith.constant 0 : index
    %c0_66 = arith.constant 0 : index
    %114 = vector.load %arg10[%113, %c0_65, %c0_66] : memref<64x16x128xf32, #tpu.memory_space<vmem>>, vector<8x16x128xf32>
    %115 = arith.mulf %104, %114 : vector<8x16x128xf32>
    %116 = arith.index_cast %106 : i32 to index
    %c0_67 = arith.constant 0 : index
    %c0_68 = arith.constant 0 : index
    %117 = vector.load %arg11[%116, %c0_67, %c0_68] : memref<64x16x128xf32, #tpu.memory_space<vmem>>, vector<8x16x128xf32>
    %118 = arith.addf %115, %117 : vector<8x16x128xf32>
    %c5_i32 = arith.constant 5 : i32
    %c8_i32_69 = arith.constant 8 : i32
    %119 = arith.muli %c5_i32, %c8_i32_69 : i32
    %120 = tpu.assume_multiple %119, 8 : i32
    %121 = arith.index_cast %120 : i32 to index
    %c0_70 = arith.constant 0 : index
    %c0_71 = arith.constant 0 : index
    %122 = vector.load %arg9[%121, %c0_70, %c0_71] : memref<64x16x128xf32, #tpu.memory_space<vmem>>, vector<8x16x128xf32>
    %123 = arith.mulf %122, %118 : vector<8x16x128xf32>
    %cst_72 = arith.constant dense<0.000000e+00> : vector<8x128xf32>
    %124 = vector.multi_reduction <add>, %123, %cst_72 [1] : vector<8x16x128xf32> to vector<8x128xf32>
    %125 = arith.index_cast %120 : i32 to index
    %c0_73 = arith.constant 0 : index
    %126 = vector.load %arg12[%125, %c0_73] : memref<64x128xf32, #tpu.memory_space<vmem>>, vector<8x128xf32>
    tpu.vector_store %arg12[%125, %c0_73], %124 {strides = array<i32>} : memref<64x128xf32, #tpu.memory_space<vmem>>, vector<8x128xf32>,
    %127 = arith.index_cast %120 : i32 to index
    %c0_74 = arith.constant 0 : index
    %c0_75 = arith.constant 0 : index
    %128 = vector.load %arg10[%127, %c0_74, %c0_75] : memref<64x16x128xf32, #tpu.memory_space<vmem>>, vector<8x16x128xf32>
    %129 = arith.mulf %118, %128 : vector<8x16x128xf32>
    %130 = arith.index_cast %120 : i32 to index
    %c0_76 = arith.constant 0 : index
    %c0_77 = arith.constant 0 : index
    %131 = vector.load %arg11[%130, %c0_76, %c0_77] : memref<64x16x128xf32, #tpu.memory_space<vmem>>, vector<8x16x128xf32>
    %132 = arith.addf %129, %131 : vector<8x16x128xf32>
    %c6_i32 = arith.constant 6 : i32
    %c8_i32_78 = arith.constant 8 : i32
    %133 = arith.muli %c6_i32, %c8_i32_78 : i32
    %134 = tpu.assume_multiple %133, 8 : i32
    %135 = arith.index_cast %134 : i32 to index
    %c0_79 = arith.constant 0 : index
    %c0_80 = arith.constant 0 : index
    %136 = vector.load %arg9[%135, %c0_79, %c0_80] : memref<64x16x128xf32, #tpu.memory_space<vmem>>, vector<8x16x128xf32>
    %137 = arith.mulf %136, %132 : vector<8x16x128xf32>
    %cst_81 = arith.constant dense<0.000000e+00> : vector<8x128xf32>
    %138 = vector.multi_reduction <add>, %137, %cst_81 [1] : vector<8x16x128xf32> to vector<8x128xf32>
    %139 = arith.index_cast %134 : i32 to index
    %c0_82 = arith.constant 0 : index
    %140 = vector.load %arg12[%139, %c0_82] : memref<64x128xf32, #tpu.memory_space<vmem>>, vector<8x128xf32>
    tpu.vector_store %arg12[%139, %c0_82], %138 {strides = array<i32>} : memref<64x128xf32, #tpu.memory_space<vmem>>, vector<8x128xf32>,
    %141 = arith.index_cast %134 : i32 to index
    %c0_83 = arith.constant 0 : index
    %c0_84 = arith.constant 0 : index
    %142 = vector.load %arg10[%141, %c0_83, %c0_84] : memref<64x16x128xf32, #tpu.memory_space<vmem>>, vector<8x16x128xf32>
    %143 = arith.mulf %132, %142 : vector<8x16x128xf32>
    %144 = arith.index_cast %134 : i32 to index
    %c0_85 = arith.constant 0 : index
    %c0_86 = arith.constant 0 : index
    %145 = vector.load %arg11[%144, %c0_85, %c0_86] : memref<64x16x128xf32, #tpu.memory_space<vmem>>, vector<8x16x128xf32>
    %146 = arith.addf %143, %145 : vector<8x16x128xf32>
    %c7_i32 = arith.constant 7 : i32
    %c8_i32_87 = arith.constant 8 : i32
    %147 = arith.muli %c7_i32, %c8_i32_87 : i32
    %148 = tpu.assume_multiple %147, 8 : i32
    %149 = arith.index_cast %148 : i32 to index
    %c0_88 = arith.constant 0 : index
    %c0_89 = arith.constant 0 : index
    %150 = vector.load %arg9[%149, %c0_88, %c0_89] : memref<64x16x128xf32, #tpu.memory_space<vmem>>, vector<8x16x128xf32>
    %151 = arith.mulf %150, %146 : vector<8x16x128xf32>
    %cst_90 = arith.constant dense<0.000000e+00> : vector<8x128xf32>
    %152 = vector.multi_reduction <add>, %151, %cst_90 [1] : vector<8x16x128xf32> to vector<8x128xf32>
    %153 = arith.index_cast %148 : i32 to index
    %c0_91 = arith.constant 0 : index
    %154 = vector.load %arg12[%153, %c0_91] : memref<64x128xf32, #tpu.memory_space<vmem>>, vector<8x128xf32>
    tpu.vector_store %arg12[%153, %c0_91], %152 {strides = array<i32>} : memref<64x128xf32, #tpu.memory_space<vmem>>, vector<8x128xf32>,
    %155 = arith.index_cast %148 : i32 to index
    %c0_92 = arith.constant 0 : index
    %c0_93 = arith.constant 0 : index
    %156 = vector.load %arg10[%155, %c0_92, %c0_93] : memref<64x16x128xf32, #tpu.memory_space<vmem>>, vector<8x16x128xf32>
    %157 = arith.mulf %146, %156 : vector<8x16x128xf32>
    %158 = arith.index_cast %148 : i32 to index
    %c0_94 = arith.constant 0 : index
    %c0_95 = arith.constant 0 : index
    %159 = vector.load %arg11[%158, %c0_94, %c0_95] : memref<64x16x128xf32, #tpu.memory_space<vmem>>, vector<8x16x128xf32>
    %160 = arith.addf %157, %159 : vector<8x16x128xf32>
    %c8_i32_96 = arith.constant 8 : i32
    %c0_97 = arith.constant 0 : index
    %c0_98 = arith.constant 0 : index
    %161 = vector.load %arg12[%c0_97, %c0_98] : memref<64x128xf32, #tpu.memory_space<vmem>>, vector<64x128xf32>
    %c0_99 = arith.constant 0 : index
    %c0_100 = arith.constant 0 : index
    %162 = vector.load %arg6[%c0_99, %c0_100] : memref<128x32xf32, #tpu.memory_space<vmem>>, vector<128x32xf32>
    %cst_101 = arith.constant dense<0.000000e+00> : vector<64x32xf32>
    %163 = tpu.matmul %161, %162, %cst_101 {dimension_numbers = #tpu.dot_dimension_numbers<[1], [0], [0], [1], [0, 0, 1, 1], [], []>} : vector<64x128xf32>, vector<128x32xf32>, vector<64x32xf32> -> vector<64x32xf32>
    %164 = arith.addf %163, %5 : vector<64x32xf32>
    %c0_102 = arith.constant 0 : index
    %c0_103 = arith.constant 0 : index
    %165 = vector.load %arg7[%c0_102, %c0_103] : memref<1x32xf32, #tpu.memory_space<vmem>>, vector<1x32xf32>
    %166 = vector.broadcast %165 : vector<1x32xf32> to vector<64x32xf32>
    %167 = arith.addf %164, %166 : vector<64x32xf32>
    %168 = math.tanh %167 : vector<64x32xf32>
    %c0_104 = arith.constant 0 : index
    %c0_105 = arith.constant 0 : index
    %169 = vector.load %arg8[%c0_104, %c0_105] : memref<64x32xf32, #tpu.memory_space<vmem>>, vector<64x32xf32>
    tpu.vector_store %arg8[%c0_104, %c0_105], %168 {strides = array<i32>} : memref<64x32xf32, #tpu.memory_space<vmem>>, vector<64x32xf32>,
    return
  }
}

</mosaic_0001>

<llo_original>
// kernel: tpu_custom_call.1
$region0: #{tpu_custom_call.1}
  #allocation0 [shape = 'u32[]', space=smem, size = 0x4, offset = 0x4, fixed_abs, tag = 'smem constant byte address 0x4 - core index']
  #allocation1 [shape = 'u32[144,128]{1,0:T(1,128)}', space=vmem, size = 0x12000, scoped, tag = 'internal scratch']
  #allocation2 [shape = 'f32[64,16,128]{2,1,0:T(8,128)}', space=vmem, size = 0x80000, scoped, tag = 'scratch operand']
  #allocation3 [shape = 'f32[64,16,128]{2,1,0:T(8,128)}', space=vmem, size = 0x80000, scoped, tag = 'scratch operand']
  #allocation4 [shape = 'f32[64,16,128]{2,1,0:T(8,128)}', space=vmem, size = 0x80000, scoped, tag = 'scratch operand']
  #allocation5 [shape = 'f32[64,128]{1,0:T(8,128)}', space=vmem, size = 0x8000, scoped, tag = 'scratch operand']
  %s0 = inlined_call_operand.vmem [shape: f32[64,32], index: 0, kind: input, shape index: {}]
  %s1 = inlined_call_operand.hbm [shape: f32[64,128], index: 1, kind: input, shape index: {}]
  %s2 = inlined_call_operand.hbm [shape: f32[32,48], index: 2, kind: input, shape index: {}]
  %s3 = inlined_call_operand.vmem [shape: f32[128,256], index: 3, kind: input, shape index: {}]
  %s4 = inlined_call_operand.vmem [shape: f32[1,256], index: 4, kind: input, shape index: {}]
  %s5 = inlined_call_operand.hbm [shape: f32[16,128], index: 5, kind: input, shape index: {}]
  %s6 = inlined_call_operand.vmem [shape: f32[128,32], index: 6, kind: input, shape index: {}]
  %s7 = inlined_call_operand.vmem [shape: f32[1,32], index: 7, kind: input, shape index: {}]
  %s8 = inlined_call_operand.vmem [shape: f32[64,32], index: 8, kind: output, shape index: {}]
  %s9 = sld [smem:[#allocation0]]
  $region54: #{tpu_custom_call.1} parent=0
    _
  %s11 = ssub.s32 1, %s9
  %s12 = scalar_select 0, %s11, %s9
  $region1: #{tpu_custom_call.1} parent=0
    #allocation6 [shape = 'u8[32768]{0}', space=vmem, size = 0x8000, scoped, tag = 'input window, operand 1, single buffered']
    #allocation7 [shape = 's32[1]{0}', space=sflag, size = 0x4, scoped, tag = 'scoped memory for tpu_custom_call.1']
    #allocation8 [shape = 'u8[16384]{0}', space=vmem, size = 0x4000, scoped, tag = 'input window, operand 2, single buffered']
    #allocation9 [shape = 's32[1]{0}', space=sflag, size = 0x4, scoped, tag = 'scoped memory for tpu_custom_call.1']
    #allocation10 [shape = 'u8[8192]{0}', space=vmem, size = 0x2000, scoped, tag = 'input window, operand 5, single buffered']
    %13 = vsyncpa [#allocation7], 0
    %14 = vsyncpa [#allocation9], 0
    // Predicated region
    $region2: #{tpu_custom_call.1} parent=1 // pred_check
      _
    $region3: #{tpu_custom_call.1} parent=1 // pred_check_branch
      %16 = sbr.rel (0) target = $region5
    $region4: #{tpu_custom_call.1} parent=1 // pred_region
      _
    $region5: #{tpu_custom_call.1} parent=1 // pred_fallthru
      _
    // Predicated region
    $region6: #{tpu_custom_call.1} parent=1 // pred_check
      _
    $region7: #{tpu_custom_call.1} parent=1 // pred_check_branch
      %18 = sbr.rel (0) target = $region9
    $region8: #{tpu_custom_call.1} parent=1 // pred_region
      %s20 = ssub.s32 1024, 1024
      %21 = vsyncadd [#allocation7], %s20
      %s22 = sshll.u32 [#allocation6], 4
      %s23 = int_to_ptr.vmem [resolvable:$true] %s22
      %28 = dma.hbm_to_vmem [thread:$0]  %s1, 1024, %s23, [#allocation7], 128, 128, 8
    $region9: #{tpu_custom_call.1} parent=1 // pred_fallthru
      _
    // Predicated region
    $region10: #{tpu_custom_call.1} parent=1 // pred_check
      _
    $region11: #{tpu_custom_call.1} parent=1 // pred_check_branch
      %30 = sbr.rel (0) target = $region13
    $region12: #{tpu_custom_call.1} parent=1 // pred_region
      %s32 = ssub.s32 512, 512
      %33 = vsyncadd [#allocation9], %s32
      %s34 = sshll.u32 [#allocation8], 4
      %s35 = int_to_ptr.vmem [resolvable:$true] %s34
      %40 = dma.hbm_to_vmem [thread:$0]  %s2, 512, %s35, [#allocation9], 128, 128, 8
    $region13: #{tpu_custom_call.1} parent=1 // pred_fallthru
      _
    // Predicated region
    $region14: #{tpu_custom_call.1} parent=1 // pred_check
      _
    $region15: #{tpu_custom_call.1} parent=1 // pred_check_branch
      %42 = sbr.rel (0) target = $region17
    $region16: #{tpu_custom_call.1} parent=1 // pred_region
      _
    $region17: #{tpu_custom_call.1} parent=1 // pred_fallthru
      _
    // Predicated region
    $region18: #{tpu_custom_call.1} parent=1 // pred_check
      _
    $region19: #{tpu_custom_call.1} parent=1 // pred_check_branch
      %44 = sbr.rel (0) target = $region21
    $region20: #{tpu_custom_call.1} parent=1 // pred_region
      _
    $region21: #{tpu_custom_call.1} parent=1 // pred_fallthru
      _
    // Predicated region
    $region22: #{tpu_custom_call.1} parent=1 // pred_check
      _
    $region23: #{tpu_custom_call.1} parent=1 // pred_check_branch
      %46 = sbr.rel (0) target = $region25
    $region24: #{tpu_custom_call.1} parent=1 // pred_region
      %s48 = ssub.s32 256, 256
      %49 = vsyncadd [#allocation9], %s48
      %s50 = sshll.u32 [#allocation10], 4
      %s51 = int_to_ptr.vmem [resolvable:$true] %s50
      %56 = dma.hbm_to_vmem [thread:$0]  %s5, 256, %s51, [#allocation9], 128, 128, 8
    $region25: #{tpu_custom_call.1} parent=1 // pred_fallthru
      _
    // Predicated region
    $region26: #{tpu_custom_call.1} parent=1 // pred_check
      _
    $region27: #{tpu_custom_call.1} parent=1 // pred_check_branch
      %58 = sbr.rel (0) target = $region29
    $region28: #{tpu_custom_call.1} parent=1 // pred_region
      _
    $region29: #{tpu_custom_call.1} parent=1 // pred_fallthru
      _
    // Predicated region
    $region30: #{tpu_custom_call.1} parent=1 // pred_check
      _
    $region31: #{tpu_custom_call.1} parent=1 // pred_check_branch
      %60 = sbr.rel (0) target = $region33
    $region32: #{tpu_custom_call.1} parent=1 // pred_region
      _
    $region33: #{tpu_custom_call.1} parent=1 // pred_fallthru
      _
    // Predicated region
    $region34: #{tpu_custom_call.1} parent=1 // pred_check
      _
    $region35: #{tpu_custom_call.1} parent=1 // pred_check_branch
      %62 = sbr.rel (0) target = $region37
    $region36: #{tpu_custom_call.1} parent=1 // pred_region
      %63 = dma.done [#allocation7], 1024
    $region37: #{tpu_custom_call.1} parent=1 // pred_fallthru
      _
    // Predicated region
    $region38: #{tpu_custom_call.1} parent=1 // pred_check
      _
    $region39: #{tpu_custom_call.1} parent=1 // pred_check_branch
      %65 = sbr.rel (0) target = $region41
    $region40: #{tpu_custom_call.1} parent=1 // pred_region
      %66 = dma.done [#allocation9], 512
    $region41: #{tpu_custom_call.1} parent=1 // pred_fallthru
      _
    // Predicated region
    $region42: #{tpu_custom_call.1} parent=1 // pred_check
      _
    $region43: #{tpu_custom_call.1} parent=1 // pred_check_branch
      %68 = sbr.rel (0) target = $region45
    $region44: #{tpu_custom_call.1} parent=1 // pred_region
      %69 = dma.done [#allocation9], 256
    $region45: #{tpu_custom_call.1} parent=1 // pred_fallthru
      _
    %v70 = vld [vmem:[%s0] sm:$0xff]
    %v71 = vld [vmem:[%s0 + $0x8] sm:$0xff]
    %v72 = vld [vmem:[%s0 + $0x10] sm:$0xff]
    %v73 = vld [vmem:[%s0 + $0x18] sm:$0xff]
    %v74 = vld [vmem:[%s0 + $0x20] sm:$0xff]
    %v75 = vld [vmem:[%s0 + $0x28] sm:$0xff]
    %v76 = vld [vmem:[%s0 + $0x30] sm:$0xff]
    %v77 = vld [vmem:[%s0 + $0x38] sm:$0xff]
    %v78 = vld [vmem:[#allocation6] sm:$0xff]
    %v79 = vld [vmem:[#allocation6 + $0x8] sm:$0xff]
    %v80 = vld [vmem:[#allocation6 + $0x10] sm:$0xff]
    %v81 = vld [vmem:[#allocation6 + $0x18] sm:$0xff]
    %v82 = vld [vmem:[#allocation6 + $0x20] sm:$0xff]
    %v83 = vld [vmem:[#allocation6 + $0x28] sm:$0xff]
    %v84 = vld [vmem:[#allocation6 + $0x30] sm:$0xff]
    %v85 = vld [vmem:[#allocation6 + $0x38] sm:$0xff]
    %v86 = vld [vmem:[#allocation8] sm:$0xff]
    %v87 = vld [vmem:[#allocation8 + $0x8] sm:$0xff]
    %v88 = vld [vmem:[#allocation8 + $0x10] sm:$0xff]
    %v89 = vld [vmem:[#allocation8 + $0x18] sm:$0xff]
    %vm90 = vcmask 261120
    %v92 = vsel %vm90, %v70, 0
    %v95 = vsel %vm90, %v71, 0
    %v98 = vsel %vm90, %v72, 0
    %v101 = vsel %vm90, %v73, 0
    %v104 = vsel %vm90, %v74, 0
    %v107 = vsel %vm90, %v75, 0
    %v110 = vsel %vm90, %v76, 0
    %v113 = vsel %vm90, %v77, 0
    %115 = vmatprep.subr.mxu0 0.0
    %116 = vmatpush1.msra.mxu0 0.0
    %117 = vmatprep.subr.mxu0 0.0
    %118 = vmatpush1.msra.mxu0 0.0
    %119 = vmatprep.subr.mxu0 0.0
    %120 = vmatpush1.msra.mxu0 0.0
    %121 = vmatprep.subr.mxu0 0.0
    %122 = vmatpush1.msra.mxu0 0.0
    %123 = vmatprep.subr.mxu0 0.0
    %124 = vmatpush1.msra.mxu0 0.0
    %125 = vmatprep.subr.mxu0 0.0
    %126 = vmatpush1.msra.mxu0 0.0
    %127 = vmatprep.subr.mxu0 0.0
    %128 = vmatpush1.msra.mxu0 0.0
    %129 = vmatprep.subr.mxu0 0.0
    %130 = vmatpush1.msra.mxu0 0.0
    %131 = vmatprep.subr.mxu0 0.0
    %132 = vmatpush1.msra.mxu0 0.0
    %133 = vmatprep.subr.mxu0 0.0
    %134 = vmatpush1.msra.mxu0 0.0
    %135 = vmatprep.subr.mxu0 0.0
    %136 = vmatpush1.msra.mxu0 0.0
    %137 = vmatprep.subr.mxu0 0.0
    %138 = vmatpush1.msra.mxu0 0.0
    %139 = vmatprep.subr.mxu0 0.0
    %140 = vmatpush1.msra.mxu0 %v89
    %141 = vmatprep.subr.mxu0 0.0
    %142 = vmatpush1.msra.mxu0 %v88
    %143 = vmatprep.subr.mxu0 0.0
    %144 = vmatpush1.msra.mxu0 %v87
    %145 = vmatprep.subr.mxu0 0.0
    %146 = vmatpush1.msra.mxu0 %v86
    %147 = vmatprep.subr.mxu0 0.0
    %148 = vmatpush2.msra.mxu0 0.0
    %149 = vmatprep.subr.mxu0 0.0
    %150 = vmatpush2.msra.mxu0 0.0
    %151 = vmatprep.subr.mxu0 0.0
    %152 = vmatpush2.msra.mxu0 0.0
    %153 = vmatprep.subr.mxu0 0.0
    %154 = vmatpush2.msra.mxu0 0.0
    %155 = vmatprep.subr.mxu0 0.0
    %156 = vmatpush2.msra.mxu0 0.0
    %157 = vmatprep.subr.mxu0 0.0
    %158 = vmatpush2.msra.mxu0 0.0
    %159 = vmatprep.subr.mxu0 0.0
    %160 = vmatpush2.msra.mxu0 0.0
    %161 = vmatprep.subr.mxu0 0.0
    %162 = vmatpush2.msra.mxu0 0.0
    %163 = vmatprep.subr.mxu0 0.0
    %164 = vmatpush2.msra.mxu0 0.0
    %165 = vmatprep.subr.mxu0 0.0
    %166 = vmatpush2.msra.mxu0 0.0
    %167 = vmatprep.subr.mxu0 0.0
    %168 = vmatpush2.msra.mxu0 0.0
    %169 = vmatprep.subr.mxu0 0.0
    %170 = vmatpush2.msra.mxu0 0.0
    %171 = vmatprep.subr.mxu0 0.0
    %172 = vmatpush2.msra.mxu0 0.0
    %173 = vmatprep.subr.mxu0 0.0
    %174 = vmatpush2.msra.mxu0 0.0
    %175 = vmatprep.subr.mxu0 0.0
    %176 = vmatpush2.msra.mxu0 0.0
    %177 = vmatprep.subr.mxu0 0.0
    %178 = vmatpush2.msra.mxu0 0.0
    %179 = vmatprep.mubr.f32.mxu0 0.0
    %180 = vmatmul.mubr.f32.gmra.mxu0 %v92
    %v181 = vpop.f32.mrf.mxu0
    %v182 = vadd.f32 0.0, %v181
    %v183 = vpop.f32.mrf.mxu0
    %184 = vmatprep.mubr.f32.mxu0 0.0
    %185 = vmatmul.mubr.f32.gmra.mxu0 %v95
    %v186 = vpop.f32.mrf.mxu0
    %v187 = vadd.f32 0.0, %v186
    %v188 = vpop.f32.mrf.mxu0
    %189 = vmatprep.mubr.f32.mxu0 0.0
    %190 = vmatmul.mubr.f32.gmra.mxu0 %v98
    %v191 = vpop.f32.mrf.mxu0
    %v192 = vadd.f32 0.0, %v191
    %v193 = vpop.f32.mrf.mxu0
    %194 = vmatprep.mubr.f32.mxu0 0.0
    %195 = vmatmul.mubr.f32.gmra.mxu0 %v101
    %v196 = vpop.f32.mrf.mxu0
    %v197 = vadd.f32 0.0, %v196
    %v198 = vpop.f32.mrf.mxu0
    %199 = vmatprep.mubr.f32.mxu0 0.0
    %200 = vmatmul.mubr.f32.gmra.mxu0 %v104
    %v201 = vpop.f32.mrf.mxu0
    %v202 = vadd.f32 0.0, %v201
    %v203 = vpop.f32.mrf.mxu0
    %204 = vmatprep.mubr.f32.mxu0 0.0
    %205 = vmatmul.mubr.f32.gmra.mxu0 %v107
    %v206 = vpop.f32.mrf.mxu0
    %v207 = vadd.f32 0.0, %v206
    %v208 = vpop.f32.mrf.mxu0
    %209 = vmatprep.mubr.f32.mxu0 0.0
    %210 = vmatmul.mubr.f32.gmra.mxu0 %v110
    %v211 = vpop.f32.mrf.mxu0
    %v212 = vadd.f32 0.0, %v211
    %v213 = vpop.f32.mrf.mxu0
    %214 = vmatprep.mubr.f32.mxu0 0.0
    %215 = vmatmul.mubr.f32.gmra.mxu0 %v113
    %v216 = vpop.f32.mrf.mxu0
    %v217 = vadd.f32 0.0, %v216
    %v218 = vpop.f32.mrf.mxu0
    %219 = vdwg.mxu0
    %vm220 = vcmask 130048
    %v221 = vsel %vm220, %v182, -inf
    %222 = vmax.xlane.f32.xlu0 %v221
    %v223 = vpop.xlane.xlu0 %222
    %v224 = vsel %vm220, %v187, -inf
    %225 = vmax.xlane.f32.xlu0 %v224
    %v226 = vpop.xlane.xlu0 %225
    %v227 = vsel %vm220, %v192, -inf
    %228 = vmax.xlane.f32.xlu0 %v227
    %v229 = vpop.xlane.xlu0 %228
    %v230 = vsel %vm220, %v197, -inf
    %231 = vmax.xlane.f32.xlu0 %v230
    %v232 = vpop.xlane.xlu0 %231
    %v233 = vsel %vm220, %v202, -inf
    %234 = vmax.xlane.f32.xlu0 %v233
    %v235 = vpop.xlane.xlu0 %234
    %v236 = vsel %vm220, %v207, -inf
    %237 = vmax.xlane.f32.xlu0 %v236
    %v238 = vpop.xlane.xlu0 %237
    %v239 = vsel %vm220, %v212, -inf
    %240 = vmax.xlane.f32.xlu0 %v239
    %v241 = vpop.xlane.xlu0 %240
    %v242 = vsel %vm220, %v217, -inf
    %243 = vmax.xlane.f32.xlu0 %v242
    %v244 = vpop.xlane.xlu0 %243
    %v245 = vsub.f32 %v182, %v223
    %v246 = vsub.f32 %v187, %v226
    %v247 = vsub.f32 %v192, %v229
    %v248 = vsub.f32 %v197, %v232
    %v249 = vsub.f32 %v202, %v235
    %v250 = vsub.f32 %v207, %v238
    %v251 = vsub.f32 %v212, %v241
    %v252 = vsub.f32 %v217, %v244
    %v253 = vmul.f32 %v245, 1.442695
    %v254 = vpow.pop %v253
    %v255 = vmul.f32 %v246, 1.442695
    %v256 = vpow.pop %v255
    %v257 = vmul.f32 %v247, 1.442695
    %v258 = vpow.pop %v257
    %v259 = vmul.f32 %v248, 1.442695
    %v260 = vpow.pop %v259
    %v261 = vmul.f32 %v249, 1.442695
    %v262 = vpow.pop %v261
    %v263 = vmul.f32 %v250, 1.442695
    %v264 = vpow.pop %v263
    %v265 = vmul.f32 %v251, 1.442695
    %v266 = vpow.pop %v265
    %v267 = vmul.f32 %v252, 1.442695
    %v268 = vpow.pop %v267
    %v269 = vsel %vm220, %v254, 0.0
    %270 = vadd.xlane.f32.xlu0 %v269
    %v271 = vpop.xlane.xlu0 %270
    %v272 = vsel %vm220, %v256, 0.0
    %273 = vadd.xlane.f32.xlu0 %v272
    %v274 = vpop.xlane.xlu0 %273
    %v275 = vsel %vm220, %v258, 0.0
    %276 = vadd.xlane.f32.xlu0 %v275
    %v277 = vpop.xlane.xlu0 %276
    %v278 = vsel %vm220, %v260, 0.0
    %279 = vadd.xlane.f32.xlu0 %v278
    %v280 = vpop.xlane.xlu0 %279
    %v281 = vsel %vm220, %v262, 0.0
    %282 = vadd.xlane.f32.xlu0 %v281
    %v283 = vpop.xlane.xlu0 %282
    %v284 = vsel %vm220, %v264, 0.0
    %285 = vadd.xlane.f32.xlu0 %v284
    %v286 = vpop.xlane.xlu0 %285
    %v287 = vsel %vm220, %v266, 0.0
    %288 = vadd.xlane.f32.xlu0 %v287
    %v289 = vpop.xlane.xlu0 %288
    %v290 = vsel %vm220, %v268, 0.0
    %291 = vadd.xlane.f32.xlu0 %v290
    %v292 = vpop.xlane.xlu0 %291
    %v293 = vrcp.pop %v271
    %v294 = vrcp.pop %v274
    %v295 = vrcp.pop %v277
    %v296 = vrcp.pop %v280
    %v297 = vrcp.pop %v283
    %v298 = vrcp.pop %v286
    %v299 = vrcp.pop %v289
    %v300 = vrcp.pop %v292
    %v301 = vmul.f32 %v254, %v293
    %v302 = vmul.f32 %v256, %v294
    %v303 = vmul.f32 %v258, %v295
    %v304 = vmul.f32 %v260, %v296
    %v305 = vmul.f32 %v262, %v297
    %v306 = vmul.f32 %v264, %v298
    %v307 = vmul.f32 %v266, %v299
    %v308 = vmul.f32 %v268, %v300
    %v309 = vld [vmem:[%s3] sm:$0xff]
    %v310 = vld [vmem:[%s3 + $0x8] sm:$0xff]
    %v311 = vld [vmem:[%s3 + $0x10] sm:$0xff]
    %v312 = vld [vmem:[%s3 + $0x18] sm:$0xff]
    %v313 = vld [vmem:[%s3 + $0x20] sm:$0xff]
    %v314 = vld [vmem:[%s3 + $0x28] sm:$0xff]
    %v315 = vld [vmem:[%s3 + $0x30] sm:$0xff]
    %v316 = vld [vmem:[%s3 + $0x38] sm:$0xff]
    %v317 = vld [vmem:[%s3 + $0x40] sm:$0xff]
    %v318 = vld [vmem:[%s3 + $0x48] sm:$0xff]
    %v319 = vld [vmem:[%s3 + $0x50] sm:$0xff]
    %v320 = vld [vmem:[%s3 + $0x58] sm:$0xff]
    %v321 = vld [vmem:[%s3 + $0x60] sm:$0xff]
    %v322 = vld [vmem:[%s3 + $0x68] sm:$0xff]
    %v323 = vld [vmem:[%s3 + $0x70] sm:$0xff]
    %v324 = vld [vmem:[%s3 + $0x78] sm:$0xff]
    %v325 = vld [vmem:[%s3 + $0x80] sm:$0xff]
    %v326 = vld [vmem:[%s3 + $0x88] sm:$0xff]
    %v327 = vld [vmem:[%s3 + $0x90] sm:$0xff]
    %v328 = vld [vmem:[%s3 + $0x98] sm:$0xff]
    %v329 = vld [vmem:[%s3 + $0xa0] sm:$0xff]
    %v330 = vld [vmem:[%s3 + $0xa8] sm:$0xff]
    %v331 = vld [vmem:[%s3 + $0xb0] sm:$0xff]
    %v332 = vld [vmem:[%s3 + $0xb8] sm:$0xff]
    %v333 = vld [vmem:[%s3 + $0xc0] sm:$0xff]
    %v334 = vld [vmem:[%s3 + $0xc8] sm:$0xff]
    %v335 = vld [vmem:[%s3 + $0xd0] sm:$0xff]
    %v336 = vld [vmem:[%s3 + $0xd8] sm:$0xff]
    %v337 = vld [vmem:[%s3 + $0xe0] sm:$0xff]
    %v338 = vld [vmem:[%s3 + $0xe8] sm:$0xff]
    %v339 = vld [vmem:[%s3 + $0xf0] sm:$0xff]
    %v340 = vld [vmem:[%s3 + $0xf8] sm:$0xff]
    %v341 = vld [vmem:[%s4] sm:$0x3]
    %v343 = vlaneseq
    %v344 = vshrl.u32 %v343, 7
    %v345 = vsub.s32 0, %v344
    %v346 = vrot.slane %v341, %v345
    %v347 = vlaneseq
    %v348 = vshrl.u32 %v347, 7
    %v349 = vsub.s32 1, %v348
    %v350 = vrot.slane %v341, %v349
    %353 = vmatprep.subr.mxu0 %v340
    %354 = vmatpush1.msra.mxu0 %v339
    %355 = vmatprep.subr.mxu0 %v338
    %356 = vmatpush1.msra.mxu0 %v337
    %357 = vmatprep.subr.mxu0 %v336
    %358 = vmatpush1.msra.mxu0 %v335
    %359 = vmatprep.subr.mxu0 %v334
    %360 = vmatpush1.msra.mxu0 %v333
    %361 = vmatprep.subr.mxu0 %v332
    %362 = vmatpush1.msra.mxu0 %v331
    %363 = vmatprep.subr.mxu0 %v330
    %364 = vmatpush1.msra.mxu0 %v329
    %365 = vmatprep.subr.mxu0 %v328
    %366 = vmatpush1.msra.mxu0 %v327
    %367 = vmatprep.subr.mxu0 %v326
    %368 = vmatpush1.msra.mxu0 %v325
    %369 = vmatprep.subr.mxu0 %v324
    %370 = vmatpush1.msra.mxu0 %v323
    %371 = vmatprep.subr.mxu0 %v322
    %372 = vmatpush1.msra.mxu0 %v321
    %373 = vmatprep.subr.mxu0 %v320
    %374 = vmatpush1.msra.mxu0 %v319
    %375 = vmatprep.subr.mxu0 %v318
    %376 = vmatpush1.msra.mxu0 %v317
    %377 = vmatprep.subr.mxu0 %v316
    %378 = vmatpush1.msra.mxu0 %v315
    %379 = vmatprep.subr.mxu0 %v314
    %380 = vmatpush1.msra.mxu0 %v313
    %381 = vmatprep.subr.mxu0 %v312
    %382 = vmatpush1.msra.mxu0 %v311
    %383 = vmatprep.subr.mxu0 %v310
    %384 = vmatpush1.msra.mxu0 %v309
    %385 = vmatprep.subr.mxu0 0.0
    %386 = vmatpush2.msra.mxu0 0.0
    %387 = vmatprep.subr.mxu0 0.0
    %388 = vmatpush2.msra.mxu0 0.0
    %389 = vmatprep.subr.mxu0 0.0
    %390 = vmatpush2.msra.mxu0 0.0
    %391 = vmatprep.subr.mxu0 0.0
    %392 = vmatpush2.msra.mxu0 0.0
    %393 = vmatprep.subr.mxu0 0.0
    %394 = vmatpush2.msra.mxu0 0.0
    %395 = vmatprep.subr.mxu0 0.0
    %396 = vmatpush2.msra.mxu0 0.0
    %397 = vmatprep.subr.mxu0 0.0
    %398 = vmatpush2.msra.mxu0 0.0
    %399 = vmatprep.subr.mxu0 0.0
    %400 = vmatpush2.msra.mxu0 0.0
    %401 = vmatprep.subr.mxu0 0.0
    %402 = vmatpush2.msra.mxu0 0.0
    %403 = vmatprep.subr.mxu0 0.0
    %404 = vmatpush2.msra.mxu0 0.0
    %405 = vmatprep.subr.mxu0 0.0
    %406 = vmatpush2.msra.mxu0 0.0
    %407 = vmatprep.subr.mxu0 0.0
    %408 = vmatpush2.msra.mxu0 0.0
    %409 = vmatprep.subr.mxu0 0.0
    %410 = vmatpush2.msra.mxu0 0.0
    %411 = vmatprep.subr.mxu0 0.0
    %412 = vmatpush2.msra.mxu0 0.0
    %413 = vmatprep.subr.mxu0 0.0
    %414 = vmatpush2.msra.mxu0 0.0
    %415 = vmatprep.subr.mxu0 0.0
    %416 = vmatpush2.msra.mxu0 0.0
    %417 = vmatprep.mubr.f32.mxu0 0.0
    %418 = vmatmul.mubr.f32.gmra.mxu0 %v78
    %v419 = vpop.f32.mrf.mxu0
    %v420 = vadd.f32 %v346, %v419
    %v421 = vpop.f32.mrf.mxu0
    %v422 = vadd.f32 %v350, %v421
    %423 = vmatprep.mubr.f32.mxu0 0.0
    %424 = vmatmul.mubr.f32.gmra.mxu0 %v79
    %v425 = vpop.f32.mrf.mxu0
    %v426 = vadd.f32 %v346, %v425
    %v427 = vpop.f32.mrf.mxu0
    %v428 = vadd.f32 %v350, %v427
    %429 = vmatprep.mubr.f32.mxu0 0.0
    %430 = vmatmul.mubr.f32.gmra.mxu0 %v80
    %v431 = vpop.f32.mrf.mxu0
    %v432 = vadd.f32 %v346, %v431
    %v433 = vpop.f32.mrf.mxu0
    %v434 = vadd.f32 %v350, %v433
    %435 = vmatprep.mubr.f32.mxu0 0.0
    %436 = vmatmul.mubr.f32.gmra.mxu0 %v81
    %v437 = vpop.f32.mrf.mxu0
    %v438 = vadd.f32 %v346, %v437
    %v439 = vpop.f32.mrf.mxu0
    %v440 = vadd.f32 %v350, %v439
    %441 = vmatprep.mubr.f32.mxu0 0.0
    %442 = vmatmul.mubr.f32.gmra.mxu0 %v82
    %v443 = vpop.f32.mrf.mxu0
    %v444 = vadd.f32 %v346, %v443
    %v445 = vpop.f32.mrf.mxu0
    %v446 = vadd.f32 %v350, %v445
    %447 = vmatprep.mubr.f32.mxu0 0.0
    %448 = vmatmul.mubr.f32.gmra.mxu0 %v83
    %v449 = vpop.f32.mrf.mxu0
    %v450 = vadd.f32 %v346, %v449
    %v451 = vpop.f32.mrf.mxu0
    %v452 = vadd.f32 %v350, %v451
    %453 = vmatprep.mubr.f32.mxu0 0.0
    %454 = vmatmul.mubr.f32.gmra.mxu0 %v84
    %v455 = vpop.f32.mrf.mxu0
    %v456 = vadd.f32 %v346, %v455
    %v457 = vpop.f32.mrf.mxu0
    %v458 = vadd.f32 %v350, %v457
    %459 = vmatprep.mubr.f32.mxu0 0.0
    %460 = vmatmul.mubr.f32.gmra.mxu0 %v85
    %v461 = vpop.f32.mrf.mxu0
    %v462 = vadd.f32 %v346, %v461
    %v463 = vpop.f32.mrf.mxu0
    %v464 = vadd.f32 %v350, %v463
    %465 = vdwg.mxu0
    %v466 = vxor.u32 %v420, 2147483648
    %v467 = vxor.u32 %v426, 2147483648
    %v468 = vxor.u32 %v432, 2147483648
    %v469 = vxor.u32 %v438, 2147483648
    %v470 = vxor.u32 %v444, 2147483648
    %v471 = vxor.u32 %v450, 2147483648
    %v472 = vxor.u32 %v456, 2147483648
    %v473 = vxor.u32 %v462, 2147483648
    %v474 = vmul.f32 %v466, 1.442695
    %v475 = vpow.pop %v474
    %v476 = vmul.f32 %v467, 1.442695
    %v477 = vpow.pop %v476
    %v478 = vmul.f32 %v468, 1.442695
    %v479 = vpow.pop %v478
    %v480 = vmul.f32 %v469, 1.442695
    %v481 = vpow.pop %v480
    %v482 = vmul.f32 %v470, 1.442695
    %v483 = vpow.pop %v482
    %v484 = vmul.f32 %v471, 1.442695
    %v485 = vpow.pop %v484
    %v486 = vmul.f32 %v472, 1.442695
    %v487 = vpow.pop %v486
    %v488 = vmul.f32 %v473, 1.442695
    %v489 = vpow.pop %v488
    %v490 = vadd.f32 %v475, 1.0
    %v491 = vadd.f32 %v477, 1.0
    %v492 = vadd.f32 %v479, 1.0
    %v493 = vadd.f32 %v481, 1.0
    %v494 = vadd.f32 %v483, 1.0
    %v495 = vadd.f32 %v485, 1.0
    %v496 = vadd.f32 %v487, 1.0
    %v497 = vadd.f32 %v489, 1.0
    %v498 = vrcp.pop %v490
    %v499 = vmul.f32 1.0, %v498
    %v500 = vrcp.pop %v491
    %v501 = vmul.f32 1.0, %v500
    %v502 = vrcp.pop %v492
    %v503 = vmul.f32 1.0, %v502
    %v504 = vrcp.pop %v493
    %v505 = vmul.f32 1.0, %v504
    %v506 = vrcp.pop %v494
    %v507 = vmul.f32 1.0, %v506
    %v508 = vrcp.pop %v495
    %v509 = vmul.f32 1.0, %v508
    %v510 = vrcp.pop %v496
    %v511 = vmul.f32 1.0, %v510
    %v512 = vrcp.pop %v497
    %v513 = vmul.f32 1.0, %v512
    %v514 = vtanh.pop %v422
    %v515 = vtanh.pop %v428
    %v516 = vtanh.pop %v434
    %v517 = vtanh.pop %v440
    %v518 = vtanh.pop %v446
    %v519 = vtanh.pop %v452
    %v520 = vtanh.pop %v458
    %v521 = vtanh.pop %v464
    %v522 = vlaneseq
    %v523 = vshrl.u32 %v522, 7
    %v524 = vsub.s32 0, %v523
    %v525 = vrot.slane %v301, %v524
    %527 = vbcast.lane.b32.xlu0 %v525, 256
    %v528 = vpop.permute.xlu0 %527
    %s530 = sor.u32 256, 8
    %531 = vbcast.lane.b32.xlu0 %v525, %s530
    %v532 = vpop.permute.xlu0 %531
    %v533 = vlaneseq
    %v534 = vshrl.u32 %v533, 7
    %v535 = vsub.s32 1, %v534
    %v536 = vrot.slane %v301, %v535
    %538 = vbcast.lane.b32.xlu0 %v536, 256
    %v539 = vpop.permute.xlu0 %538
    %s541 = sor.u32 256, 8
    %542 = vbcast.lane.b32.xlu0 %v536, %s541
    %v543 = vpop.permute.xlu0 %542
    %v544 = vlaneseq
    %v545 = vshrl.u32 %v544, 7
    %v546 = vsub.s32 2, %v545
    %v547 = vrot.slane %v301, %v546
    %549 = vbcast.lane.b32.xlu0 %v547, 256
    %v550 = vpop.permute.xlu0 %549
    %s552 = sor.u32 256, 8
    %553 = vbcast.lane.b32.xlu0 %v547, %s552
    %v554 = vpop.permute.xlu0 %553
    %v555 = vlaneseq
    %v556 = vshrl.u32 %v555, 7
    %v557 = vsub.s32 3, %v556
    %v558 = vrot.slane %v301, %v557
    %560 = vbcast.lane.b32.xlu0 %v558, 256
    %v561 = vpop.permute.xlu0 %560
    %s563 = sor.u32 256, 8
    %564 = vbcast.lane.b32.xlu0 %v558, %s563
    %v565 = vpop.permute.xlu0 %564
    %v566 = vlaneseq
    %v567 = vshrl.u32 %v566, 7
    %v568 = vsub.s32 4, %v567
    %v569 = vrot.slane %v301, %v568
    %571 = vbcast.lane.b32.xlu0 %v569, 256
    %v572 = vpop.permute.xlu0 %571
    %s574 = sor.u32 256, 8
    %575 = vbcast.lane.b32.xlu0 %v569, %s574
    %v576 = vpop.permute.xlu0 %575
    %v577 = vlaneseq
    %v578 = vshrl.u32 %v577, 7
    %v579 = vsub.s32 5, %v578
    %v580 = vrot.slane %v301, %v579
    %582 = vbcast.lane.b32.xlu0 %v580, 256
    %v583 = vpop.permute.xlu0 %582
    %s585 = sor.u32 256, 8
    %586 = vbcast.lane.b32.xlu0 %v580, %s585
    %v587 = vpop.permute.xlu0 %586
    %v588 = vlaneseq
    %v589 = vshrl.u32 %v588, 7
    %v590 = vsub.s32 6, %v589
    %v591 = vrot.slane %v301, %v590
    %593 = vbcast.lane.b32.xlu0 %v591, 256
    %v594 = vpop.permute.xlu0 %593
    %s596 = sor.u32 256, 8
    %597 = vbcast.lane.b32.xlu0 %v591, %s596
    %v598 = vpop.permute.xlu0 %597
    %v599 = vlaneseq
    %v600 = vshrl.u32 %v599, 7
    %v601 = vsub.s32 7, %v600
    %v602 = vrot.slane %v301, %v601
    %604 = vbcast.lane.b32.xlu0 %v602, 256
    %v605 = vpop.permute.xlu0 %604
    %s607 = sor.u32 256, 8
    %608 = vbcast.lane.b32.xlu0 %v602, %s607
    %v609 = vpop.permute.xlu0 %608
    %v610 = vlaneseq
    %v611 = vshrl.u32 %v610, 7
    %v612 = vsub.s32 0, %v611
    %v613 = vrot.slane %v302, %v612
    %615 = vbcast.lane.b32.xlu0 %v613, 256
    %v616 = vpop.permute.xlu0 %615
    %s618 = sor.u32 256, 8
    %619 = vbcast.lane.b32.xlu0 %v613, %s618
    %v620 = vpop.permute.xlu0 %619
    %v621 = vlaneseq
    %v622 = vshrl.u32 %v621, 7
    %v623 = vsub.s32 1, %v622
    %v624 = vrot.slane %v302, %v623
    %626 = vbcast.lane.b32.xlu0 %v624, 256
    %v627 = vpop.permute.xlu0 %626
    %s629 = sor.u32 256, 8
    %630 = vbcast.lane.b32.xlu0 %v624, %s629
    %v631 = vpop.permute.xlu0 %630
    %v632 = vlaneseq
    %v633 = vshrl.u32 %v632, 7
    %v634 = vsub.s32 2, %v633
    %v635 = vrot.slane %v302, %v634
    %637 = vbcast.lane.b32.xlu0 %v635, 256
    %v638 = vpop.permute.xlu0 %637
    %s640 = sor.u32 256, 8
    %641 = vbcast.lane.b32.xlu0 %v635, %s640
    %v642 = vpop.permute.xlu0 %641
    %v643 = vlaneseq
    %v644 = vshrl.u32 %v643, 7
    %v645 = vsub.s32 3, %v644
    %v646 = vrot.slane %v302, %v645
    %648 = vbcast.lane.b32.xlu0 %v646, 256
    %v649 = vpop.permute.xlu0 %648
    %s651 = sor.u32 256, 8
    %652 = vbcast.lane.b32.xlu0 %v646, %s651
    %v653 = vpop.permute.xlu0 %652
    %v654 = vlaneseq
    %v655 = vshrl.u32 %v654, 7
    %v656 = vsub.s32 4, %v655
    %v657 = vrot.slane %v302, %v656
    %659 = vbcast.lane.b32.xlu0 %v657, 256
    %v660 = vpop.permute.xlu0 %659
    %s662 = sor.u32 256, 8
    %663 = vbcast.lane.b32.xlu0 %v657, %s662
    %v664 = vpop.permute.xlu0 %663
    %v665 = vlaneseq
    %v666 = vshrl.u32 %v665, 7
    %v667 = vsub.s32 5, %v666
    %v668 = vrot.slane %v302, %v667
    %670 = vbcast.lane.b32.xlu0 %v668, 256
    %v671 = vpop.permute.xlu0 %670
    %s673 = sor.u32 256, 8
    %674 = vbcast.lane.b32.xlu0 %v668, %s673
    %v675 = vpop.permute.xlu0 %674
    %v676 = vlaneseq
    %v677 = vshrl.u32 %v676, 7
    %v678 = vsub.s32 6, %v677
    %v679 = vrot.slane %v302, %v678
    %681 = vbcast.lane.b32.xlu0 %v679, 256
    %v682 = vpop.permute.xlu0 %681
    %s684 = sor.u32 256, 8
    %685 = vbcast.lane.b32.xlu0 %v679, %s684
    %v686 = vpop.permute.xlu0 %685
    %v687 = vlaneseq
    %v688 = vshrl.u32 %v687, 7
    %v689 = vsub.s32 7, %v688
    %v690 = vrot.slane %v302, %v689
    %692 = vbcast.lane.b32.xlu0 %v690, 256
    %v693 = vpop.permute.xlu0 %692
    %s695 = sor.u32 256, 8
    %696 = vbcast.lane.b32.xlu0 %v690, %s695
    %v697 = vpop.permute.xlu0 %696
    %v698 = vlaneseq
    %v699 = vshrl.u32 %v698, 7
    %v700 = vsub.s32 0, %v699
    %v701 = vrot.slane %v303, %v700
    %703 = vbcast.lane.b32.xlu0 %v701, 256
    %v704 = vpop.permute.xlu0 %703
    %s706 = sor.u32 256, 8
    %707 = vbcast.lane.b32.xlu0 %v701, %s706
    %v708 = vpop.permute.xlu0 %707
    %v709 = vlaneseq
    %v710 = vshrl.u32 %v709, 7
    %v711 = vsub.s32 1, %v710
    %v712 = vrot.slane %v303, %v711
    %714 = vbcast.lane.b32.xlu0 %v712, 256
    %v715 = vpop.permute.xlu0 %714
    %s717 = sor.u32 256, 8
    %718 = vbcast.lane.b32.xlu0 %v712, %s717
    %v719 = vpop.permute.xlu0 %718
    %v720 = vlaneseq
    %v721 = vshrl.u32 %v720, 7
    %v722 = vsub.s32 2, %v721
    %v723 = vrot.slane %v303, %v722
    %725 = vbcast.lane.b32.xlu0 %v723, 256
    %v726 = vpop.permute.xlu0 %725
    %s728 = sor.u32 256, 8
    %729 = vbcast.lane.b32.xlu0 %v723, %s728
    %v730 = vpop.permute.xlu0 %729
    %v731 = vlaneseq
    %v732 = vshrl.u32 %v731, 7
    %v733 = vsub.s32 3, %v732
    %v734 = vrot.slane %v303, %v733
    %736 = vbcast.lane.b32.xlu0 %v734, 256
    %v737 = vpop.permute.xlu0 %736
    %s739 = sor.u32 256, 8
    %740 = vbcast.lane.b32.xlu0 %v734, %s739
    %v741 = vpop.permute.xlu0 %740
    %v742 = vlaneseq
    %v743 = vshrl.u32 %v742, 7
    %v744 = vsub.s32 4, %v743
    %v745 = vrot.slane %v303, %v744
    %747 = vbcast.lane.b32.xlu0 %v745, 256
    %v748 = vpop.permute.xlu0 %747
    %s750 = sor.u32 256, 8
    %751 = vbcast.lane.b32.xlu0 %v745, %s750
    %v752 = vpop.permute.xlu0 %751
    %v753 = vlaneseq
    %v754 = vshrl.u32 %v753, 7
    %v755 = vsub.s32 5, %v754
    %v756 = vrot.slane %v303, %v755
    %758 = vbcast.lane.b32.xlu0 %v756, 256
    %v759 = vpop.permute.xlu0 %758
    %s761 = sor.u32 256, 8
    %762 = vbcast.lane.b32.xlu0 %v756, %s761
    %v763 = vpop.permute.xlu0 %762
    %v764 = vlaneseq
    %v765 = vshrl.u32 %v764, 7
    %v766 = vsub.s32 6, %v765
    %v767 = vrot.slane %v303, %v766
    %769 = vbcast.lane.b32.xlu0 %v767, 256
    %v770 = vpop.permute.xlu0 %769
    %s772 = sor.u32 256, 8
    %773 = vbcast.lane.b32.xlu0 %v767, %s772
    %v774 = vpop.permute.xlu0 %773
    %v775 = vlaneseq
    %v776 = vshrl.u32 %v775, 7
    %v777 = vsub.s32 7, %v776
    %v778 = vrot.slane %v303, %v777
    %780 = vbcast.lane.b32.xlu0 %v778, 256
    %v781 = vpop.permute.xlu0 %780
    %s783 = sor.u32 256, 8
    %784 = vbcast.lane.b32.xlu0 %v778, %s783
    %v785 = vpop.permute.xlu0 %784
    %v786 = vlaneseq
    %v787 = vshrl.u32 %v786, 7
    %v788 = vsub.s32 0, %v787
    %v789 = vrot.slane %v304, %v788
    %791 = vbcast.lane.b32.xlu0 %v789, 256
    %v792 = vpop.permute.xlu0 %791
    %s794 = sor.u32 256, 8
    %795 = vbcast.lane.b32.xlu0 %v789, %s794
    %v796 = vpop.permute.xlu0 %795
    %v797 = vlaneseq
    %v798 = vshrl.u32 %v797, 7
    %v799 = vsub.s32 1, %v798
    %v800 = vrot.slane %v304, %v799
    %802 = vbcast.lane.b32.xlu0 %v800, 256
    %v803 = vpop.permute.xlu0 %802
    %s805 = sor.u32 256, 8
    %806 = vbcast.lane.b32.xlu0 %v800, %s805
    %v807 = vpop.permute.xlu0 %806
    %v808 = vlaneseq
    %v809 = vshrl.u32 %v808, 7
    %v810 = vsub.s32 2, %v809
    %v811 = vrot.slane %v304, %v810
    %813 = vbcast.lane.b32.xlu0 %v811, 256
    %v814 = vpop.permute.xlu0 %813
    %s816 = sor.u32 256, 8
    %817 = vbcast.lane.b32.xlu0 %v811, %s816
    %v818 = vpop.permute.xlu0 %817
    %v819 = vlaneseq
    %v820 = vshrl.u32 %v819, 7
    %v821 = vsub.s32 3, %v820
    %v822 = vrot.slane %v304, %v821
    %824 = vbcast.lane.b32.xlu0 %v822, 256
    %v825 = vpop.permute.xlu0 %824
    %s827 = sor.u32 256, 8
    %828 = vbcast.lane.b32.xlu0 %v822, %s827
    %v829 = vpop.permute.xlu0 %828
    %v830 = vlaneseq
    %v831 = vshrl.u32 %v830, 7
    %v832 = vsub.s32 4, %v831
    %v833 = vrot.slane %v304, %v832
    %835 = vbcast.lane.b32.xlu0 %v833, 256
    %v836 = vpop.permute.xlu0 %835
    %s838 = sor.u32 256, 8
    %839 = vbcast.lane.b32.xlu0 %v833, %s838
    %v840 = vpop.permute.xlu0 %839
    %v841 = vlaneseq
    %v842 = vshrl.u32 %v841, 7
    %v843 = vsub.s32 5, %v842
    %v844 = vrot.slane %v304, %v843
    %846 = vbcast.lane.b32.xlu0 %v844, 256
    %v847 = vpop.permute.xlu0 %846
    %s849 = sor.u32 256, 8
    %850 = vbcast.lane.b32.xlu0 %v844, %s849
    %v851 = vpop.permute.xlu0 %850
    %v852 = vlaneseq
    %v853 = vshrl.u32 %v852, 7
    %v854 = vsub.s32 6, %v853
    %v855 = vrot.slane %v304, %v854
    %857 = vbcast.lane.b32.xlu0 %v855, 256
    %v858 = vpop.permute.xlu0 %857
    %s860 = sor.u32 256, 8
    %861 = vbcast.lane.b32.xlu0 %v855, %s860
    %v862 = vpop.permute.xlu0 %861
    %v863 = vlaneseq
    %v864 = vshrl.u32 %v863, 7
    %v865 = vsub.s32 7, %v864
    %v866 = vrot.slane %v304, %v865
    %868 = vbcast.lane.b32.xlu0 %v866, 256
    %v869 = vpop.permute.xlu0 %868
    %s871 = sor.u32 256, 8
    %872 = vbcast.lane.b32.xlu0 %v866, %s871
    %v873 = vpop.permute.xlu0 %872
    %v874 = vlaneseq
    %v875 = vshrl.u32 %v874, 7
    %v876 = vsub.s32 0, %v875
    %v877 = vrot.slane %v305, %v876
    %879 = vbcast.lane.b32.xlu0 %v877, 256
    %v880 = vpop.permute.xlu0 %879
    %s882 = sor.u32 256, 8
    %883 = vbcast.lane.b32.xlu0 %v877, %s882
    %v884 = vpop.permute.xlu0 %883
    %v885 = vlaneseq
    %v886 = vshrl.u32 %v885, 7
    %v887 = vsub.s32 1, %v886
    %v888 = vrot.slane %v305, %v887
    %890 = vbcast.lane.b32.xlu0 %v888, 256
    %v891 = vpop.permute.xlu0 %890
    %s893 = sor.u32 256, 8
    %894 = vbcast.lane.b32.xlu0 %v888, %s893
    %v895 = vpop.permute.xlu0 %894
    %v896 = vlaneseq
    %v897 = vshrl.u32 %v896, 7
    %v898 = vsub.s32 2, %v897
    %v899 = vrot.slane %v305, %v898
    %901 = vbcast.lane.b32.xlu0 %v899, 256
    %v902 = vpop.permute.xlu0 %901
    %s904 = sor.u32 256, 8
    %905 = vbcast.lane.b32.xlu0 %v899, %s904
    %v906 = vpop.permute.xlu0 %905
    %v907 = vlaneseq
    %v908 = vshrl.u32 %v907, 7
    %v909 = vsub.s32 3, %v908
    %v910 = vrot.slane %v305, %v909
    %912 = vbcast.lane.b32.xlu0 %v910, 256
    %v913 = vpop.permute.xlu0 %912
    %s915 = sor.u32 256, 8
    %916 = vbcast.lane.b32.xlu0 %v910, %s915
    %v917 = vpop.permute.xlu0 %916
    %v918 = vlaneseq
    %v919 = vshrl.u32 %v918, 7
    %v920 = vsub.s32 4, %v919
    %v921 = vrot.slane %v305, %v920
    %923 = vbcast.lane.b32.xlu0 %v921, 256
    %v924 = vpop.permute.xlu0 %923
    %s926 = sor.u32 256, 8
    %927 = vbcast.lane.b32.xlu0 %v921, %s926
    %v928 = vpop.permute.xlu0 %927
    %v929 = vlaneseq
    %v930 = vshrl.u32 %v929, 7
    %v931 = vsub.s32 5, %v930
    %v932 = vrot.slane %v305, %v931
    %934 = vbcast.lane.b32.xlu0 %v932, 256
    %v935 = vpop.permute.xlu0 %934
    %s937 = sor.u32 256, 8
    %938 = vbcast.lane.b32.xlu0 %v932, %s937
    %v939 = vpop.permute.xlu0 %938
    %v940 = vlaneseq
    %v941 = vshrl.u32 %v940, 7
    %v942 = vsub.s32 6, %v941
    %v943 = vrot.slane %v305, %v942
    %945 = vbcast.lane.b32.xlu0 %v943, 256
    %v946 = vpop.permute.xlu0 %945
    %s948 = sor.u32 256, 8
    %949 = vbcast.lane.b32.xlu0 %v943, %s948
    %v950 = vpop.permute.xlu0 %949
    %v951 = vlaneseq
    %v952 = vshrl.u32 %v951, 7
    %v953 = vsub.s32 7, %v952
    %v954 = vrot.slane %v305, %v953
    %956 = vbcast.lane.b32.xlu0 %v954, 256
    %v957 = vpop.permute.xlu0 %956
    %s959 = sor.u32 256, 8
    %960 = vbcast.lane.b32.xlu0 %v954, %s959
    %v961 = vpop.permute.xlu0 %960
    %v962 = vlaneseq
    %v963 = vshrl.u32 %v962, 7
    %v964 = vsub.s32 0, %v963
    %v965 = vrot.slane %v306, %v964
    %967 = vbcast.lane.b32.xlu0 %v965, 256
    %v968 = vpop.permute.xlu0 %967
    %s970 = sor.u32 256, 8
    %971 = vbcast.lane.b32.xlu0 %v965, %s970
    %v972 = vpop.permute.xlu0 %971
    %v973 = vlaneseq
    %v974 = vshrl.u32 %v973, 7
    %v975 = vsub.s32 1, %v974
    %v976 = vrot.slane %v306, %v975
    %978 = vbcast.lane.b32.xlu0 %v976, 256
    %v979 = vpop.permute.xlu0 %978
    %s981 = sor.u32 256, 8
    %982 = vbcast.lane.b32.xlu0 %v976, %s981
    %v983 = vpop.permute.xlu0 %982
    %v984 = vlaneseq
    %v985 = vshrl.u32 %v984, 7
    %v986 = vsub.s32 2, %v985
    %v987 = vrot.slane %v306, %v986
    %989 = vbcast.lane.b32.xlu0 %v987, 256
    %v990 = vpop.permute.xlu0 %989
    %s992 = sor.u32 256, 8
    %993 = vbcast.lane.b32.xlu0 %v987, %s992
    %v994 = vpop.permute.xlu0 %993
    %v995 = vlaneseq
    %v996 = vshrl.u32 %v995, 7
    %v997 = vsub.s32 3, %v996
    %v998 = vrot.slane %v306, %v997
    %1000 = vbcast.lane.b32.xlu0 %v998, 256
    %v1001 = vpop.permute.xlu0 %1000
    %s1003 = sor.u32 256, 8
    %1004 = vbcast.lane.b32.xlu0 %v998, %s1003
    %v1005 = vpop.permute.xlu0 %1004
    %v1006 = vlaneseq
    %v1007 = vshrl.u32 %v1006, 7
    %v1008 = vsub.s32 4, %v1007
    %v1009 = vrot.slane %v306, %v1008
    %1011 = vbcast.lane.b32.xlu0 %v1009, 256
    %v1012 = vpop.permute.xlu0 %1011
    %s1014 = sor.u32 256, 8
    %1015 = vbcast.lane.b32.xlu0 %v1009, %s1014
    %v1016 = vpop.permute.xlu0 %1015
    %v1017 = vlaneseq
    %v1018 = vshrl.u32 %v1017, 7
    %v1019 = vsub.s32 5, %v1018
    %v1020 = vrot.slane %v306, %v1019
    %1022 = vbcast.lane.b32.xlu0 %v1020, 256
    %v1023 = vpop.permute.xlu0 %1022
    %s1025 = sor.u32 256, 8
    %1026 = vbcast.lane.b32.xlu0 %v1020, %s1025
    %v1027 = vpop.permute.xlu0 %1026
    %v1028 = vlaneseq
    %v1029 = vshrl.u32 %v1028, 7
    %v1030 = vsub.s32 6, %v1029
    %v1031 = vrot.slane %v306, %v1030
    %1033 = vbcast.lane.b32.xlu0 %v1031, 256
    %v1034 = vpop.permute.xlu0 %1033
    %s1036 = sor.u32 256, 8
    %1037 = vbcast.lane.b32.xlu0 %v1031, %s1036
    %v1038 = vpop.permute.xlu0 %1037
    %v1039 = vlaneseq
    %v1040 = vshrl.u32 %v1039, 7
    %v1041 = vsub.s32 7, %v1040
    %v1042 = vrot.slane %v306, %v1041
    %1044 = vbcast.lane.b32.xlu0 %v1042, 256
    %v1045 = vpop.permute.xlu0 %1044
    %s1047 = sor.u32 256, 8
    %1048 = vbcast.lane.b32.xlu0 %v1042, %s1047
    %v1049 = vpop.permute.xlu0 %1048
    %v1050 = vlaneseq
    %v1051 = vshrl.u32 %v1050, 7
    %v1052 = vsub.s32 0, %v1051
    %v1053 = vrot.slane %v307, %v1052
    %1055 = vbcast.lane.b32.xlu0 %v1053, 256
    %v1056 = vpop.permute.xlu0 %1055
    %s1058 = sor.u32 256, 8
    %1059 = vbcast.lane.b32.xlu0 %v1053, %s1058
    %v1060 = vpop.permute.xlu0 %1059
    %v1061 = vlaneseq
    %v1062 = vshrl.u32 %v1061, 7
    %v1063 = vsub.s32 1, %v1062
    %v1064 = vrot.slane %v307, %v1063
    %1066 = vbcast.lane.b32.xlu0 %v1064, 256
    %v1067 = vpop.permute.xlu0 %1066
    %s1069 = sor.u32 256, 8
    %1070 = vbcast.lane.b32.xlu0 %v1064, %s1069
    %v1071 = vpop.permute.xlu0 %1070
    %v1072 = vlaneseq
    %v1073 = vshrl.u32 %v1072, 7
    %v1074 = vsub.s32 2, %v1073
    %v1075 = vrot.slane %v307, %v1074
    %1077 = vbcast.lane.b32.xlu0 %v1075, 256
    %v1078 = vpop.permute.xlu0 %1077
    %s1080 = sor.u32 256, 8
    %1081 = vbcast.lane.b32.xlu0 %v1075, %s1080
    %v1082 = vpop.permute.xlu0 %1081
    %v1083 = vlaneseq
    %v1084 = vshrl.u32 %v1083, 7
    %v1085 = vsub.s32 3, %v1084
    %v1086 = vrot.slane %v307, %v1085
    %1088 = vbcast.lane.b32.xlu0 %v1086, 256
    %v1089 = vpop.permute.xlu0 %1088
    %s1091 = sor.u32 256, 8
    %1092 = vbcast.lane.b32.xlu0 %v1086, %s1091
    %v1093 = vpop.permute.xlu0 %1092
    %v1094 = vlaneseq
    %v1095 = vshrl.u32 %v1094, 7
    %v1096 = vsub.s32 4, %v1095
    %v1097 = vrot.slane %v307, %v1096
    %1099 = vbcast.lane.b32.xlu0 %v1097, 256
    %v1100 = vpop.permute.xlu0 %1099
    %s1102 = sor.u32 256, 8
    %1103 = vbcast.lane.b32.xlu0 %v1097, %s1102
    %v1104 = vpop.permute.xlu0 %1103
    %v1105 = vlaneseq
    %v1106 = vshrl.u32 %v1105, 7
    %v1107 = vsub.s32 5, %v1106
    %v1108 = vrot.slane %v307, %v1107
    %1110 = vbcast.lane.b32.xlu0 %v1108, 256
    %v1111 = vpop.permute.xlu0 %1110
    %s1113 = sor.u32 256, 8
    %1114 = vbcast.lane.b32.xlu0 %v1108, %s1113
    %v1115 = vpop.permute.xlu0 %1114
    %v1116 = vlaneseq
    %v1117 = vshrl.u32 %v1116, 7
    %v1118 = vsub.s32 6, %v1117
    %v1119 = vrot.slane %v307, %v1118
    %1121 = vbcast.lane.b32.xlu0 %v1119, 256
    %v1122 = vpop.permute.xlu0 %1121
    %s1124 = sor.u32 256, 8
    %1125 = vbcast.lane.b32.xlu0 %v1119, %s1124
    %v1126 = vpop.permute.xlu0 %1125
    %v1127 = vlaneseq
    %v1128 = vshrl.u32 %v1127, 7
    %v1129 = vsub.s32 7, %v1128
    %v1130 = vrot.slane %v307, %v1129
    %1132 = vbcast.lane.b32.xlu0 %v1130, 256
    %v1133 = vpop.permute.xlu0 %1132
    %s1135 = sor.u32 256, 8
    %1136 = vbcast.lane.b32.xlu0 %v1130, %s1135
    %v1137 = vpop.permute.xlu0 %1136
    %v1138 = vlaneseq
    %v1139 = vshrl.u32 %v1138, 7
    %v1140 = vsub.s32 0, %v1139
    %v1141 = vrot.slane %v308, %v1140
    %1143 = vbcast.lane.b32.xlu0 %v1141, 256
    %v1144 = vpop.permute.xlu0 %1143
    %s1146 = sor.u32 256, 8
    %1147 = vbcast.lane.b32.xlu0 %v1141, %s1146
    %v1148 = vpop.permute.xlu0 %1147
    %v1149 = vlaneseq
    %v1150 = vshrl.u32 %v1149, 7
    %v1151 = vsub.s32 1, %v1150
    %v1152 = vrot.slane %v308, %v1151
    %1154 = vbcast.lane.b32.xlu0 %v1152, 256
    %v1155 = vpop.permute.xlu0 %1154
    %s1157 = sor.u32 256, 8
    %1158 = vbcast.lane.b32.xlu0 %v1152, %s1157
    %v1159 = vpop.permute.xlu0 %1158
    %v1160 = vlaneseq
    %v1161 = vshrl.u32 %v1160, 7
    %v1162 = vsub.s32 2, %v1161
    %v1163 = vrot.slane %v308, %v1162
    %1165 = vbcast.lane.b32.xlu0 %v1163, 256
    %v1166 = vpop.permute.xlu0 %1165
    %s1168 = sor.u32 256, 8
    %1169 = vbcast.lane.b32.xlu0 %v1163, %s1168
    %v1170 = vpop.permute.xlu0 %1169
    %v1171 = vlaneseq
    %v1172 = vshrl.u32 %v1171, 7
    %v1173 = vsub.s32 3, %v1172
    %v1174 = vrot.slane %v308, %v1173
    %1176 = vbcast.lane.b32.xlu0 %v1174, 256
    %v1177 = vpop.permute.xlu0 %1176
    %s1179 = sor.u32 256, 8
    %1180 = vbcast.lane.b32.xlu0 %v1174, %s1179
    %v1181 = vpop.permute.xlu0 %1180
    %v1182 = vlaneseq
    %v1183 = vshrl.u32 %v1182, 7
    %v1184 = vsub.s32 4, %v1183
    %v1185 = vrot.slane %v308, %v1184
    %1187 = vbcast.lane.b32.xlu0 %v1185, 256
    %v1188 = vpop.permute.xlu0 %1187
    %s1190 = sor.u32 256, 8
    %1191 = vbcast.lane.b32.xlu0 %v1185, %s1190
    %v1192 = vpop.permute.xlu0 %1191
    %v1193 = vlaneseq
    %v1194 = vshrl.u32 %v1193, 7
    %v1195 = vsub.s32 5, %v1194
    %v1196 = vrot.slane %v308, %v1195
    %1198 = vbcast.lane.b32.xlu0 %v1196, 256
    %v1199 = vpop.permute.xlu0 %1198
    %s1201 = sor.u32 256, 8
    %1202 = vbcast.lane.b32.xlu0 %v1196, %s1201
    %v1203 = vpop.permute.xlu0 %1202
    %v1204 = vlaneseq
    %v1205 = vshrl.u32 %v1204, 7
    %v1206 = vsub.s32 6, %v1205
    %v1207 = vrot.slane %v308, %v1206
    %1209 = vbcast.lane.b32.xlu0 %v1207, 256
    %v1210 = vpop.permute.xlu0 %1209
    %s1212 = sor.u32 256, 8
    %1213 = vbcast.lane.b32.xlu0 %v1207, %s1212
    %v1214 = vpop.permute.xlu0 %1213
    %v1215 = vlaneseq
    %v1216 = vshrl.u32 %v1215, 7
    %v1217 = vsub.s32 7, %v1216
    %v1218 = vrot.slane %v308, %v1217
    %1220 = vbcast.lane.b32.xlu0 %v1218, 256
    %v1221 = vpop.permute.xlu0 %1220
    %s1223 = sor.u32 256, 8
    %1224 = vbcast.lane.b32.xlu0 %v1218, %s1223
    %v1225 = vpop.permute.xlu0 %1224
    %1226 = vst [vmem:[#allocation2] sm:$0xff] %v528
    %1227 = vst [vmem:[#allocation2 + $0x8] sm:$0xff] %v532
    %1228 = vst [vmem:[#allocation2 + $0x10] sm:$0xff] %v539
    %1229 = vst [vmem:[#allocation2 + $0x18] sm:$0xff] %v543
    %1230 = vst [vmem:[#allocation2 + $0x20] sm:$0xff] %v550
    %1231 = vst [vmem:[#allocation2 + $0x28] sm:$0xff] %v554
    %1232 = vst [vmem:[#allocation2 + $0x30] sm:$0xff] %v561
    %1233 = vst [vmem:[#allocation2 + $0x38] sm:$0xff] %v565
    %1234 = vst [vmem:[#allocation2 + $0x40] sm:$0xff] %v572
    %1235 = vst [vmem:[#allocation2 + $0x48] sm:$0xff] %v576
    %1236 = vst [vmem:[#allocation2 + $0x50] sm:$0xff] %v583
    %1237 = vst [vmem:[#allocation2 + $0x58] sm:$0xff] %v587
    %1238 = vst [vmem:[#allocation2 + $0x60] sm:$0xff] %v594
    %1239 = vst [vmem:[#allocation2 + $0x68] sm:$0xff] %v598
    %1240 = vst [vmem:[#allocation2 + $0x70] sm:$0xff] %v605
    %1241 = vst [vmem:[#allocation2 + $0x78] sm:$0xff] %v609
    %1242 = vst [vmem:[#allocation2 + $0x80] sm:$0xff] %v616
    %1243 = vst [vmem:[#allocation2 + $0x88] sm:$0xff] %v620
    %1244 = vst [vmem:[#allocation2 + $0x90] sm:$0xff] %v627
    %1245 = vst [vmem:[#allocation2 + $0x98] sm:$0xff] %v631
    %1246 = vst [vmem:[#allocation2 + $0xa0] sm:$0xff] %v638
    %1247 = vst [vmem:[#allocation2 + $0xa8] sm:$0xff] %v642
    %1248 = vst [vmem:[#allocation2 + $0xb0] sm:$0xff] %v649
    %1249 = vst [vmem:[#allocation2 + $0xb8] sm:$0xff] %v653
    %1250 = vst [vmem:[#allocation2 + $0xc0] sm:$0xff] %v660
    %1251 = vst [vmem:[#allocation2 + $0xc8] sm:$0xff] %v664
    %1252 = vst [vmem:[#allocation2 + $0xd0] sm:$0xff] %v671
    %1253 = vst [vmem:[#allocation2 + $0xd8] sm:$0xff] %v675
    %1254 = vst [vmem:[#allocation2 + $0xe0] sm:$0xff] %v682
    %1255 = vst [vmem:[#allocation2 + $0xe8] sm:$0xff] %v686
    %1256 = vst [vmem:[#allocation2 + $0xf0] sm:$0xff] %v693
    %1257 = vst [vmem:[#allocation2 + $0xf8] sm:$0xff] %v697
    %1258 = vst [vmem:[#allocation2 + $0x100] sm:$0xff] %v704
    %1259 = vst [vmem:[#allocation2 + $0x108] sm:$0xff] %v708
    %1260 = vst [vmem:[#allocation2 + $0x110] sm:$0xff] %v715
    %1261 = vst [vmem:[#allocation2 + $0x118] sm:$0xff] %v719
    %1262 = vst [vmem:[#allocation2 + $0x120] sm:$0xff] %v726
    %1263 = vst [vmem:[#allocation2 + $0x128] sm:$0xff] %v730
    %1264 = vst [vmem:[#allocation2 + $0x130] sm:$0xff] %v737
    %1265 = vst [vmem:[#allocation2 + $0x138] sm:$0xff] %v741
    %1266 = vst [vmem:[#allocation2 + $0x140] sm:$0xff] %v748
    %1267 = vst [vmem:[#allocation2 + $0x148] sm:$0xff] %v752
    %1268 = vst [vmem:[#allocation2 + $0x150] sm:$0xff] %v759
    %1269 = vst [vmem:[#allocation2 + $0x158] sm:$0xff] %v763
    %1270 = vst [vmem:[#allocation2 + $0x160] sm:$0xff] %v770
    %1271 = vst [vmem:[#allocation2 + $0x168] sm:$0xff] %v774
    %1272 = vst [vmem:[#allocation2 + $0x170] sm:$0xff] %v781
    %1273 = vst [vmem:[#allocation2 + $0x178] sm:$0xff] %v785
    %1274 = vst [vmem:[#allocation2 + $0x180] sm:$0xff] %v792
    %1275 = vst [vmem:[#allocation2 + $0x188] sm:$0xff] %v796
    %1276 = vst [vmem:[#allocation2 + $0x190] sm:$0xff] %v803
    %1277 = vst [vmem:[#allocation2 + $0x198] sm:$0xff] %v807
    %1278 = vst [vmem:[#allocation2 + $0x1a0] sm:$0xff] %v814
    %1279 = vst [vmem:[#allocation2 + $0x1a8] sm:$0xff] %v818
    %1280 = vst [vmem:[#allocation2 + $0x1b0] sm:$0xff] %v825
    %1281 = vst [vmem:[#allocation2 + $0x1b8] sm:$0xff] %v829
    %1282 = vst [vmem:[#allocation2 + $0x1c0] sm:$0xff] %v836
    %1283 = vst [vmem:[#allocation2 + $0x1c8] sm:$0xff] %v840
    %1284 = vst [vmem:[#allocation2 + $0x1d0] sm:$0xff] %v847
    %1285 = vst [vmem:[#allocation2 + $0x1d8] sm:$0xff] %v851
    %1286 = vst [vmem:[#allocation2 + $0x1e0] sm:$0xff] %v858
    %1287 = vst [vmem:[#allocation2 + $0x1e8] sm:$0xff] %v862
    %1288 = vst [vmem:[#allocation2 + $0x1f0] sm:$0xff] %v869
    %1289 = vst [vmem:[#allocation2 + $0x1f8] sm:$0xff] %v873
    %1290 = vst [vmem:[#allocation2 + $0x200] sm:$0xff] %v880
    %1291 = vst [vmem:[#allocation2 + $0x208] sm:$0xff] %v884
    %1292 = vst [vmem:[#allocation2 + $0x210] sm:$0xff] %v891
    %1293 = vst [vmem:[#allocation2 + $0x218] sm:$0xff] %v895
    %1294 = vst [vmem:[#allocation2 + $0x220] sm:$0xff] %v902
    %1295 = vst [vmem:[#allocation2 + $0x228] sm:$0xff] %v906
    %1296 = vst [vmem:[#allocation2 + $0x230] sm:$0xff] %v913
    %1297 = vst [vmem:[#allocation2 + $0x238] sm:$0xff] %v917
    %1298 = vst [vmem:[#allocation2 + $0x240] sm:$0xff] %v924
    %1299 = vst [vmem:[#allocation2 + $0x248] sm:$0xff] %v928
    %1300 = vst [vmem:[#allocation2 + $0x250] sm:$0xff] %v935
    %1301 = vst [vmem:[#allocation2 + $0x258] sm:$0xff] %v939
    %1302 = vst [vmem:[#allocation2 + $0x260] sm:$0xff] %v946
    %1303 = vst [vmem:[#allocation2 + $0x268] sm:$0xff] %v950
    %1304 = vst [vmem:[#allocation2 + $0x270] sm:$0xff] %v957
    %1305 = vst [vmem:[#allocation2 + $0x278] sm:$0xff] %v961
    %1306 = vst [vmem:[#allocation2 + $0x280] sm:$0xff] %v968
    %1307 = vst [vmem:[#allocation2 + $0x288] sm:$0xff] %v972
    %1308 = vst [vmem:[#allocation2 + $0x290] sm:$0xff] %v979
    %1309 = vst [vmem:[#allocation2 + $0x298] sm:$0xff] %v983
    %1310 = vst [vmem:[#allocation2 + $0x2a0] sm:$0xff] %v990
    %1311 = vst [vmem:[#allocation2 + $0x2a8] sm:$0xff] %v994
    %1312 = vst [vmem:[#allocation2 + $0x2b0] sm:$0xff] %v1001
    %1313 = vst [vmem:[#allocation2 + $0x2b8] sm:$0xff] %v1005
    %1314 = vst [vmem:[#allocation2 + $0x2c0] sm:$0xff] %v1012
    %1315 = vst [vmem:[#allocation2 + $0x2c8] sm:$0xff] %v1016
    %1316 = vst [vmem:[#allocation2 + $0x2d0] sm:$0xff] %v1023
    %1317 = vst [vmem:[#allocation2 + $0x2d8] sm:$0xff] %v1027
    %1318 = vst [vmem:[#allocation2 + $0x2e0] sm:$0xff] %v1034
    %1319 = vst [vmem:[#allocation2 + $0x2e8] sm:$0xff] %v1038
    %1320 = vst [vmem:[#allocation2 + $0x2f0] sm:$0xff] %v1045
    %1321 = vst [vmem:[#allocation2 + $0x2f8] sm:$0xff] %v1049
    %1322 = vst [vmem:[#allocation2 + $0x300] sm:$0xff] %v1056
    %1323 = vst [vmem:[#allocation2 + $0x308] sm:$0xff] %v1060
    %1324 = vst [vmem:[#allocation2 + $0x310] sm:$0xff] %v1067
    %1325 = vst [vmem:[#allocation2 + $0x318] sm:$0xff] %v1071
    %1326 = vst [vmem:[#allocation2 + $0x320] sm:$0xff] %v1078
    %1327 = vst [vmem:[#allocation2 + $0x328] sm:$0xff] %v1082
    %1328 = vst [vmem:[#allocation2 + $0x330] sm:$0xff] %v1089
    %1329 = vst [vmem:[#allocation2 + $0x338] sm:$0xff] %v1093
    %1330 = vst [vmem:[#allocation2 + $0x340] sm:$0xff] %v1100
    %1331 = vst [vmem:[#allocation2 + $0x348] sm:$0xff] %v1104
    %1332 = vst [vmem:[#allocation2 + $0x350] sm:$0xff] %v1111
    %1333 = vst [vmem:[#allocation2 + $0x358] sm:$0xff] %v1115
    %1334 = vst [vmem:[#allocation2 + $0x360] sm:$0xff] %v1122
    %1335 = vst [vmem:[#allocation2 + $0x368] sm:$0xff] %v1126
    %1336 = vst [vmem:[#allocation2 + $0x370] sm:$0xff] %v1133
    %1337 = vst [vmem:[#allocation2 + $0x378] sm:$0xff] %v1137
    %1338 = vst [vmem:[#allocation2 + $0x380] sm:$0xff] %v1144
    %1339 = vst [vmem:[#allocation2 + $0x388] sm:$0xff] %v1148
    %1340 = vst [vmem:[#allocation2 + $0x390] sm:$0xff] %v1155
    %1341 = vst [vmem:[#allocation2 + $0x398] sm:$0xff] %v1159
    %1342 = vst [vmem:[#allocation2 + $0x3a0] sm:$0xff] %v1166
    %1343 = vst [vmem:[#allocation2 + $0x3a8] sm:$0xff] %v1170
    %1344 = vst [vmem:[#allocation2 + $0x3b0] sm:$0xff] %v1177
    %1345 = vst [vmem:[#allocation2 + $0x3b8] sm:$0xff] %v1181
    %1346 = vst [vmem:[#allocation2 + $0x3c0] sm:$0xff] %v1188
    %1347 = vst [vmem:[#allocation2 + $0x3c8] sm:$0xff] %v1192
    %1348 = vst [vmem:[#allocation2 + $0x3d0] sm:$0xff] %v1199
    %1349 = vst [vmem:[#allocation2 + $0x3d8] sm:$0xff] %v1203
    %1350 = vst [vmem:[#allocation2 + $0x3e0] sm:$0xff] %v1210
    %1351 = vst [vmem:[#allocation2 + $0x3e8] sm:$0xff] %v1214
    %1352 = vst [vmem:[#allocation2 + $0x3f0] sm:$0xff] %v1221
    %1353 = vst [vmem:[#allocation2 + $0x3f8] sm:$0xff] %v1225
    %v1362 = vcombine.high %v499, %v499
    %v1364 = vunpack.c.l.s4 1966171168
    %v1365 = vunpack.c.0.s8 %v1364
    %v1366 = vlaneseq
    %v1367 = vshrl.u32 %v1366, 7
    %v1368 = vsub.s32 %v1365, %v1367
    %v1369 = vrot.slane %v499, %v1368
    %v1371 = vunpack.c.l.s4 1966171168
    %v1372 = vunpack.c.0.s8 %v1371
    %v1373 = vlaneseq
    %v1374 = vshrl.u32 %v1373, 7
    %v1375 = vsub.s32 %v1372, %v1374
    %v1376 = vrot.slane %v1362, %v1375
    %v1377 = vcombine.high %v1369, %v1369
    %v1378 = vcombine.high %v1376, %v1376
    %v1380 = vunpack.c.l.s4 1966171168
    %v1381 = vunpack.c.0.s8 %v1380
    %v1382 = vlaneseq
    %v1383 = vshrl.u32 %v1382, 7
    %v1384 = vsub.s32 %v1381, %v1383
    %v1385 = vrot.slane %v1369, %v1384
    %v1387 = vunpack.c.l.s4 1966171168
    %v1388 = vunpack.c.0.s8 %v1387
    %v1389 = vlaneseq
    %v1390 = vshrl.u32 %v1389, 7
    %v1391 = vsub.s32 %v1388, %v1390
    %v1392 = vrot.slane %v1376, %v1391
    %v1394 = vunpack.c.l.s4 1966171168
    %v1395 = vunpack.c.0.s8 %v1394
    %v1396 = vlaneseq
    %v1397 = vshrl.u32 %v1396, 7
    %v1398 = vsub.s32 %v1395, %v1397
    %v1399 = vrot.slane %v1377, %v1398
    %v1401 = vunpack.c.l.s4 1966171168
    %v1402 = vunpack.c.0.s8 %v1401
    %v1403 = vlaneseq
    %v1404 = vshrl.u32 %v1403, 7
    %v1405 = vsub.s32 %v1402, %v1404
    %v1406 = vrot.slane %v1378, %v1405
    %v1407 = vcombine.high %v1385, %v1385
    %v1408 = vcombine.high %v1392, %v1392
    %v1409 = vcombine.high %v1399, %v1399
    %v1410 = vcombine.high %v1406, %v1406
    %v1411 = vcombine.high %v501, %v501
    %v1413 = vunpack.c.l.s4 1966171168
    %v1414 = vunpack.c.0.s8 %v1413
    %v1415 = vlaneseq
    %v1416 = vshrl.u32 %v1415, 7
    %v1417 = vsub.s32 %v1414, %v1416
    %v1418 = vrot.slane %v501, %v1417
    %v1420 = vunpack.c.l.s4 1966171168
    %v1421 = vunpack.c.0.s8 %v1420
    %v1422 = vlaneseq
    %v1423 = vshrl.u32 %v1422, 7
    %v1424 = vsub.s32 %v1421, %v1423
    %v1425 = vrot.slane %v1411, %v1424
    %v1426 = vcombine.high %v1418, %v1418
    %v1427 = vcombine.high %v1425, %v1425
    %v1429 = vunpack.c.l.s4 1966171168
    %v1430 = vunpack.c.0.s8 %v1429
    %v1431 = vlaneseq
    %v1432 = vshrl.u32 %v1431, 7
    %v1433 = vsub.s32 %v1430, %v1432
    %v1434 = vrot.slane %v1418, %v1433
    %v1436 = vunpack.c.l.s4 1966171168
    %v1437 = vunpack.c.0.s8 %v1436
    %v1438 = vlaneseq
    %v1439 = vshrl.u32 %v1438, 7
    %v1440 = vsub.s32 %v1437, %v1439
    %v1441 = vrot.slane %v1425, %v1440
    %v1443 = vunpack.c.l.s4 1966171168
    %v1444 = vunpack.c.0.s8 %v1443
    %v1445 = vlaneseq
    %v1446 = vshrl.u32 %v1445, 7
    %v1447 = vsub.s32 %v1444, %v1446
    %v1448 = vrot.slane %v1426, %v1447
    %v1450 = vunpack.c.l.s4 1966171168
    %v1451 = vunpack.c.0.s8 %v1450
    %v1452 = vlaneseq
    %v1453 = vshrl.u32 %v1452, 7
    %v1454 = vsub.s32 %v1451, %v1453
    %v1455 = vrot.slane %v1427, %v1454
    %v1456 = vcombine.high %v1434, %v1434
    %v1457 = vcombine.high %v1441, %v1441
    %v1458 = vcombine.high %v1448, %v1448
    %v1459 = vcombine.high %v1455, %v1455
    %v1460 = vcombine.high %v503, %v503
    %v1462 = vunpack.c.l.s4 1966171168
    %v1463 = vunpack.c.0.s8 %v1462
    %v1464 = vlaneseq
    %v1465 = vshrl.u32 %v1464, 7
    %v1466 = vsub.s32 %v1463, %v1465
    %v1467 = vrot.slane %v503, %v1466
    %v1469 = vunpack.c.l.s4 1966171168
    %v1470 = vunpack.c.0.s8 %v1469
    %v1471 = vlaneseq
    %v1472 = vshrl.u32 %v1471, 7
    %v1473 = vsub.s32 %v1470, %v1472
    %v1474 = vrot.slane %v1460, %v1473
    %v1475 = vcombine.high %v1467, %v1467
    %v1476 = vcombine.high %v1474, %v1474
    %v1478 = vunpack.c.l.s4 1966171168
    %v1479 = vunpack.c.0.s8 %v1478
    %v1480 = vlaneseq
    %v1481 = vshrl.u32 %v1480, 7
    %v1482 = vsub.s32 %v1479, %v1481
    %v1483 = vrot.slane %v1467, %v1482
    %v1485 = vunpack.c.l.s4 1966171168
    %v1486 = vunpack.c.0.s8 %v1485
    %v1487 = vlaneseq
    %v1488 = vshrl.u32 %v1487, 7
    %v1489 = vsub.s32 %v1486, %v1488
    %v1490 = vrot.slane %v1474, %v1489
    %v1492 = vunpack.c.l.s4 1966171168
    %v1493 = vunpack.c.0.s8 %v1492
    %v1494 = vlaneseq
    %v1495 = vshrl.u32 %v1494, 7
    %v1496 = vsub.s32 %v1493, %v1495
    %v1497 = vrot.slane %v1475, %v1496
    %v1499 = vunpack.c.l.s4 1966171168
    %v1500 = vunpack.c.0.s8 %v1499
    %v1501 = vlaneseq
    %v1502 = vshrl.u32 %v1501, 7
    %v1503 = vsub.s32 %v1500, %v1502
    %v1504 = vrot.slane %v1476, %v1503
    %v1505 = vcombine.high %v1483, %v1483
    %v1506 = vcombine.high %v1490, %v1490
    %v1507 = vcombine.high %v1497, %v1497
    %v1508 = vcombine.high %v1504, %v1504
    %v1509 = vcombine.high %v505, %v505
    %v1511 = vunpack.c.l.s4 1966171168
    %v1512 = vunpack.c.0.s8 %v1511
    %v1513 = vlaneseq
    %v1514 = vshrl.u32 %v1513, 7
    %v1515 = vsub.s32 %v1512, %v1514
    %v1516 = vrot.slane %v505, %v1515
    %v1518 = vunpack.c.l.s4 1966171168
    %v1519 = vunpack.c.0.s8 %v1518
    %v1520 = vlaneseq
    %v1521 = vshrl.u32 %v1520, 7
    %v1522 = vsub.s32 %v1519, %v1521
    %v1523 = vrot.slane %v1509, %v1522
    %v1524 = vcombine.high %v1516, %v1516
    %v1525 = vcombine.high %v1523, %v1523
    %v1527 = vunpack.c.l.s4 1966171168
    %v1528 = vunpack.c.0.s8 %v1527
    %v1529 = vlaneseq
    %v1530 = vshrl.u32 %v1529, 7
    %v1531 = vsub.s32 %v1528, %v1530
    %v1532 = vrot.slane %v1516, %v1531
    %v1534 = vunpack.c.l.s4 1966171168
    %v1535 = vunpack.c.0.s8 %v1534
    %v1536 = vlaneseq
    %v1537 = vshrl.u32 %v1536, 7
    %v1538 = vsub.s32 %v1535, %v1537
    %v1539 = vrot.slane %v1523, %v1538
    %v1541 = vunpack.c.l.s4 1966171168
    %v1542 = vunpack.c.0.s8 %v1541
    %v1543 = vlaneseq
    %v1544 = vshrl.u32 %v1543, 7
    %v1545 = vsub.s32 %v1542, %v1544
    %v1546 = vrot.slane %v1524, %v1545
    %v1548 = vunpack.c.l.s4 1966171168
    %v1549 = vunpack.c.0.s8 %v1548
    %v1550 = vlaneseq
    %v1551 = vshrl.u32 %v1550, 7
    %v1552 = vsub.s32 %v1549, %v1551
    %v1553 = vrot.slane %v1525, %v1552
    %v1554 = vcombine.high %v1532, %v1532
    %v1555 = vcombine.high %v1539, %v1539
    %v1556 = vcombine.high %v1546, %v1546
    %v1557 = vcombine.high %v1553, %v1553
    %v1558 = vcombine.high %v507, %v507
    %v1560 = vunpack.c.l.s4 1966171168
    %v1561 = vunpack.c.0.s8 %v1560
    %v1562 = vlaneseq
    %v1563 = vshrl.u32 %v1562, 7
    %v1564 = vsub.s32 %v1561, %v1563
    %v1565 = vrot.slane %v507, %v1564
    %v1567 = vunpack.c.l.s4 1966171168
    %v1568 = vunpack.c.0.s8 %v1567
    %v1569 = vlaneseq
    %v1570 = vshrl.u32 %v1569, 7
    %v1571 = vsub.s32 %v1568, %v1570
    %v1572 = vrot.slane %v1558, %v1571
    %v1573 = vcombine.high %v1565, %v1565
    %v1574 = vcombine.high %v1572, %v1572
    %v1576 = vunpack.c.l.s4 1966171168
    %v1577 = vunpack.c.0.s8 %v1576
    %v1578 = vlaneseq
    %v1579 = vshrl.u32 %v1578, 7
    %v1580 = vsub.s32 %v1577, %v1579
    %v1581 = vrot.slane %v1565, %v1580
    %v1583 = vunpack.c.l.s4 1966171168
    %v1584 = vunpack.c.0.s8 %v1583
    %v1585 = vlaneseq
    %v1586 = vshrl.u32 %v1585, 7
    %v1587 = vsub.s32 %v1584, %v1586
    %v1588 = vrot.slane %v1572, %v1587
    %v1590 = vunpack.c.l.s4 1966171168
    %v1591 = vunpack.c.0.s8 %v1590
    %v1592 = vlaneseq
    %v1593 = vshrl.u32 %v1592, 7
    %v1594 = vsub.s32 %v1591, %v1593
    %v1595 = vrot.slane %v1573, %v1594
    %v1597 = vunpack.c.l.s4 1966171168
    %v1598 = vunpack.c.0.s8 %v1597
    %v1599 = vlaneseq
    %v1600 = vshrl.u32 %v1599, 7
    %v1601 = vsub.s32 %v1598, %v1600
    %v1602 = vrot.slane %v1574, %v1601
    %v1603 = vcombine.high %v1581, %v1581
    %v1604 = vcombine.high %v1588, %v1588
    %v1605 = vcombine.high %v1595, %v1595
    %v1606 = vcombine.high %v1602, %v1602
    %v1607 = vcombine.high %v509, %v509
    %v1609 = vunpack.c.l.s4 1966171168
    %v1610 = vunpack.c.0.s8 %v1609
    %v1611 = vlaneseq
    %v1612 = vshrl.u32 %v1611, 7
    %v1613 = vsub.s32 %v1610, %v1612
    %v1614 = vrot.slane %v509, %v1613
    %v1616 = vunpack.c.l.s4 1966171168
    %v1617 = vunpack.c.0.s8 %v1616
    %v1618 = vlaneseq
    %v1619 = vshrl.u32 %v1618, 7
    %v1620 = vsub.s32 %v1617, %v1619
    %v1621 = vrot.slane %v1607, %v1620
    %v1622 = vcombine.high %v1614, %v1614
    %v1623 = vcombine.high %v1621, %v1621
    %v1625 = vunpack.c.l.s4 1966171168
    %v1626 = vunpack.c.0.s8 %v1625
    %v1627 = vlaneseq
    %v1628 = vshrl.u32 %v1627, 7
    %v1629 = vsub.s32 %v1626, %v1628
    %v1630 = vrot.slane %v1614, %v1629
    %v1632 = vunpack.c.l.s4 1966171168
    %v1633 = vunpack.c.0.s8 %v1632
    %v1634 = vlaneseq
    %v1635 = vshrl.u32 %v1634, 7
    %v1636 = vsub.s32 %v1633, %v1635
    %v1637 = vrot.slane %v1621, %v1636
    %v1639 = vunpack.c.l.s4 1966171168
    %v1640 = vunpack.c.0.s8 %v1639
    %v1641 = vlaneseq
    %v1642 = vshrl.u32 %v1641, 7
    %v1643 = vsub.s32 %v1640, %v1642
    %v1644 = vrot.slane %v1622, %v1643
    %v1646 = vunpack.c.l.s4 1966171168
    %v1647 = vunpack.c.0.s8 %v1646
    %v1648 = vlaneseq
    %v1649 = vshrl.u32 %v1648, 7
    %v1650 = vsub.s32 %v1647, %v1649
    %v1651 = vrot.slane %v1623, %v1650
    %v1652 = vcombine.high %v1630, %v1630
    %v1653 = vcombine.high %v1637, %v1637
    %v1654 = vcombine.high %v1644, %v1644
    %v1655 = vcombine.high %v1651, %v1651
    %v1656 = vcombine.high %v511, %v511
    %v1658 = vunpack.c.l.s4 1966171168
    %v1659 = vunpack.c.0.s8 %v1658
    %v1660 = vlaneseq
    %v1661 = vshrl.u32 %v1660, 7
    %v1662 = vsub.s32 %v1659, %v1661
    %v1663 = vrot.slane %v511, %v1662
    %v1665 = vunpack.c.l.s4 1966171168
    %v1666 = vunpack.c.0.s8 %v1665
    %v1667 = vlaneseq
    %v1668 = vshrl.u32 %v1667, 7
    %v1669 = vsub.s32 %v1666, %v1668
    %v1670 = vrot.slane %v1656, %v1669
    %v1671 = vcombine.high %v1663, %v1663
    %v1672 = vcombine.high %v1670, %v1670
    %v1674 = vunpack.c.l.s4 1966171168
    %v1675 = vunpack.c.0.s8 %v1674
    %v1676 = vlaneseq
    %v1677 = vshrl.u32 %v1676, 7
    %v1678 = vsub.s32 %v1675, %v1677
    %v1679 = vrot.slane %v1663, %v1678
    %v1681 = vunpack.c.l.s4 1966171168
    %v1682 = vunpack.c.0.s8 %v1681
    %v1683 = vlaneseq
    %v1684 = vshrl.u32 %v1683, 7
    %v1685 = vsub.s32 %v1682, %v1684
    %v1686 = vrot.slane %v1670, %v1685
    %v1688 = vunpack.c.l.s4 1966171168
    %v1689 = vunpack.c.0.s8 %v1688
    %v1690 = vlaneseq
    %v1691 = vshrl.u32 %v1690, 7
    %v1692 = vsub.s32 %v1689, %v1691
    %v1693 = vrot.slane %v1671, %v1692
    %v1695 = vunpack.c.l.s4 1966171168
    %v1696 = vunpack.c.0.s8 %v1695
    %v1697 = vlaneseq
    %v1698 = vshrl.u32 %v1697, 7
    %v1699 = vsub.s32 %v1696, %v1698
    %v1700 = vrot.slane %v1672, %v1699
    %v1701 = vcombine.high %v1679, %v1679
    %v1702 = vcombine.high %v1686, %v1686
    %v1703 = vcombine.high %v1693, %v1693
    %v1704 = vcombine.high %v1700, %v1700
    %v1705 = vcombine.high %v513, %v513
    %v1707 = vunpack.c.l.s4 1966171168
    %v1708 = vunpack.c.0.s8 %v1707
    %v1709 = vlaneseq
    %v1710 = vshrl.u32 %v1709, 7
    %v1711 = vsub.s32 %v1708, %v1710
    %v1712 = vrot.slane %v513, %v1711
    %v1714 = vunpack.c.l.s4 1966171168
    %v1715 = vunpack.c.0.s8 %v1714
    %v1716 = vlaneseq
    %v1717 = vshrl.u32 %v1716, 7
    %v1718 = vsub.s32 %v1715, %v1717
    %v1719 = vrot.slane %v1705, %v1718
    %v1720 = vcombine.high %v1712, %v1712
    %v1721 = vcombine.high %v1719, %v1719
    %v1723 = vunpack.c.l.s4 1966171168
    %v1724 = vunpack.c.0.s8 %v1723
    %v1725 = vlaneseq
    %v1726 = vshrl.u32 %v1725, 7
    %v1727 = vsub.s32 %v1724, %v1726
    %v1728 = vrot.slane %v1712, %v1727
    %v1730 = vunpack.c.l.s4 1966171168
    %v1731 = vunpack.c.0.s8 %v1730
    %v1732 = vlaneseq
    %v1733 = vshrl.u32 %v1732, 7
    %v1734 = vsub.s32 %v1731, %v1733
    %v1735 = vrot.slane %v1719, %v1734
    %v1737 = vunpack.c.l.s4 1966171168
    %v1738 = vunpack.c.0.s8 %v1737
    %v1739 = vlaneseq
    %v1740 = vshrl.u32 %v1739, 7
    %v1741 = vsub.s32 %v1738, %v1740
    %v1742 = vrot.slane %v1720, %v1741
    %v1744 = vunpack.c.l.s4 1966171168
    %v1745 = vunpack.c.0.s8 %v1744
    %v1746 = vlaneseq
    %v1747 = vshrl.u32 %v1746, 7
    %v1748 = vsub.s32 %v1745, %v1747
    %v1749 = vrot.slane %v1721, %v1748
    %v1750 = vcombine.high %v1728, %v1728
    %v1751 = vcombine.high %v1735, %v1735
    %v1752 = vcombine.high %v1742, %v1742
    %v1753 = vcombine.high %v1749, %v1749
    %v1754 = vlaneseq
    %v1755 = vshrl.u32 %v1754, 7
    %v1756 = vsub.s32 0, %v1755
    %v1757 = vrot.slane %v1385, %v1756
    %v1758 = vlaneseq
    %v1759 = vshrl.u32 %v1758, 7
    %v1760 = vsub.s32 0, %v1759
    %v1761 = vrot.slane %v1399, %v1760
    %v1762 = vlaneseq
    %v1763 = vshrl.u32 %v1762, 7
    %v1764 = vsub.s32 0, %v1763
    %v1765 = vrot.slane %v1407, %v1764
    %v1766 = vlaneseq
    %v1767 = vshrl.u32 %v1766, 7
    %v1768 = vsub.s32 0, %v1767
    %v1769 = vrot.slane %v1409, %v1768
    %v1770 = vlaneseq
    %v1771 = vshrl.u32 %v1770, 7
    %v1772 = vsub.s32 0, %v1771
    %v1773 = vrot.slane %v1392, %v1772
    %v1774 = vlaneseq
    %v1775 = vshrl.u32 %v1774, 7
    %v1776 = vsub.s32 0, %v1775
    %v1777 = vrot.slane %v1406, %v1776
    %v1778 = vlaneseq
    %v1779 = vshrl.u32 %v1778, 7
    %v1780 = vsub.s32 0, %v1779
    %v1781 = vrot.slane %v1408, %v1780
    %v1782 = vlaneseq
    %v1783 = vshrl.u32 %v1782, 7
    %v1784 = vsub.s32 0, %v1783
    %v1785 = vrot.slane %v1410, %v1784
    %v1786 = vlaneseq
    %v1787 = vshrl.u32 %v1786, 7
    %v1788 = vsub.s32 0, %v1787
    %v1789 = vrot.slane %v1434, %v1788
    %v1790 = vlaneseq
    %v1791 = vshrl.u32 %v1790, 7
    %v1792 = vsub.s32 0, %v1791
    %v1793 = vrot.slane %v1448, %v1792
    %v1794 = vlaneseq
    %v1795 = vshrl.u32 %v1794, 7
    %v1796 = vsub.s32 0, %v1795
    %v1797 = vrot.slane %v1456, %v1796
    %v1798 = vlaneseq
    %v1799 = vshrl.u32 %v1798, 7
    %v1800 = vsub.s32 0, %v1799
    %v1801 = vrot.slane %v1458, %v1800
    %v1802 = vlaneseq
    %v1803 = vshrl.u32 %v1802, 7
    %v1804 = vsub.s32 0, %v1803
    %v1805 = vrot.slane %v1441, %v1804
    %v1806 = vlaneseq
    %v1807 = vshrl.u32 %v1806, 7
    %v1808 = vsub.s32 0, %v1807
    %v1809 = vrot.slane %v1455, %v1808
    %v1810 = vlaneseq
    %v1811 = vshrl.u32 %v1810, 7
    %v1812 = vsub.s32 0, %v1811
    %v1813 = vrot.slane %v1457, %v1812
    %v1814 = vlaneseq
    %v1815 = vshrl.u32 %v1814, 7
    %v1816 = vsub.s32 0, %v1815
    %v1817 = vrot.slane %v1459, %v1816
    %v1818 = vlaneseq
    %v1819 = vshrl.u32 %v1818, 7
    %v1820 = vsub.s32 0, %v1819
    %v1821 = vrot.slane %v1483, %v1820
    %v1822 = vlaneseq
    %v1823 = vshrl.u32 %v1822, 7
    %v1824 = vsub.s32 0, %v1823
    %v1825 = vrot.slane %v1497, %v1824
    %v1826 = vlaneseq
    %v1827 = vshrl.u32 %v1826, 7
    %v1828 = vsub.s32 0, %v1827
    %v1829 = vrot.slane %v1505, %v1828
    %v1830 = vlaneseq
    %v1831 = vshrl.u32 %v1830, 7
    %v1832 = vsub.s32 0, %v1831
    %v1833 = vrot.slane %v1507, %v1832
    %v1834 = vlaneseq
    %v1835 = vshrl.u32 %v1834, 7
    %v1836 = vsub.s32 0, %v1835
    %v1837 = vrot.slane %v1490, %v1836
    %v1838 = vlaneseq
    %v1839 = vshrl.u32 %v1838, 7
    %v1840 = vsub.s32 0, %v1839
    %v1841 = vrot.slane %v1504, %v1840
    %v1842 = vlaneseq
    %v1843 = vshrl.u32 %v1842, 7
    %v1844 = vsub.s32 0, %v1843
    %v1845 = vrot.slane %v1506, %v1844
    %v1846 = vlaneseq
    %v1847 = vshrl.u32 %v1846, 7
    %v1848 = vsub.s32 0, %v1847
    %v1849 = vrot.slane %v1508, %v1848
    %v1850 = vlaneseq
    %v1851 = vshrl.u32 %v1850, 7
    %v1852 = vsub.s32 0, %v1851
    %v1853 = vrot.slane %v1532, %v1852
    %v1854 = vlaneseq
    %v1855 = vshrl.u32 %v1854, 7
    %v1856 = vsub.s32 0, %v1855
    %v1857 = vrot.slane %v1546, %v1856
    %v1858 = vlaneseq
    %v1859 = vshrl.u32 %v1858, 7
    %v1860 = vsub.s32 0, %v1859
    %v1861 = vrot.slane %v1554, %v1860
    %v1862 = vlaneseq
    %v1863 = vshrl.u32 %v1862, 7
    %v1864 = vsub.s32 0, %v1863
    %v1865 = vrot.slane %v1556, %v1864
    %v1866 = vlaneseq
    %v1867 = vshrl.u32 %v1866, 7
    %v1868 = vsub.s32 0, %v1867
    %v1869 = vrot.slane %v1539, %v1868
    %v1870 = vlaneseq
    %v1871 = vshrl.u32 %v1870, 7
    %v1872 = vsub.s32 0, %v1871
    %v1873 = vrot.slane %v1553, %v1872
    %v1874 = vlaneseq
    %v1875 = vshrl.u32 %v1874, 7
    %v1876 = vsub.s32 0, %v1875
    %v1877 = vrot.slane %v1555, %v1876
    %v1878 = vlaneseq
    %v1879 = vshrl.u32 %v1878, 7
    %v1880 = vsub.s32 0, %v1879
    %v1881 = vrot.slane %v1557, %v1880
    %v1882 = vlaneseq
    %v1883 = vshrl.u32 %v1882, 7
    %v1884 = vsub.s32 0, %v1883
    %v1885 = vrot.slane %v1581, %v1884
    %v1886 = vlaneseq
    %v1887 = vshrl.u32 %v1886, 7
    %v1888 = vsub.s32 0, %v1887
    %v1889 = vrot.slane %v1595, %v1888
    %v1890 = vlaneseq
    %v1891 = vshrl.u32 %v1890, 7
    %v1892 = vsub.s32 0, %v1891
    %v1893 = vrot.slane %v1603, %v1892
    %v1894 = vlaneseq
    %v1895 = vshrl.u32 %v1894, 7
    %v1896 = vsub.s32 0, %v1895
    %v1897 = vrot.slane %v1605, %v1896
    %v1898 = vlaneseq
    %v1899 = vshrl.u32 %v1898, 7
    %v1900 = vsub.s32 0, %v1899
    %v1901 = vrot.slane %v1588, %v1900
    %v1902 = vlaneseq
    %v1903 = vshrl.u32 %v1902, 7
    %v1904 = vsub.s32 0, %v1903
    %v1905 = vrot.slane %v1602, %v1904
    %v1906 = vlaneseq
    %v1907 = vshrl.u32 %v1906, 7
    %v1908 = vsub.s32 0, %v1907
    %v1909 = vrot.slane %v1604, %v1908
    %v1910 = vlaneseq
    %v1911 = vshrl.u32 %v1910, 7
    %v1912 = vsub.s32 0, %v1911
    %v1913 = vrot.slane %v1606, %v1912
    %v1914 = vlaneseq
    %v1915 = vshrl.u32 %v1914, 7
    %v1916 = vsub.s32 0, %v1915
    %v1917 = vrot.slane %v1630, %v1916
    %v1918 = vlaneseq
    %v1919 = vshrl.u32 %v1918, 7
    %v1920 = vsub.s32 0, %v1919
    %v1921 = vrot.slane %v1644, %v1920
    %v1922 = vlaneseq
    %v1923 = vshrl.u32 %v1922, 7
    %v1924 = vsub.s32 0, %v1923
    %v1925 = vrot.slane %v1652, %v1924
    %v1926 = vlaneseq
    %v1927 = vshrl.u32 %v1926, 7
    %v1928 = vsub.s32 0, %v1927
    %v1929 = vrot.slane %v1654, %v1928
    %v1930 = vlaneseq
    %v1931 = vshrl.u32 %v1930, 7
    %v1932 = vsub.s32 0, %v1931
    %v1933 = vrot.slane %v1637, %v1932
    %v1934 = vlaneseq
    %v1935 = vshrl.u32 %v1934, 7
    %v1936 = vsub.s32 0, %v1935
    %v1937 = vrot.slane %v1651, %v1936
    %v1938 = vlaneseq
    %v1939 = vshrl.u32 %v1938, 7
    %v1940 = vsub.s32 0, %v1939
    %v1941 = vrot.slane %v1653, %v1940
    %v1942 = vlaneseq
    %v1943 = vshrl.u32 %v1942, 7
    %v1944 = vsub.s32 0, %v1943
    %v1945 = vrot.slane %v1655, %v1944
    %v1946 = vlaneseq
    %v1947 = vshrl.u32 %v1946, 7
    %v1948 = vsub.s32 0, %v1947
    %v1949 = vrot.slane %v1679, %v1948
    %v1950 = vlaneseq
    %v1951 = vshrl.u32 %v1950, 7
    %v1952 = vsub.s32 0, %v1951
    %v1953 = vrot.slane %v1693, %v1952
    %v1954 = vlaneseq
    %v1955 = vshrl.u32 %v1954, 7
    %v1956 = vsub.s32 0, %v1955
    %v1957 = vrot.slane %v1701, %v1956
    %v1958 = vlaneseq
    %v1959 = vshrl.u32 %v1958, 7
    %v1960 = vsub.s32 0, %v1959
    %v1961 = vrot.slane %v1703, %v1960
    %v1962 = vlaneseq
    %v1963 = vshrl.u32 %v1962, 7
    %v1964 = vsub.s32 0, %v1963
    %v1965 = vrot.slane %v1686, %v1964
    %v1966 = vlaneseq
    %v1967 = vshrl.u32 %v1966, 7
    %v1968 = vsub.s32 0, %v1967
    %v1969 = vrot.slane %v1700, %v1968
    %v1970 = vlaneseq
    %v1971 = vshrl.u32 %v1970, 7
    %v1972 = vsub.s32 0, %v1971
    %v1973 = vrot.slane %v1702, %v1972
    %v1974 = vlaneseq
    %v1975 = vshrl.u32 %v1974, 7
    %v1976 = vsub.s32 0, %v1975
    %v1977 = vrot.slane %v1704, %v1976
    %v1978 = vlaneseq
    %v1979 = vshrl.u32 %v1978, 7
    %v1980 = vsub.s32 0, %v1979
    %v1981 = vrot.slane %v1728, %v1980
    %v1982 = vlaneseq
    %v1983 = vshrl.u32 %v1982, 7
    %v1984 = vsub.s32 0, %v1983
    %v1985 = vrot.slane %v1742, %v1984
    %v1986 = vlaneseq
    %v1987 = vshrl.u32 %v1986, 7
    %v1988 = vsub.s32 0, %v1987
    %v1989 = vrot.slane %v1750, %v1988
    %v1990 = vlaneseq
    %v1991 = vshrl.u32 %v1990, 7
    %v1992 = vsub.s32 0, %v1991
    %v1993 = vrot.slane %v1752, %v1992
    %v1994 = vlaneseq
    %v1995 = vshrl.u32 %v1994, 7
    %v1996 = vsub.s32 0, %v1995
    %v1997 = vrot.slane %v1735, %v1996
    %v1998 = vlaneseq
    %v1999 = vshrl.u32 %v1998, 7
    %v2000 = vsub.s32 0, %v1999
    %v2001 = vrot.slane %v1749, %v2000
    %v2002 = vlaneseq
    %v2003 = vshrl.u32 %v2002, 7
    %v2004 = vsub.s32 0, %v2003
    %v2005 = vrot.slane %v1751, %v2004
    %v2006 = vlaneseq
    %v2007 = vshrl.u32 %v2006, 7
    %v2008 = vsub.s32 0, %v2007
    %v2009 = vrot.slane %v1753, %v2008
    %v2074 = vmul.f32 %v1757, %v528
    %v2075 = vmul.f32 %v1757, %v532
    %v2076 = vmul.f32 %v1761, %v539
    %v2077 = vmul.f32 %v1761, %v543
    %v2078 = vmul.f32 %v1765, %v550
    %v2079 = vmul.f32 %v1765, %v554
    %v2080 = vmul.f32 %v1769, %v561
    %v2081 = vmul.f32 %v1769, %v565
    %v2082 = vmul.f32 %v1773, %v572
    %v2083 = vmul.f32 %v1773, %v576
    %v2084 = vmul.f32 %v1777, %v583
    %v2085 = vmul.f32 %v1777, %v587
    %v2086 = vmul.f32 %v1781, %v594
    %v2087 = vmul.f32 %v1781, %v598
    %v2088 = vmul.f32 %v1785, %v605
    %v2089 = vmul.f32 %v1785, %v609
    %v2090 = vmul.f32 %v1789, %v616
    %v2091 = vmul.f32 %v1789, %v620
    %v2092 = vmul.f32 %v1793, %v627
    %v2093 = vmul.f32 %v1793, %v631
    %v2094 = vmul.f32 %v1797, %v638
    %v2095 = vmul.f32 %v1797, %v642
    %v2096 = vmul.f32 %v1801, %v649
    %v2097 = vmul.f32 %v1801, %v653
    %v2098 = vmul.f32 %v1805, %v660
    %v2099 = vmul.f32 %v1805, %v664
    %v2100 = vmul.f32 %v1809, %v671
    %v2101 = vmul.f32 %v1809, %v675
    %v2102 = vmul.f32 %v1813, %v682
    %v2103 = vmul.f32 %v1813, %v686
    %v2104 = vmul.f32 %v1817, %v693
    %v2105 = vmul.f32 %v1817, %v697
    %v2106 = vmul.f32 %v1821, %v704
    %v2107 = vmul.f32 %v1821, %v708
    %v2108 = vmul.f32 %v1825, %v715
    %v2109 = vmul.f32 %v1825, %v719
    %v2110 = vmul.f32 %v1829, %v726
    %v2111 = vmul.f32 %v1829, %v730
    %v2112 = vmul.f32 %v1833, %v737
    %v2113 = vmul.f32 %v1833, %v741
    %v2114 = vmul.f32 %v1837, %v748
    %v2115 = vmul.f32 %v1837, %v752
    %v2116 = vmul.f32 %v1841, %v759
    %v2117 = vmul.f32 %v1841, %v763
    %v2118 = vmul.f32 %v1845, %v770
    %v2119 = vmul.f32 %v1845, %v774
    %v2120 = vmul.f32 %v1849, %v781
    %v2121 = vmul.f32 %v1849, %v785
    %v2122 = vmul.f32 %v1853, %v792
    %v2123 = vmul.f32 %v1853, %v796
    %v2124 = vmul.f32 %v1857, %v803
    %v2125 = vmul.f32 %v1857, %v807
    %v2126 = vmul.f32 %v1861, %v814
    %v2127 = vmul.f32 %v1861, %v818
    %v2128 = vmul.f32 %v1865, %v825
    %v2129 = vmul.f32 %v1865, %v829
    %v2130 = vmul.f32 %v1869, %v836
    %v2131 = vmul.f32 %v1869, %v840
    %v2132 = vmul.f32 %v1873, %v847
    %v2133 = vmul.f32 %v1873, %v851
    %v2134 = vmul.f32 %v1877, %v858
    %v2135 = vmul.f32 %v1877, %v862
    %v2136 = vmul.f32 %v1881, %v869
    %v2137 = vmul.f32 %v1881, %v873
    %v2138 = vmul.f32 %v1885, %v880
    %v2139 = vmul.f32 %v1885, %v884
    %v2140 = vmul.f32 %v1889, %v891
    %v2141 = vmul.f32 %v1889, %v895
    %v2142 = vmul.f32 %v1893, %v902
    %v2143 = vmul.f32 %v1893, %v906
    %v2144 = vmul.f32 %v1897, %v913
    %v2145 = vmul.f32 %v1897, %v917
    %v2146 = vmul.f32 %v1901, %v924
    %v2147 = vmul.f32 %v1901, %v928
    %v2148 = vmul.f32 %v1905, %v935
    %v2149 = vmul.f32 %v1905, %v939
    %v2150 = vmul.f32 %v1909, %v946
    %v2151 = vmul.f32 %v1909, %v950
    %v2152 = vmul.f32 %v1913, %v957
    %v2153 = vmul.f32 %v1913, %v961
    %v2154 = vmul.f32 %v1917, %v968
    %v2155 = vmul.f32 %v1917, %v972
    %v2156 = vmul.f32 %v1921, %v979
    %v2157 = vmul.f32 %v1921, %v983
    %v2158 = vmul.f32 %v1925, %v990
    %v2159 = vmul.f32 %v1925, %v994
    %v2160 = vmul.f32 %v1929, %v1001
    %v2161 = vmul.f32 %v1929, %v1005
    %v2162 = vmul.f32 %v1933, %v1012
    %v2163 = vmul.f32 %v1933, %v1016
    %v2164 = vmul.f32 %v1937, %v1023
    %v2165 = vmul.f32 %v1937, %v1027
    %v2166 = vmul.f32 %v1941, %v1034
    %v2167 = vmul.f32 %v1941, %v1038
    %v2168 = vmul.f32 %v1945, %v1045
    %v2169 = vmul.f32 %v1945, %v1049
    %v2170 = vmul.f32 %v1949, %v1056
    %v2171 = vmul.f32 %v1949, %v1060
    %v2172 = vmul.f32 %v1953, %v1067
    %v2173 = vmul.f32 %v1953, %v1071
    %v2174 = vmul.f32 %v1957, %v1078
    %v2175 = vmul.f32 %v1957, %v1082
    %v2176 = vmul.f32 %v1961, %v1089
    %v2177 = vmul.f32 %v1961, %v1093
    %v2178 = vmul.f32 %v1965, %v1100
    %v2179 = vmul.f32 %v1965, %v1104
    %v2180 = vmul.f32 %v1969, %v1111
    %v2181 = vmul.f32 %v1969, %v1115
    %v2182 = vmul.f32 %v1973, %v1122
    %v2183 = vmul.f32 %v1973, %v1126
    %v2184 = vmul.f32 %v1977, %v1133
    %v2185 = vmul.f32 %v1977, %v1137
    %v2186 = vmul.f32 %v1981, %v1144
    %v2187 = vmul.f32 %v1981, %v1148
    %v2188 = vmul.f32 %v1985, %v1155
    %v2189 = vmul.f32 %v1985, %v1159
    %v2190 = vmul.f32 %v1989, %v1166
    %v2191 = vmul.f32 %v1989, %v1170
    %v2192 = vmul.f32 %v1993, %v1177
    %v2193 = vmul.f32 %v1993, %v1181
    %v2194 = vmul.f32 %v1997, %v1188
    %v2195 = vmul.f32 %v1997, %v1192
    %v2196 = vmul.f32 %v2001, %v1199
    %v2197 = vmul.f32 %v2001, %v1203
    %v2198 = vmul.f32 %v2005, %v1210
    %v2199 = vmul.f32 %v2005, %v1214
    %v2200 = vmul.f32 %v2009, %v1221
    %v2201 = vmul.f32 %v2009, %v1225
    %v2202 = vsub.f32 1.0, %v2074
    %v2203 = vsub.f32 1.0, %v2075
    %v2204 = vsub.f32 1.0, %v2076
    %v2205 = vsub.f32 1.0, %v2077
    %v2206 = vsub.f32 1.0, %v2078
    %v2207 = vsub.f32 1.0, %v2079
    %v2208 = vsub.f32 1.0, %v2080
    %v2209 = vsub.f32 1.0, %v2081
    %v2210 = vsub.f32 1.0, %v2082
    %v2211 = vsub.f32 1.0, %v2083
    %v2212 = vsub.f32 1.0, %v2084
    %v2213 = vsub.f32 1.0, %v2085
    %v2214 = vsub.f32 1.0, %v2086
    %v2215 = vsub.f32 1.0, %v2087
    %v2216 = vsub.f32 1.0, %v2088
    %v2217 = vsub.f32 1.0, %v2089
    %v2218 = vsub.f32 1.0, %v2090
    %v2219 = vsub.f32 1.0, %v2091
    %v2220 = vsub.f32 1.0, %v2092
    %v2221 = vsub.f32 1.0, %v2093
    %v2222 = vsub.f32 1.0, %v2094
    %v2223 = vsub.f32 1.0, %v2095
    %v2224 = vsub.f32 1.0, %v2096
    %v2225 = vsub.f32 1.0, %v2097
    %v2226 = vsub.f32 1.0, %v2098
    %v2227 = vsub.f32 1.0, %v2099
    %v2228 = vsub.f32 1.0, %v2100
    %v2229 = vsub.f32 1.0, %v2101
    %v2230 = vsub.f32 1.0, %v2102
    %v2231 = vsub.f32 1.0, %v2103
    %v2232 = vsub.f32 1.0, %v2104
    %v2233 = vsub.f32 1.0, %v2105
    %v2234 = vsub.f32 1.0, %v2106
    %v2235 = vsub.f32 1.0, %v2107
    %v2236 = vsub.f32 1.0, %v2108
    %v2237 = vsub.f32 1.0, %v2109
    %v2238 = vsub.f32 1.0, %v2110
    %v2239 = vsub.f32 1.0, %v2111
    %v2240 = vsub.f32 1.0, %v2112
    %v2241 = vsub.f32 1.0, %v2113
    %v2242 = vsub.f32 1.0, %v2114
    %v2243 = vsub.f32 1.0, %v2115
    %v2244 = vsub.f32 1.0, %v2116
    %v2245 = vsub.f32 1.0, %v2117
    %v2246 = vsub.f32 1.0, %v2118
    %v2247 = vsub.f32 1.0, %v2119
    %v2248 = vsub.f32 1.0, %v2120
    %v2249 = vsub.f32 1.0, %v2121
    %v2250 = vsub.f32 1.0, %v2122
    %v2251 = vsub.f32 1.0, %v2123
    %v2252 = vsub.f32 1.0, %v2124
    %v2253 = vsub.f32 1.0, %v2125
    %v2254 = vsub.f32 1.0, %v2126
    %v2255 = vsub.f32 1.0, %v2127
    %v2256 = vsub.f32 1.0, %v2128
    %v2257 = vsub.f32 1.0, %v2129
    %v2258 = vsub.f32 1.0, %v2130
    %v2259 = vsub.f32 1.0, %v2131
    %v2260 = vsub.f32 1.0, %v2132
    %v2261 = vsub.f32 1.0, %v2133
    %v2262 = vsub.f32 1.0, %v2134
    %v2263 = vsub.f32 1.0, %v2135
    %v2264 = vsub.f32 1.0, %v2136
    %v2265 = vsub.f32 1.0, %v2137
    %v2266 = vsub.f32 1.0, %v2138
    %v2267 = vsub.f32 1.0, %v2139
    %v2268 = vsub.f32 1.0, %v2140
    %v2269 = vsub.f32 1.0, %v2141
    %v2270 = vsub.f32 1.0, %v2142
    %v2271 = vsub.f32 1.0, %v2143
    %v2272 = vsub.f32 1.0, %v2144
    %v2273 = vsub.f32 1.0, %v2145
    %v2274 = vsub.f32 1.0, %v2146
    %v2275 = vsub.f32 1.0, %v2147
    %v2276 = vsub.f32 1.0, %v2148
    %v2277 = vsub.f32 1.0, %v2149
    %v2278 = vsub.f32 1.0, %v2150
    %v2279 = vsub.f32 1.0, %v2151
    %v2280 = vsub.f32 1.0, %v2152
    %v2281 = vsub.f32 1.0, %v2153
    %v2282 = vsub.f32 1.0, %v2154
    %v2283 = vsub.f32 1.0, %v2155
    %v2284 = vsub.f32 1.0, %v2156
    %v2285 = vsub.f32 1.0, %v2157
    %v2286 = vsub.f32 1.0, %v2158
    %v2287 = vsub.f32 1.0, %v2159
    %v2288 = vsub.f32 1.0, %v2160
    %v2289 = vsub.f32 1.0, %v2161
    %v2290 = vsub.f32 1.0, %v2162
    %v2291 = vsub.f32 1.0, %v2163
    %v2292 = vsub.f32 1.0, %v2164
    %v2293 = vsub.f32 1.0, %v2165
    %v2294 = vsub.f32 1.0, %v2166
    %v2295 = vsub.f32 1.0, %v2167
    %v2296 = vsub.f32 1.0, %v2168
    %v2297 = vsub.f32 1.0, %v2169
    %v2298 = vsub.f32 1.0, %v2170
    %v2299 = vsub.f32 1.0, %v2171
    %v2300 = vsub.f32 1.0, %v2172
    %v2301 = vsub.f32 1.0, %v2173
    %v2302 = vsub.f32 1.0, %v2174
    %v2303 = vsub.f32 1.0, %v2175
    %v2304 = vsub.f32 1.0, %v2176
    %v2305 = vsub.f32 1.0, %v2177
    %v2306 = vsub.f32 1.0, %v2178
    %v2307 = vsub.f32 1.0, %v2179
    %v2308 = vsub.f32 1.0, %v2180
    %v2309 = vsub.f32 1.0, %v2181
    %v2310 = vsub.f32 1.0, %v2182
    %v2311 = vsub.f32 1.0, %v2183
    %v2312 = vsub.f32 1.0, %v2184
    %v2313 = vsub.f32 1.0, %v2185
    %v2314 = vsub.f32 1.0, %v2186
    %v2315 = vsub.f32 1.0, %v2187
    %v2316 = vsub.f32 1.0, %v2188
    %v2317 = vsub.f32 1.0, %v2189
    %v2318 = vsub.f32 1.0, %v2190
    %v2319 = vsub.f32 1.0, %v2191
    %v2320 = vsub.f32 1.0, %v2192
    %v2321 = vsub.f32 1.0, %v2193
    %v2322 = vsub.f32 1.0, %v2194
    %v2323 = vsub.f32 1.0, %v2195
    %v2324 = vsub.f32 1.0, %v2196
    %v2325 = vsub.f32 1.0, %v2197
    %v2326 = vsub.f32 1.0, %v2198
    %v2327 = vsub.f32 1.0, %v2199
    %v2328 = vsub.f32 1.0, %v2200
    %v2329 = vsub.f32 1.0, %v2201
    %2330 = vst [vmem:[#allocation3] sm:$0xff] %v2202
    %2331 = vst [vmem:[#allocation3 + $0x8] sm:$0xff] %v2203
    %2332 = vst [vmem:[#allocation3 + $0x10] sm:$0xff] %v2204
    %2333 = vst [vmem:[#allocation3 + $0x18] sm:$0xff] %v2205
    %2334 = vst [vmem:[#allocation3 + $0x20] sm:$0xff] %v2206
    %2335 = vst [vmem:[#allocation3 + $0x28] sm:$0xff] %v2207
    %2336 = vst [vmem:[#allocation3 + $0x30] sm:$0xff] %v2208
    %2337 = vst [vmem:[#allocation3 + $0x38] sm:$0xff] %v2209
    %2338 = vst [vmem:[#allocation3 + $0x40] sm:$0xff] %v2210
    %2339 = vst [vmem:[#allocation3 + $0x48] sm:$0xff] %v2211
    %2340 = vst [vmem:[#allocation3 + $0x50] sm:$0xff] %v2212
    %2341 = vst [vmem:[#allocation3 + $0x58] sm:$0xff] %v2213
    %2342 = vst [vmem:[#allocation3 + $0x60] sm:$0xff] %v2214
    %2343 = vst [vmem:[#allocation3 + $0x68] sm:$0xff] %v2215
    %2344 = vst [vmem:[#allocation3 + $0x70] sm:$0xff] %v2216
    %2345 = vst [vmem:[#allocation3 + $0x78] sm:$0xff] %v2217
    %2346 = vst [vmem:[#allocation3 + $0x80] sm:$0xff] %v2218
    %2347 = vst [vmem:[#allocation3 + $0x88] sm:$0xff] %v2219
    %2348 = vst [vmem:[#allocation3 + $0x90] sm:$0xff] %v2220
    %2349 = vst [vmem:[#allocation3 + $0x98] sm:$0xff] %v2221
    %2350 = vst [vmem:[#allocation3 + $0xa0] sm:$0xff] %v2222
    %2351 = vst [vmem:[#allocation3 + $0xa8] sm:$0xff] %v2223
    %2352 = vst [vmem:[#allocation3 + $0xb0] sm:$0xff] %v2224
    %2353 = vst [vmem:[#allocation3 + $0xb8] sm:$0xff] %v2225
    %2354 = vst [vmem:[#allocation3 + $0xc0] sm:$0xff] %v2226
    %2355 = vst [vmem:[#allocation3 + $0xc8] sm:$0xff] %v2227
    %2356 = vst [vmem:[#allocation3 + $0xd0] sm:$0xff] %v2228
    %2357 = vst [vmem:[#allocation3 + $0xd8] sm:$0xff] %v2229
    %2358 = vst [vmem:[#allocation3 + $0xe0] sm:$0xff] %v2230
    %2359 = vst [vmem:[#allocation3 + $0xe8] sm:$0xff] %v2231
    %2360 = vst [vmem:[#allocation3 + $0xf0] sm:$0xff] %v2232
    %2361 = vst [vmem:[#allocation3 + $0xf8] sm:$0xff] %v2233
    %2362 = vst [vmem:[#allocation3 + $0x100] sm:$0xff] %v2234
    %2363 = vst [vmem:[#allocation3 + $0x108] sm:$0xff] %v2235
    %2364 = vst [vmem:[#allocation3 + $0x110] sm:$0xff] %v2236
    %2365 = vst [vmem:[#allocation3 + $0x118] sm:$0xff] %v2237
    %2366 = vst [vmem:[#allocation3 + $0x120] sm:$0xff] %v2238
    %2367 = vst [vmem:[#allocation3 + $0x128] sm:$0xff] %v2239
    %2368 = vst [vmem:[#allocation3 + $0x130] sm:$0xff] %v2240
    %2369 = vst [vmem:[#allocation3 + $0x138] sm:$0xff] %v2241
    %2370 = vst [vmem:[#allocation3 + $0x140] sm:$0xff] %v2242
    %2371 = vst [vmem:[#allocation3 + $0x148] sm:$0xff] %v2243
    %2372 = vst [vmem:[#allocation3 + $0x150] sm:$0xff] %v2244
    %2373 = vst [vmem:[#allocation3 + $0x158] sm:$0xff] %v2245
    %2374 = vst [vmem:[#allocation3 + $0x160] sm:$0xff] %v2246
    %2375 = vst [vmem:[#allocation3 + $0x168] sm:$0xff] %v2247
    %2376 = vst [vmem:[#allocation3 + $0x170] sm:$0xff] %v2248
    %2377 = vst [vmem:[#allocation3 + $0x178] sm:$0xff] %v2249
    %2378 = vst [vmem:[#allocation3 + $0x180] sm:$0xff] %v2250
    %2379 = vst [vmem:[#allocation3 + $0x188] sm:$0xff] %v2251
    %2380 = vst [vmem:[#allocation3 + $0x190] sm:$0xff] %v2252
    %2381 = vst [vmem:[#allocation3 + $0x198] sm:$0xff] %v2253
    %2382 = vst [vmem:[#allocation3 + $0x1a0] sm:$0xff] %v2254
    %2383 = vst [vmem:[#allocation3 + $0x1a8] sm:$0xff] %v2255
    %2384 = vst [vmem:[#allocation3 + $0x1b0] sm:$0xff] %v2256
    %2385 = vst [vmem:[#allocation3 + $0x1b8] sm:$0xff] %v2257
    %2386 = vst [vmem:[#allocation3 + $0x1c0] sm:$0xff] %v2258
    %2387 = vst [vmem:[#allocation3 + $0x1c8] sm:$0xff] %v2259
    %2388 = vst [vmem:[#allocation3 + $0x1d0] sm:$0xff] %v2260
    %2389 = vst [vmem:[#allocation3 + $0x1d8] sm:$0xff] %v2261
    %2390 = vst [vmem:[#allocation3 + $0x1e0] sm:$0xff] %v2262
    %2391 = vst [vmem:[#allocation3 + $0x1e8] sm:$0xff] %v2263
    %2392 = vst [vmem:[#allocation3 + $0x1f0] sm:$0xff] %v2264
    %2393 = vst [vmem:[#allocation3 + $0x1f8] sm:$0xff] %v2265
    %2394 = vst [vmem:[#allocation3 + $0x200] sm:$0xff] %v2266
    %2395 = vst [vmem:[#allocation3 + $0x208] sm:$0xff] %v2267
    %2396 = vst [vmem:[#allocation3 + $0x210] sm:$0xff] %v2268
    %2397 = vst [vmem:[#allocation3 + $0x218] sm:$0xff] %v2269
    %2398 = vst [vmem:[#allocation3 + $0x220] sm:$0xff] %v2270
    %2399 = vst [vmem:[#allocation3 + $0x228] sm:$0xff] %v2271
    %2400 = vst [vmem:[#allocation3 + $0x230] sm:$0xff] %v2272
    %2401 = vst [vmem:[#allocation3 + $0x238] sm:$0xff] %v2273
    %2402 = vst [vmem:[#allocation3 + $0x240] sm:$0xff] %v2274
    %2403 = vst [vmem:[#allocation3 + $0x248] sm:$0xff] %v2275
    %2404 = vst [vmem:[#allocation3 + $0x250] sm:$0xff] %v2276
    %2405 = vst [vmem:[#allocation3 + $0x258] sm:$0xff] %v2277
    %2406 = vst [vmem:[#allocation3 + $0x260] sm:$0xff] %v2278
    %2407 = vst [vmem:[#allocation3 + $0x268] sm:$0xff] %v2279
    %2408 = vst [vmem:[#allocation3 + $0x270] sm:$0xff] %v2280
    %2409 = vst [vmem:[#allocation3 + $0x278] sm:$0xff] %v2281
    %2410 = vst [vmem:[#allocation3 + $0x280] sm:$0xff] %v2282
    %2411 = vst [vmem:[#allocation3 + $0x288] sm:$0xff] %v2283
    %2412 = vst [vmem:[#allocation3 + $0x290] sm:$0xff] %v2284
    %2413 = vst [vmem:[#allocation3 + $0x298] sm:$0xff] %v2285
    %2414 = vst [vmem:[#allocation3 + $0x2a0] sm:$0xff] %v2286
    %2415 = vst [vmem:[#allocation3 + $0x2a8] sm:$0xff] %v2287
    %2416 = vst [vmem:[#allocation3 + $0x2b0] sm:$0xff] %v2288
    %2417 = vst [vmem:[#allocation3 + $0x2b8] sm:$0xff] %v2289
    %2418 = vst [vmem:[#allocation3 + $0x2c0] sm:$0xff] %v2290
    %2419 = vst [vmem:[#allocation3 + $0x2c8] sm:$0xff] %v2291
    %2420 = vst [vmem:[#allocation3 + $0x2d0] sm:$0xff] %v2292
    %2421 = vst [vmem:[#allocation3 + $0x2d8] sm:$0xff] %v2293
    %2422 = vst [vmem:[#allocation3 + $0x2e0] sm:$0xff] %v2294
    %2423 = vst [vmem:[#allocation3 + $0x2e8] sm:$0xff] %v2295
    %2424 = vst [vmem:[#allocation3 + $0x2f0] sm:$0xff] %v2296
    %2425 = vst [vmem:[#allocation3 + $0x2f8] sm:$0xff] %v2297
    %2426 = vst [vmem:[#allocation3 + $0x300] sm:$0xff] %v2298
    %2427 = vst [vmem:[#allocation3 + $0x308] sm:$0xff] %v2299
    %2428 = vst [vmem:[#allocation3 + $0x310] sm:$0xff] %v2300
    %2429 = vst [vmem:[#allocation3 + $0x318] sm:$0xff] %v2301
    %2430 = vst [vmem:[#allocation3 + $0x320] sm:$0xff] %v2302
    %2431 = vst [vmem:[#allocation3 + $0x328] sm:$0xff] %v2303
    %2432 = vst [vmem:[#allocation3 + $0x330] sm:$0xff] %v2304
    %2433 = vst [vmem:[#allocation3 + $0x338] sm:$0xff] %v2305
    %2434 = vst [vmem:[#allocation3 + $0x340] sm:$0xff] %v2306
    %2435 = vst [vmem:[#allocation3 + $0x348] sm:$0xff] %v2307
    %2436 = vst [vmem:[#allocation3 + $0x350] sm:$0xff] %v2308
    %2437 = vst [vmem:[#allocation3 + $0x358] sm:$0xff] %v2309
    %2438 = vst [vmem:[#allocation3 + $0x360] sm:$0xff] %v2310
    %2439 = vst [vmem:[#allocation3 + $0x368] sm:$0xff] %v2311
    %2440 = vst [vmem:[#allocation3 + $0x370] sm:$0xff] %v2312
    %2441 = vst [vmem:[#allocation3 + $0x378] sm:$0xff] %v2313
    %2442 = vst [vmem:[#allocation3 + $0x380] sm:$0xff] %v2314
    %2443 = vst [vmem:[#allocation3 + $0x388] sm:$0xff] %v2315
    %2444 = vst [vmem:[#allocation3 + $0x390] sm:$0xff] %v2316
    %2445 = vst [vmem:[#allocation3 + $0x398] sm:$0xff] %v2317
    %2446 = vst [vmem:[#allocation3 + $0x3a0] sm:$0xff] %v2318
    %2447 = vst [vmem:[#allocation3 + $0x3a8] sm:$0xff] %v2319
    %2448 = vst [vmem:[#allocation3 + $0x3b0] sm:$0xff] %v2320
    %2449 = vst [vmem:[#allocation3 + $0x3b8] sm:$0xff] %v2321
    %2450 = vst [vmem:[#allocation3 + $0x3c0] sm:$0xff] %v2322
    %2451 = vst [vmem:[#allocation3 + $0x3c8] sm:$0xff] %v2323
    %2452 = vst [vmem:[#allocation3 + $0x3d0] sm:$0xff] %v2324
    %2453 = vst [vmem:[#allocation3 + $0x3d8] sm:$0xff] %v2325
    %2454 = vst [vmem:[#allocation3 + $0x3e0] sm:$0xff] %v2326
    %2455 = vst [vmem:[#allocation3 + $0x3e8] sm:$0xff] %v2327
    %2456 = vst [vmem:[#allocation3 + $0x3f0] sm:$0xff] %v2328
    %2457 = vst [vmem:[#allocation3 + $0x3f8] sm:$0xff] %v2329
    %v2466 = vcombine.high %v514, %v514
    %v2468 = vunpack.c.l.s4 1966171168
    %v2469 = vunpack.c.0.s8 %v2468
    %v2470 = vlaneseq
    %v2471 = vshrl.u32 %v2470, 7
    %v2472 = vsub.s32 %v2469, %v2471
    %v2473 = vrot.slane %v514, %v2472
    %v2475 = vunpack.c.l.s4 1966171168
    %v2476 = vunpack.c.0.s8 %v2475
    %v2477 = vlaneseq
    %v2478 = vshrl.u32 %v2477, 7
    %v2479 = vsub.s32 %v2476, %v2478
    %v2480 = vrot.slane %v2466, %v2479
    %v2481 = vcombine.high %v2473, %v2473
    %v2482 = vcombine.high %v2480, %v2480
    %v2484 = vunpack.c.l.s4 1966171168
    %v2485 = vunpack.c.0.s8 %v2484
    %v2486 = vlaneseq
    %v2487 = vshrl.u32 %v2486, 7
    %v2488 = vsub.s32 %v2485, %v2487
    %v2489 = vrot.slane %v2473, %v2488
    %v2491 = vunpack.c.l.s4 1966171168
    %v2492 = vunpack.c.0.s8 %v2491
    %v2493 = vlaneseq
    %v2494 = vshrl.u32 %v2493, 7
    %v2495 = vsub.s32 %v2492, %v2494
    %v2496 = vrot.slane %v2480, %v2495
    %v2498 = vunpack.c.l.s4 1966171168
    %v2499 = vunpack.c.0.s8 %v2498
    %v2500 = vlaneseq
    %v2501 = vshrl.u32 %v2500, 7
    %v2502 = vsub.s32 %v2499, %v2501
    %v2503 = vrot.slane %v2481, %v2502
    %v2505 = vunpack.c.l.s4 1966171168
    %v2506 = vunpack.c.0.s8 %v2505
    %v2507 = vlaneseq
    %v2508 = vshrl.u32 %v2507, 7
    %v2509 = vsub.s32 %v2506, %v2508
    %v2510 = vrot.slane %v2482, %v2509
    %v2511 = vcombine.high %v2489, %v2489
    %v2512 = vcombine.high %v2496, %v2496
    %v2513 = vcombine.high %v2503, %v2503
    %v2514 = vcombine.high %v2510, %v2510
    %v2515 = vcombine.high %v515, %v515
    %v2517 = vunpack.c.l.s4 1966171168
    %v2518 = vunpack.c.0.s8 %v2517
    %v2519 = vlaneseq
    %v2520 = vshrl.u32 %v2519, 7
    %v2521 = vsub.s32 %v2518, %v2520
    %v2522 = vrot.slane %v515, %v2521
    %v2524 = vunpack.c.l.s4 1966171168
    %v2525 = vunpack.c.0.s8 %v2524
    %v2526 = vlaneseq
    %v2527 = vshrl.u32 %v2526, 7
    %v2528 = vsub.s32 %v2525, %v2527
    %v2529 = vrot.slane %v2515, %v2528
    %v2530 = vcombine.high %v2522, %v2522
    %v2531 = vcombine.high %v2529, %v2529
    %v2533 = vunpack.c.l.s4 1966171168
    %v2534 = vunpack.c.0.s8 %v2533
    %v2535 = vlaneseq
    %v2536 = vshrl.u32 %v2535, 7
    %v2537 = vsub.s32 %v2534, %v2536
    %v2538 = vrot.slane %v2522, %v2537
    %v2540 = vunpack.c.l.s4 1966171168
    %v2541 = vunpack.c.0.s8 %v2540
    %v2542 = vlaneseq
    %v2543 = vshrl.u32 %v2542, 7
    %v2544 = vsub.s32 %v2541, %v2543
    %v2545 = vrot.slane %v2529, %v2544
    %v2547 = vunpack.c.l.s4 1966171168
    %v2548 = vunpack.c.0.s8 %v2547
    %v2549 = vlaneseq
    %v2550 = vshrl.u32 %v2549, 7
    %v2551 = vsub.s32 %v2548, %v2550
    %v2552 = vrot.slane %v2530, %v2551
    %v2554 = vunpack.c.l.s4 1966171168
    %v2555 = vunpack.c.0.s8 %v2554
    %v2556 = vlaneseq
    %v2557 = vshrl.u32 %v2556, 7
    %v2558 = vsub.s32 %v2555, %v2557
    %v2559 = vrot.slane %v2531, %v2558
    %v2560 = vcombine.high %v2538, %v2538
    %v2561 = vcombine.high %v2545, %v2545
    %v2562 = vcombine.high %v2552, %v2552
    %v2563 = vcombine.high %v2559, %v2559
    %v2564 = vcombine.high %v516, %v516
    %v2566 = vunpack.c.l.s4 1966171168
    %v2567 = vunpack.c.0.s8 %v2566
    %v2568 = vlaneseq
    %v2569 = vshrl.u32 %v2568, 7
    %v2570 = vsub.s32 %v2567, %v2569
    %v2571 = vrot.slane %v516, %v2570
    %v2573 = vunpack.c.l.s4 1966171168
    %v2574 = vunpack.c.0.s8 %v2573
    %v2575 = vlaneseq
    %v2576 = vshrl.u32 %v2575, 7
    %v2577 = vsub.s32 %v2574, %v2576
    %v2578 = vrot.slane %v2564, %v2577
    %v2579 = vcombine.high %v2571, %v2571
    %v2580 = vcombine.high %v2578, %v2578
    %v2582 = vunpack.c.l.s4 1966171168
    %v2583 = vunpack.c.0.s8 %v2582
    %v2584 = vlaneseq
    %v2585 = vshrl.u32 %v2584, 7
    %v2586 = vsub.s32 %v2583, %v2585
    %v2587 = vrot.slane %v2571, %v2586
    %v2589 = vunpack.c.l.s4 1966171168
    %v2590 = vunpack.c.0.s8 %v2589
    %v2591 = vlaneseq
    %v2592 = vshrl.u32 %v2591, 7
    %v2593 = vsub.s32 %v2590, %v2592
    %v2594 = vrot.slane %v2578, %v2593
    %v2596 = vunpack.c.l.s4 1966171168
    %v2597 = vunpack.c.0.s8 %v2596
    %v2598 = vlaneseq
    %v2599 = vshrl.u32 %v2598, 7
    %v2600 = vsub.s32 %v2597, %v2599
    %v2601 = vrot.slane %v2579, %v2600
    %v2603 = vunpack.c.l.s4 1966171168
    %v2604 = vunpack.c.0.s8 %v2603
    %v2605 = vlaneseq
    %v2606 = vshrl.u32 %v2605, 7
    %v2607 = vsub.s32 %v2604, %v2606
    %v2608 = vrot.slane %v2580, %v2607
    %v2609 = vcombine.high %v2587, %v2587
    %v2610 = vcombine.high %v2594, %v2594
    %v2611 = vcombine.high %v2601, %v2601
    %v2612 = vcombine.high %v2608, %v2608
    %v2613 = vcombine.high %v517, %v517
    %v2615 = vunpack.c.l.s4 1966171168
    %v2616 = vunpack.c.0.s8 %v2615
    %v2617 = vlaneseq
    %v2618 = vshrl.u32 %v2617, 7
    %v2619 = vsub.s32 %v2616, %v2618
    %v2620 = vrot.slane %v517, %v2619
    %v2622 = vunpack.c.l.s4 1966171168
    %v2623 = vunpack.c.0.s8 %v2622
    %v2624 = vlaneseq
    %v2625 = vshrl.u32 %v2624, 7
    %v2626 = vsub.s32 %v2623, %v2625
    %v2627 = vrot.slane %v2613, %v2626
    %v2628 = vcombine.high %v2620, %v2620
    %v2629 = vcombine.high %v2627, %v2627
    %v2631 = vunpack.c.l.s4 1966171168
    %v2632 = vunpack.c.0.s8 %v2631
    %v2633 = vlaneseq
    %v2634 = vshrl.u32 %v2633, 7
    %v2635 = vsub.s32 %v2632, %v2634
    %v2636 = vrot.slane %v2620, %v2635
    %v2638 = vunpack.c.l.s4 1966171168
    %v2639 = vunpack.c.0.s8 %v2638
    %v2640 = vlaneseq
    %v2641 = vshrl.u32 %v2640, 7
    %v2642 = vsub.s32 %v2639, %v2641
    %v2643 = vrot.slane %v2627, %v2642
    %v2645 = vunpack.c.l.s4 1966171168
    %v2646 = vunpack.c.0.s8 %v2645
    %v2647 = vlaneseq
    %v2648 = vshrl.u32 %v2647, 7
    %v2649 = vsub.s32 %v2646, %v2648
    %v2650 = vrot.slane %v2628, %v2649
    %v2652 = vunpack.c.l.s4 1966171168
    %v2653 = vunpack.c.0.s8 %v2652
    %v2654 = vlaneseq
    %v2655 = vshrl.u32 %v2654, 7
    %v2656 = vsub.s32 %v2653, %v2655
    %v2657 = vrot.slane %v2629, %v2656
    %v2658 = vcombine.high %v2636, %v2636
    %v2659 = vcombine.high %v2643, %v2643
    %v2660 = vcombine.high %v2650, %v2650
    %v2661 = vcombine.high %v2657, %v2657
    %v2662 = vcombine.high %v518, %v518
    %v2664 = vunpack.c.l.s4 1966171168
    %v2665 = vunpack.c.0.s8 %v2664
    %v2666 = vlaneseq
    %v2667 = vshrl.u32 %v2666, 7
    %v2668 = vsub.s32 %v2665, %v2667
    %v2669 = vrot.slane %v518, %v2668
    %v2671 = vunpack.c.l.s4 1966171168
    %v2672 = vunpack.c.0.s8 %v2671
    %v2673 = vlaneseq
    %v2674 = vshrl.u32 %v2673, 7
    %v2675 = vsub.s32 %v2672, %v2674
    %v2676 = vrot.slane %v2662, %v2675
    %v2677 = vcombine.high %v2669, %v2669
    %v2678 = vcombine.high %v2676, %v2676
    %v2680 = vunpack.c.l.s4 1966171168
    %v2681 = vunpack.c.0.s8 %v2680
    %v2682 = vlaneseq
    %v2683 = vshrl.u32 %v2682, 7
    %v2684 = vsub.s32 %v2681, %v2683
    %v2685 = vrot.slane %v2669, %v2684
    %v2687 = vunpack.c.l.s4 1966171168
    %v2688 = vunpack.c.0.s8 %v2687
    %v2689 = vlaneseq
    %v2690 = vshrl.u32 %v2689, 7
    %v2691 = vsub.s32 %v2688, %v2690
    %v2692 = vrot.slane %v2676, %v2691
    %v2694 = vunpack.c.l.s4 1966171168
    %v2695 = vunpack.c.0.s8 %v2694
    %v2696 = vlaneseq
    %v2697 = vshrl.u32 %v2696, 7
    %v2698 = vsub.s32 %v2695, %v2697
    %v2699 = vrot.slane %v2677, %v2698
    %v2701 = vunpack.c.l.s4 1966171168
    %v2702 = vunpack.c.0.s8 %v2701
    %v2703 = vlaneseq
    %v2704 = vshrl.u32 %v2703, 7
    %v2705 = vsub.s32 %v2702, %v2704
    %v2706 = vrot.slane %v2678, %v2705
    %v2707 = vcombine.high %v2685, %v2685
    %v2708 = vcombine.high %v2692, %v2692
    %v2709 = vcombine.high %v2699, %v2699
    %v2710 = vcombine.high %v2706, %v2706
    %v2711 = vcombine.high %v519, %v519
    %v2713 = vunpack.c.l.s4 1966171168
    %v2714 = vunpack.c.0.s8 %v2713
    %v2715 = vlaneseq
    %v2716 = vshrl.u32 %v2715, 7
    %v2717 = vsub.s32 %v2714, %v2716
    %v2718 = vrot.slane %v519, %v2717
    %v2720 = vunpack.c.l.s4 1966171168
    %v2721 = vunpack.c.0.s8 %v2720
    %v2722 = vlaneseq
    %v2723 = vshrl.u32 %v2722, 7
    %v2724 = vsub.s32 %v2721, %v2723
    %v2725 = vrot.slane %v2711, %v2724
    %v2726 = vcombine.high %v2718, %v2718
    %v2727 = vcombine.high %v2725, %v2725
    %v2729 = vunpack.c.l.s4 1966171168
    %v2730 = vunpack.c.0.s8 %v2729
    %v2731 = vlaneseq
    %v2732 = vshrl.u32 %v2731, 7
    %v2733 = vsub.s32 %v2730, %v2732
    %v2734 = vrot.slane %v2718, %v2733
    %v2736 = vunpack.c.l.s4 1966171168
    %v2737 = vunpack.c.0.s8 %v2736
    %v2738 = vlaneseq
    %v2739 = vshrl.u32 %v2738, 7
    %v2740 = vsub.s32 %v2737, %v2739
    %v2741 = vrot.slane %v2725, %v2740
    %v2743 = vunpack.c.l.s4 1966171168
    %v2744 = vunpack.c.0.s8 %v2743
    %v2745 = vlaneseq
    %v2746 = vshrl.u32 %v2745, 7
    %v2747 = vsub.s32 %v2744, %v2746
    %v2748 = vrot.slane %v2726, %v2747
    %v2750 = vunpack.c.l.s4 1966171168
    %v2751 = vunpack.c.0.s8 %v2750
    %v2752 = vlaneseq
    %v2753 = vshrl.u32 %v2752, 7
    %v2754 = vsub.s32 %v2751, %v2753
    %v2755 = vrot.slane %v2727, %v2754
    %v2756 = vcombine.high %v2734, %v2734
    %v2757 = vcombine.high %v2741, %v2741
    %v2758 = vcombine.high %v2748, %v2748
    %v2759 = vcombine.high %v2755, %v2755
    %v2760 = vcombine.high %v520, %v520
    %v2762 = vunpack.c.l.s4 1966171168
    %v2763 = vunpack.c.0.s8 %v2762
    %v2764 = vlaneseq
    %v2765 = vshrl.u32 %v2764, 7
    %v2766 = vsub.s32 %v2763, %v2765
    %v2767 = vrot.slane %v520, %v2766
    %v2769 = vunpack.c.l.s4 1966171168
    %v2770 = vunpack.c.0.s8 %v2769
    %v2771 = vlaneseq
    %v2772 = vshrl.u32 %v2771, 7
    %v2773 = vsub.s32 %v2770, %v2772
    %v2774 = vrot.slane %v2760, %v2773
    %v2775 = vcombine.high %v2767, %v2767
    %v2776 = vcombine.high %v2774, %v2774
    %v2778 = vunpack.c.l.s4 1966171168
    %v2779 = vunpack.c.0.s8 %v2778
    %v2780 = vlaneseq
    %v2781 = vshrl.u32 %v2780, 7
    %v2782 = vsub.s32 %v2779, %v2781
    %v2783 = vrot.slane %v2767, %v2782
    %v2785 = vunpack.c.l.s4 1966171168
    %v2786 = vunpack.c.0.s8 %v2785
    %v2787 = vlaneseq
    %v2788 = vshrl.u32 %v2787, 7
    %v2789 = vsub.s32 %v2786, %v2788
    %v2790 = vrot.slane %v2774, %v2789
    %v2792 = vunpack.c.l.s4 1966171168
    %v2793 = vunpack.c.0.s8 %v2792
    %v2794 = vlaneseq
    %v2795 = vshrl.u32 %v2794, 7
    %v2796 = vsub.s32 %v2793, %v2795
    %v2797 = vrot.slane %v2775, %v2796
    %v2799 = vunpack.c.l.s4 1966171168
    %v2800 = vunpack.c.0.s8 %v2799
    %v2801 = vlaneseq
    %v2802 = vshrl.u32 %v2801, 7
    %v2803 = vsub.s32 %v2800, %v2802
    %v2804 = vrot.slane %v2776, %v2803
    %v2805 = vcombine.high %v2783, %v2783
    %v2806 = vcombine.high %v2790, %v2790
    %v2807 = vcombine.high %v2797, %v2797
    %v2808 = vcombine.high %v2804, %v2804
    %v2809 = vcombine.high %v521, %v521
    %v2811 = vunpack.c.l.s4 1966171168
    %v2812 = vunpack.c.0.s8 %v2811
    %v2813 = vlaneseq
    %v2814 = vshrl.u32 %v2813, 7
    %v2815 = vsub.s32 %v2812, %v2814
    %v2816 = vrot.slane %v521, %v2815
    %v2818 = vunpack.c.l.s4 1966171168
    %v2819 = vunpack.c.0.s8 %v2818
    %v2820 = vlaneseq
    %v2821 = vshrl.u32 %v2820, 7
    %v2822 = vsub.s32 %v2819, %v2821
    %v2823 = vrot.slane %v2809, %v2822
    %v2824 = vcombine.high %v2816, %v2816
    %v2825 = vcombine.high %v2823, %v2823
    %v2827 = vunpack.c.l.s4 1966171168
    %v2828 = vunpack.c.0.s8 %v2827
    %v2829 = vlaneseq
    %v2830 = vshrl.u32 %v2829, 7
    %v2831 = vsub.s32 %v2828, %v2830
    %v2832 = vrot.slane %v2816, %v2831
    %v2834 = vunpack.c.l.s4 1966171168
    %v2835 = vunpack.c.0.s8 %v2834
    %v2836 = vlaneseq
    %v2837 = vshrl.u32 %v2836, 7
    %v2838 = vsub.s32 %v2835, %v2837
    %v2839 = vrot.slane %v2823, %v2838
    %v2841 = vunpack.c.l.s4 1966171168
    %v2842 = vunpack.c.0.s8 %v2841
    %v2843 = vlaneseq
    %v2844 = vshrl.u32 %v2843, 7
    %v2845 = vsub.s32 %v2842, %v2844
    %v2846 = vrot.slane %v2824, %v2845
    %v2848 = vunpack.c.l.s4 1966171168
    %v2849 = vunpack.c.0.s8 %v2848
    %v2850 = vlaneseq
    %v2851 = vshrl.u32 %v2850, 7
    %v2852 = vsub.s32 %v2849, %v2851
    %v2853 = vrot.slane %v2825, %v2852
    %v2854 = vcombine.high %v2832, %v2832
    %v2855 = vcombine.high %v2839, %v2839
    %v2856 = vcombine.high %v2846, %v2846
    %v2857 = vcombine.high %v2853, %v2853
    %v2858 = vlaneseq
    %v2859 = vshrl.u32 %v2858, 7
    %v2860 = vsub.s32 0, %v2859
    %v2861 = vrot.slane %v2489, %v2860
    %v2862 = vlaneseq
    %v2863 = vshrl.u32 %v2862, 7
    %v2864 = vsub.s32 0, %v2863
    %v2865 = vrot.slane %v2503, %v2864
    %v2866 = vlaneseq
    %v2867 = vshrl.u32 %v2866, 7
    %v2868 = vsub.s32 0, %v2867
    %v2869 = vrot.slane %v2511, %v2868
    %v2870 = vlaneseq
    %v2871 = vshrl.u32 %v2870, 7
    %v2872 = vsub.s32 0, %v2871
    %v2873 = vrot.slane %v2513, %v2872
    %v2874 = vlaneseq
    %v2875 = vshrl.u32 %v2874, 7
    %v2876 = vsub.s32 0, %v2875
    %v2877 = vrot.slane %v2496, %v2876
    %v2878 = vlaneseq
    %v2879 = vshrl.u32 %v2878, 7
    %v2880 = vsub.s32 0, %v2879
    %v2881 = vrot.slane %v2510, %v2880
    %v2882 = vlaneseq
    %v2883 = vshrl.u32 %v2882, 7
    %v2884 = vsub.s32 0, %v2883
    %v2885 = vrot.slane %v2512, %v2884
    %v2886 = vlaneseq
    %v2887 = vshrl.u32 %v2886, 7
    %v2888 = vsub.s32 0, %v2887
    %v2889 = vrot.slane %v2514, %v2888
    %v2890 = vlaneseq
    %v2891 = vshrl.u32 %v2890, 7
    %v2892 = vsub.s32 0, %v2891
    %v2893 = vrot.slane %v2538, %v2892
    %v2894 = vlaneseq
    %v2895 = vshrl.u32 %v2894, 7
    %v2896 = vsub.s32 0, %v2895
    %v2897 = vrot.slane %v2552, %v2896
    %v2898 = vlaneseq
    %v2899 = vshrl.u32 %v2898, 7
    %v2900 = vsub.s32 0, %v2899
    %v2901 = vrot.slane %v2560, %v2900
    %v2902 = vlaneseq
    %v2903 = vshrl.u32 %v2902, 7
    %v2904 = vsub.s32 0, %v2903
    %v2905 = vrot.slane %v2562, %v2904
    %v2906 = vlaneseq
    %v2907 = vshrl.u32 %v2906, 7
    %v2908 = vsub.s32 0, %v2907
    %v2909 = vrot.slane %v2545, %v2908
    %v2910 = vlaneseq
    %v2911 = vshrl.u32 %v2910, 7
    %v2912 = vsub.s32 0, %v2911
    %v2913 = vrot.slane %v2559, %v2912
    %v2914 = vlaneseq
    %v2915 = vshrl.u32 %v2914, 7
    %v2916 = vsub.s32 0, %v2915
    %v2917 = vrot.slane %v2561, %v2916
    %v2918 = vlaneseq
    %v2919 = vshrl.u32 %v2918, 7
    %v2920 = vsub.s32 0, %v2919
    %v2921 = vrot.slane %v2563, %v2920
    %v2922 = vlaneseq
    %v2923 = vshrl.u32 %v2922, 7
    %v2924 = vsub.s32 0, %v2923
    %v2925 = vrot.slane %v2587, %v2924
    %v2926 = vlaneseq
    %v2927 = vshrl.u32 %v2926, 7
    %v2928 = vsub.s32 0, %v2927
    %v2929 = vrot.slane %v2601, %v2928
    %v2930 = vlaneseq
    %v2931 = vshrl.u32 %v2930, 7
    %v2932 = vsub.s32 0, %v2931
    %v2933 = vrot.slane %v2609, %v2932
    %v2934 = vlaneseq
    %v2935 = vshrl.u32 %v2934, 7
    %v2936 = vsub.s32 0, %v2935
    %v2937 = vrot.slane %v2611, %v2936
    %v2938 = vlaneseq
    %v2939 = vshrl.u32 %v2938, 7
    %v2940 = vsub.s32 0, %v2939
    %v2941 = vrot.slane %v2594, %v2940
    %v2942 = vlaneseq
    %v2943 = vshrl.u32 %v2942, 7
    %v2944 = vsub.s32 0, %v2943
    %v2945 = vrot.slane %v2608, %v2944
    %v2946 = vlaneseq
    %v2947 = vshrl.u32 %v2946, 7
    %v2948 = vsub.s32 0, %v2947
    %v2949 = vrot.slane %v2610, %v2948
    %v2950 = vlaneseq
    %v2951 = vshrl.u32 %v2950, 7
    %v2952 = vsub.s32 0, %v2951
    %v2953 = vrot.slane %v2612, %v2952
    %v2954 = vlaneseq
    %v2955 = vshrl.u32 %v2954, 7
    %v2956 = vsub.s32 0, %v2955
    %v2957 = vrot.slane %v2636, %v2956
    %v2958 = vlaneseq
    %v2959 = vshrl.u32 %v2958, 7
    %v2960 = vsub.s32 0, %v2959
    %v2961 = vrot.slane %v2650, %v2960
    %v2962 = vlaneseq
    %v2963 = vshrl.u32 %v2962, 7
    %v2964 = vsub.s32 0, %v2963
    %v2965 = vrot.slane %v2658, %v2964
    %v2966 = vlaneseq
    %v2967 = vshrl.u32 %v2966, 7
    %v2968 = vsub.s32 0, %v2967
    %v2969 = vrot.slane %v2660, %v2968
    %v2970 = vlaneseq
    %v2971 = vshrl.u32 %v2970, 7
    %v2972 = vsub.s32 0, %v2971
    %v2973 = vrot.slane %v2643, %v2972
    %v2974 = vlaneseq
    %v2975 = vshrl.u32 %v2974, 7
    %v2976 = vsub.s32 0, %v2975
    %v2977 = vrot.slane %v2657, %v2976
    %v2978 = vlaneseq
    %v2979 = vshrl.u32 %v2978, 7
    %v2980 = vsub.s32 0, %v2979
    %v2981 = vrot.slane %v2659, %v2980
    %v2982 = vlaneseq
    %v2983 = vshrl.u32 %v2982, 7
    %v2984 = vsub.s32 0, %v2983
    %v2985 = vrot.slane %v2661, %v2984
    %v2986 = vlaneseq
    %v2987 = vshrl.u32 %v2986, 7
    %v2988 = vsub.s32 0, %v2987
    %v2989 = vrot.slane %v2685, %v2988
    %v2990 = vlaneseq
    %v2991 = vshrl.u32 %v2990, 7
    %v2992 = vsub.s32 0, %v2991
    %v2993 = vrot.slane %v2699, %v2992
    %v2994 = vlaneseq
    %v2995 = vshrl.u32 %v2994, 7
    %v2996 = vsub.s32 0, %v2995
    %v2997 = vrot.slane %v2707, %v2996
    %v2998 = vlaneseq
    %v2999 = vshrl.u32 %v2998, 7
    %v3000 = vsub.s32 0, %v2999
    %v3001 = vrot.slane %v2709, %v3000
    %v3002 = vlaneseq
    %v3003 = vshrl.u32 %v3002, 7
    %v3004 = vsub.s32 0, %v3003
    %v3005 = vrot.slane %v2692, %v3004
    %v3006 = vlaneseq
    %v3007 = vshrl.u32 %v3006, 7
    %v3008 = vsub.s32 0, %v3007
    %v3009 = vrot.slane %v2706, %v3008
    %v3010 = vlaneseq
    %v3011 = vshrl.u32 %v3010, 7
    %v3012 = vsub.s32 0, %v3011
    %v3013 = vrot.slane %v2708, %v3012
    %v3014 = vlaneseq
    %v3015 = vshrl.u32 %v3014, 7
    %v3016 = vsub.s32 0, %v3015
    %v3017 = vrot.slane %v2710, %v3016
    %v3018 = vlaneseq
    %v3019 = vshrl.u32 %v3018, 7
    %v3020 = vsub.s32 0, %v3019
    %v3021 = vrot.slane %v2734, %v3020
    %v3022 = vlaneseq
    %v3023 = vshrl.u32 %v3022, 7
    %v3024 = vsub.s32 0, %v3023
    %v3025 = vrot.slane %v2748, %v3024
    %v3026 = vlaneseq
    %v3027 = vshrl.u32 %v3026, 7
    %v3028 = vsub.s32 0, %v3027
    %v3029 = vrot.slane %v2756, %v3028
    %v3030 = vlaneseq
    %v3031 = vshrl.u32 %v3030, 7
    %v3032 = vsub.s32 0, %v3031
    %v3033 = vrot.slane %v2758, %v3032
    %v3034 = vlaneseq
    %v3035 = vshrl.u32 %v3034, 7
    %v3036 = vsub.s32 0, %v3035
    %v3037 = vrot.slane %v2741, %v3036
    %v3038 = vlaneseq
    %v3039 = vshrl.u32 %v3038, 7
    %v3040 = vsub.s32 0, %v3039
    %v3041 = vrot.slane %v2755, %v3040
    %v3042 = vlaneseq
    %v3043 = vshrl.u32 %v3042, 7
    %v3044 = vsub.s32 0, %v3043
    %v3045 = vrot.slane %v2757, %v3044
    %v3046 = vlaneseq
    %v3047 = vshrl.u32 %v3046, 7
    %v3048 = vsub.s32 0, %v3047
    %v3049 = vrot.slane %v2759, %v3048
    %v3050 = vlaneseq
    %v3051 = vshrl.u32 %v3050, 7
    %v3052 = vsub.s32 0, %v3051
    %v3053 = vrot.slane %v2783, %v3052
    %v3054 = vlaneseq
    %v3055 = vshrl.u32 %v3054, 7
    %v3056 = vsub.s32 0, %v3055
    %v3057 = vrot.slane %v2797, %v3056
    %v3058 = vlaneseq
    %v3059 = vshrl.u32 %v3058, 7
    %v3060 = vsub.s32 0, %v3059
    %v3061 = vrot.slane %v2805, %v3060
    %v3062 = vlaneseq
    %v3063 = vshrl.u32 %v3062, 7
    %v3064 = vsub.s32 0, %v3063
    %v3065 = vrot.slane %v2807, %v3064
    %v3066 = vlaneseq
    %v3067 = vshrl.u32 %v3066, 7
    %v3068 = vsub.s32 0, %v3067
    %v3069 = vrot.slane %v2790, %v3068
    %v3070 = vlaneseq
    %v3071 = vshrl.u32 %v3070, 7
    %v3072 = vsub.s32 0, %v3071
    %v3073 = vrot.slane %v2804, %v3072
    %v3074 = vlaneseq
    %v3075 = vshrl.u32 %v3074, 7
    %v3076 = vsub.s32 0, %v3075
    %v3077 = vrot.slane %v2806, %v3076
    %v3078 = vlaneseq
    %v3079 = vshrl.u32 %v3078, 7
    %v3080 = vsub.s32 0, %v3079
    %v3081 = vrot.slane %v2808, %v3080
    %v3082 = vlaneseq
    %v3083 = vshrl.u32 %v3082, 7
    %v3084 = vsub.s32 0, %v3083
    %v3085 = vrot.slane %v2832, %v3084
    %v3086 = vlaneseq
    %v3087 = vshrl.u32 %v3086, 7
    %v3088 = vsub.s32 0, %v3087
    %v3089 = vrot.slane %v2846, %v3088
    %v3090 = vlaneseq
    %v3091 = vshrl.u32 %v3090, 7
    %v3092 = vsub.s32 0, %v3091
    %v3093 = vrot.slane %v2854, %v3092
    %v3094 = vlaneseq
    %v3095 = vshrl.u32 %v3094, 7
    %v3096 = vsub.s32 0, %v3095
    %v3097 = vrot.slane %v2856, %v3096
    %v3098 = vlaneseq
    %v3099 = vshrl.u32 %v3098, 7
    %v3100 = vsub.s32 0, %v3099
    %v3101 = vrot.slane %v2839, %v3100
    %v3102 = vlaneseq
    %v3103 = vshrl.u32 %v3102, 7
    %v3104 = vsub.s32 0, %v3103
    %v3105 = vrot.slane %v2853, %v3104
    %v3106 = vlaneseq
    %v3107 = vshrl.u32 %v3106, 7
    %v3108 = vsub.s32 0, %v3107
    %v3109 = vrot.slane %v2855, %v3108
    %v3110 = vlaneseq
    %v3111 = vshrl.u32 %v3110, 7
    %v3112 = vsub.s32 0, %v3111
    %v3113 = vrot.slane %v2857, %v3112
    %v3178 = vmul.f32 %v2861, %v528
    %v3179 = vmul.f32 %v2861, %v532
    %v3180 = vmul.f32 %v2865, %v539
    %v3181 = vmul.f32 %v2865, %v543
    %v3182 = vmul.f32 %v2869, %v550
    %v3183 = vmul.f32 %v2869, %v554
    %v3184 = vmul.f32 %v2873, %v561
    %v3185 = vmul.f32 %v2873, %v565
    %v3186 = vmul.f32 %v2877, %v572
    %v3187 = vmul.f32 %v2877, %v576
    %v3188 = vmul.f32 %v2881, %v583
    %v3189 = vmul.f32 %v2881, %v587
    %v3190 = vmul.f32 %v2885, %v594
    %v3191 = vmul.f32 %v2885, %v598
    %v3192 = vmul.f32 %v2889, %v605
    %v3193 = vmul.f32 %v2889, %v609
    %v3194 = vmul.f32 %v2893, %v616
    %v3195 = vmul.f32 %v2893, %v620
    %v3196 = vmul.f32 %v2897, %v627
    %v3197 = vmul.f32 %v2897, %v631
    %v3198 = vmul.f32 %v2901, %v638
    %v3199 = vmul.f32 %v2901, %v642
    %v3200 = vmul.f32 %v2905, %v649
    %v3201 = vmul.f32 %v2905, %v653
    %v3202 = vmul.f32 %v2909, %v660
    %v3203 = vmul.f32 %v2909, %v664
    %v3204 = vmul.f32 %v2913, %v671
    %v3205 = vmul.f32 %v2913, %v675
    %v3206 = vmul.f32 %v2917, %v682
    %v3207 = vmul.f32 %v2917, %v686
    %v3208 = vmul.f32 %v2921, %v693
    %v3209 = vmul.f32 %v2921, %v697
    %v3210 = vmul.f32 %v2925, %v704
    %v3211 = vmul.f32 %v2925, %v708
    %v3212 = vmul.f32 %v2929, %v715
    %v3213 = vmul.f32 %v2929, %v719
    %v3214 = vmul.f32 %v2933, %v726
    %v3215 = vmul.f32 %v2933, %v730
    %v3216 = vmul.f32 %v2937, %v737
    %v3217 = vmul.f32 %v2937, %v741
    %v3218 = vmul.f32 %v2941, %v748
    %v3219 = vmul.f32 %v2941, %v752
    %v3220 = vmul.f32 %v2945, %v759
    %v3221 = vmul.f32 %v2945, %v763
    %v3222 = vmul.f32 %v2949, %v770
    %v3223 = vmul.f32 %v2949, %v774
    %v3224 = vmul.f32 %v2953, %v781
    %v3225 = vmul.f32 %v2953, %v785
    %v3226 = vmul.f32 %v2957, %v792
    %v3227 = vmul.f32 %v2957, %v796
    %v3228 = vmul.f32 %v2961, %v803
    %v3229 = vmul.f32 %v2961, %v807
    %v3230 = vmul.f32 %v2965, %v814
    %v3231 = vmul.f32 %v2965, %v818
    %v3232 = vmul.f32 %v2969, %v825
    %v3233 = vmul.f32 %v2969, %v829
    %v3234 = vmul.f32 %v2973, %v836
    %v3235 = vmul.f32 %v2973, %v840
    %v3236 = vmul.f32 %v2977, %v847
    %v3237 = vmul.f32 %v2977, %v851
    %v3238 = vmul.f32 %v2981, %v858
    %v3239 = vmul.f32 %v2981, %v862
    %v3240 = vmul.f32 %v2985, %v869
    %v3241 = vmul.f32 %v2985, %v873
    %v3242 = vmul.f32 %v2989, %v880
    %v3243 = vmul.f32 %v2989, %v884
    %v3244 = vmul.f32 %v2993, %v891
    %v3245 = vmul.f32 %v2993, %v895
    %v3246 = vmul.f32 %v2997, %v902
    %v3247 = vmul.f32 %v2997, %v906
    %v3248 = vmul.f32 %v3001, %v913
    %v3249 = vmul.f32 %v3001, %v917
    %v3250 = vmul.f32 %v3005, %v924
    %v3251 = vmul.f32 %v3005, %v928
    %v3252 = vmul.f32 %v3009, %v935
    %v3253 = vmul.f32 %v3009, %v939
    %v3254 = vmul.f32 %v3013, %v946
    %v3255 = vmul.f32 %v3013, %v950
    %v3256 = vmul.f32 %v3017, %v957
    %v3257 = vmul.f32 %v3017, %v961
    %v3258 = vmul.f32 %v3021, %v968
    %v3259 = vmul.f32 %v3021, %v972
    %v3260 = vmul.f32 %v3025, %v979
    %v3261 = vmul.f32 %v3025, %v983
    %v3262 = vmul.f32 %v3029, %v990
    %v3263 = vmul.f32 %v3029, %v994
    %v3264 = vmul.f32 %v3033, %v1001
    %v3265 = vmul.f32 %v3033, %v1005
    %v3266 = vmul.f32 %v3037, %v1012
    %v3267 = vmul.f32 %v3037, %v1016
    %v3268 = vmul.f32 %v3041, %v1023
    %v3269 = vmul.f32 %v3041, %v1027
    %v3270 = vmul.f32 %v3045, %v1034
    %v3271 = vmul.f32 %v3045, %v1038
    %v3272 = vmul.f32 %v3049, %v1045
    %v3273 = vmul.f32 %v3049, %v1049
    %v3274 = vmul.f32 %v3053, %v1056
    %v3275 = vmul.f32 %v3053, %v1060
    %v3276 = vmul.f32 %v3057, %v1067
    %v3277 = vmul.f32 %v3057, %v1071
    %v3278 = vmul.f32 %v3061, %v1078
    %v3279 = vmul.f32 %v3061, %v1082
    %v3280 = vmul.f32 %v3065, %v1089
    %v3281 = vmul.f32 %v3065, %v1093
    %v3282 = vmul.f32 %v3069, %v1100
    %v3283 = vmul.f32 %v3069, %v1104
    %v3284 = vmul.f32 %v3073, %v1111
    %v3285 = vmul.f32 %v3073, %v1115
    %v3286 = vmul.f32 %v3077, %v1122
    %v3287 = vmul.f32 %v3077, %v1126
    %v3288 = vmul.f32 %v3081, %v1133
    %v3289 = vmul.f32 %v3081, %v1137
    %v3290 = vmul.f32 %v3085, %v1144
    %v3291 = vmul.f32 %v3085, %v1148
    %v3292 = vmul.f32 %v3089, %v1155
    %v3293 = vmul.f32 %v3089, %v1159
    %v3294 = vmul.f32 %v3093, %v1166
    %v3295 = vmul.f32 %v3093, %v1170
    %v3296 = vmul.f32 %v3097, %v1177
    %v3297 = vmul.f32 %v3097, %v1181
    %v3298 = vmul.f32 %v3101, %v1188
    %v3299 = vmul.f32 %v3101, %v1192
    %v3300 = vmul.f32 %v3105, %v1199
    %v3301 = vmul.f32 %v3105, %v1203
    %v3302 = vmul.f32 %v3109, %v1210
    %v3303 = vmul.f32 %v3109, %v1214
    %v3304 = vmul.f32 %v3113, %v1221
    %v3305 = vmul.f32 %v3113, %v1225
    %3306 = vst [vmem:[#allocation4] sm:$0xff] %v3178
    %3307 = vst [vmem:[#allocation4 + $0x8] sm:$0xff] %v3179
    %3308 = vst [vmem:[#allocation4 + $0x10] sm:$0xff] %v3180
    %3309 = vst [vmem:[#allocation4 + $0x18] sm:$0xff] %v3181
    %3310 = vst [vmem:[#allocation4 + $0x20] sm:$0xff] %v3182
    %3311 = vst [vmem:[#allocation4 + $0x28] sm:$0xff] %v3183
    %3312 = vst [vmem:[#allocation4 + $0x30] sm:$0xff] %v3184
    %3313 = vst [vmem:[#allocation4 + $0x38] sm:$0xff] %v3185
    %3314 = vst [vmem:[#allocation4 + $0x40] sm:$0xff] %v3186
    %3315 = vst [vmem:[#allocation4 + $0x48] sm:$0xff] %v3187
    %3316 = vst [vmem:[#allocation4 + $0x50] sm:$0xff] %v3188
    %3317 = vst [vmem:[#allocation4 + $0x58] sm:$0xff] %v3189
    %3318 = vst [vmem:[#allocation4 + $0x60] sm:$0xff] %v3190
    %3319 = vst [vmem:[#allocation4 + $0x68] sm:$0xff] %v3191
    %3320 = vst [vmem:[#allocation4 + $0x70] sm:$0xff] %v3192
    %3321 = vst [vmem:[#allocation4 + $0x78] sm:$0xff] %v3193
    %3322 = vst [vmem:[#allocation4 + $0x80] sm:$0xff] %v3194
    %3323 = vst [vmem:[#allocation4 + $0x88] sm:$0xff] %v3195
    %3324 = vst [vmem:[#allocation4 + $0x90] sm:$0xff] %v3196
    %3325 = vst [vmem:[#allocation4 + $0x98] sm:$0xff] %v3197
    %3326 = vst [vmem:[#allocation4 + $0xa0] sm:$0xff] %v3198
    %3327 = vst [vmem:[#allocation4 + $0xa8] sm:$0xff] %v3199
    %3328 = vst [vmem:[#allocation4 + $0xb0] sm:$0xff] %v3200
    %3329 = vst [vmem:[#allocation4 + $0xb8] sm:$0xff] %v3201
    %3330 = vst [vmem:[#allocation4 + $0xc0] sm:$0xff] %v3202
    %3331 = vst [vmem:[#allocation4 + $0xc8] sm:$0xff] %v3203
    %3332 = vst [vmem:[#allocation4 + $0xd0] sm:$0xff] %v3204
    %3333 = vst [vmem:[#allocation4 + $0xd8] sm:$0xff] %v3205
    %3334 = vst [vmem:[#allocation4 + $0xe0] sm:$0xff] %v3206
    %3335 = vst [vmem:[#allocation4 + $0xe8] sm:$0xff] %v3207
    %3336 = vst [vmem:[#allocation4 + $0xf0] sm:$0xff] %v3208
    %3337 = vst [vmem:[#allocation4 + $0xf8] sm:$0xff] %v3209
    %3338 = vst [vmem:[#allocation4 + $0x100] sm:$0xff] %v3210
    %3339 = vst [vmem:[#allocation4 + $0x108] sm:$0xff] %v3211
    %3340 = vst [vmem:[#allocation4 + $0x110] sm:$0xff] %v3212
    %3341 = vst [vmem:[#allocation4 + $0x118] sm:$0xff] %v3213
    %3342 = vst [vmem:[#allocation4 + $0x120] sm:$0xff] %v3214
    %3343 = vst [vmem:[#allocation4 + $0x128] sm:$0xff] %v3215
    %3344 = vst [vmem:[#allocation4 + $0x130] sm:$0xff] %v3216
    %3345 = vst [vmem:[#allocation4 + $0x138] sm:$0xff] %v3217
    %3346 = vst [vmem:[#allocation4 + $0x140] sm:$0xff] %v3218
    %3347 = vst [vmem:[#allocation4 + $0x148] sm:$0xff] %v3219
    %3348 = vst [vmem:[#allocation4 + $0x150] sm:$0xff] %v3220
    %3349 = vst [vmem:[#allocation4 + $0x158] sm:$0xff] %v3221
    %3350 = vst [vmem:[#allocation4 + $0x160] sm:$0xff] %v3222
    %3351 = vst [vmem:[#allocation4 + $0x168] sm:$0xff] %v3223
    %3352 = vst [vmem:[#allocation4 + $0x170] sm:$0xff] %v3224
    %3353 = vst [vmem:[#allocation4 + $0x178] sm:$0xff] %v3225
    %3354 = vst [vmem:[#allocation4 + $0x180] sm:$0xff] %v3226
    %3355 = vst [vmem:[#allocation4 + $0x188] sm:$0xff] %v3227
    %3356 = vst [vmem:[#allocation4 + $0x190] sm:$0xff] %v3228
    %3357 = vst [vmem:[#allocation4 + $0x198] sm:$0xff] %v3229
    %3358 = vst [vmem:[#allocation4 + $0x1a0] sm:$0xff] %v3230
    %3359 = vst [vmem:[#allocation4 + $0x1a8] sm:$0xff] %v3231
    %3360 = vst [vmem:[#allocation4 + $0x1b0] sm:$0xff] %v3232
    %3361 = vst [vmem:[#allocation4 + $0x1b8] sm:$0xff] %v3233
    %3362 = vst [vmem:[#allocation4 + $0x1c0] sm:$0xff] %v3234
    %3363 = vst [vmem:[#allocation4 + $0x1c8] sm:$0xff] %v3235
    %3364 = vst [vmem:[#allocation4 + $0x1d0] sm:$0xff] %v3236
    %3365 = vst [vmem:[#allocation4 + $0x1d8] sm:$0xff] %v3237
    %3366 = vst [vmem:[#allocation4 + $0x1e0] sm:$0xff] %v3238
    %3367 = vst [vmem:[#allocation4 + $0x1e8] sm:$0xff] %v3239
    %3368 = vst [vmem:[#allocation4 + $0x1f0] sm:$0xff] %v3240
    %3369 = vst [vmem:[#allocation4 + $0x1f8] sm:$0xff] %v3241
    %3370 = vst [vmem:[#allocation4 + $0x200] sm:$0xff] %v3242
    %3371 = vst [vmem:[#allocation4 + $0x208] sm:$0xff] %v3243
    %3372 = vst [vmem:[#allocation4 + $0x210] sm:$0xff] %v3244
    %3373 = vst [vmem:[#allocation4 + $0x218] sm:$0xff] %v3245
    %3374 = vst [vmem:[#allocation4 + $0x220] sm:$0xff] %v3246
    %3375 = vst [vmem:[#allocation4 + $0x228] sm:$0xff] %v3247
    %3376 = vst [vmem:[#allocation4 + $0x230] sm:$0xff] %v3248
    %3377 = vst [vmem:[#allocation4 + $0x238] sm:$0xff] %v3249
    %3378 = vst [vmem:[#allocation4 + $0x240] sm:$0xff] %v3250
    %3379 = vst [vmem:[#allocation4 + $0x248] sm:$0xff] %v3251
    %3380 = vst [vmem:[#allocation4 + $0x250] sm:$0xff] %v3252
    %3381 = vst [vmem:[#allocation4 + $0x258] sm:$0xff] %v3253
    %3382 = vst [vmem:[#allocation4 + $0x260] sm:$0xff] %v3254
    %3383 = vst [vmem:[#allocation4 + $0x268] sm:$0xff] %v3255
    %3384 = vst [vmem:[#allocation4 + $0x270] sm:$0xff] %v3256
    %3385 = vst [vmem:[#allocation4 + $0x278] sm:$0xff] %v3257
    %3386 = vst [vmem:[#allocation4 + $0x280] sm:$0xff] %v3258
    %3387 = vst [vmem:[#allocation4 + $0x288] sm:$0xff] %v3259
    %3388 = vst [vmem:[#allocation4 + $0x290] sm:$0xff] %v3260
    %3389 = vst [vmem:[#allocation4 + $0x298] sm:$0xff] %v3261
    %3390 = vst [vmem:[#allocation4 + $0x2a0] sm:$0xff] %v3262
    %3391 = vst [vmem:[#allocation4 + $0x2a8] sm:$0xff] %v3263
    %3392 = vst [vmem:[#allocation4 + $0x2b0] sm:$0xff] %v3264
    %3393 = vst [vmem:[#allocation4 + $0x2b8] sm:$0xff] %v3265
    %3394 = vst [vmem:[#allocation4 + $0x2c0] sm:$0xff] %v3266
    %3395 = vst [vmem:[#allocation4 + $0x2c8] sm:$0xff] %v3267
    %3396 = vst [vmem:[#allocation4 + $0x2d0] sm:$0xff] %v3268
    %3397 = vst [vmem:[#allocation4 + $0x2d8] sm:$0xff] %v3269
    %3398 = vst [vmem:[#allocation4 + $0x2e0] sm:$0xff] %v3270
    %3399 = vst [vmem:[#allocation4 + $0x2e8] sm:$0xff] %v3271
    %3400 = vst [vmem:[#allocation4 + $0x2f0] sm:$0xff] %v3272
    %3401 = vst [vmem:[#allocation4 + $0x2f8] sm:$0xff] %v3273
    %3402 = vst [vmem:[#allocation4 + $0x300] sm:$0xff] %v3274
    %3403 = vst [vmem:[#allocation4 + $0x308] sm:$0xff] %v3275
    %3404 = vst [vmem:[#allocation4 + $0x310] sm:$0xff] %v3276
    %3405 = vst [vmem:[#allocation4 + $0x318] sm:$0xff] %v3277
    %3406 = vst [vmem:[#allocation4 + $0x320] sm:$0xff] %v3278
    %3407 = vst [vmem:[#allocation4 + $0x328] sm:$0xff] %v3279
    %3408 = vst [vmem:[#allocation4 + $0x330] sm:$0xff] %v3280
    %3409 = vst [vmem:[#allocation4 + $0x338] sm:$0xff] %v3281
    %3410 = vst [vmem:[#allocation4 + $0x340] sm:$0xff] %v3282
    %3411 = vst [vmem:[#allocation4 + $0x348] sm:$0xff] %v3283
    %3412 = vst [vmem:[#allocation4 + $0x350] sm:$0xff] %v3284
    %3413 = vst [vmem:[#allocation4 + $0x358] sm:$0xff] %v3285
    %3414 = vst [vmem:[#allocation4 + $0x360] sm:$0xff] %v3286
    %3415 = vst [vmem:[#allocation4 + $0x368] sm:$0xff] %v3287
    %3416 = vst [vmem:[#allocation4 + $0x370] sm:$0xff] %v3288
    %3417 = vst [vmem:[#allocation4 + $0x378] sm:$0xff] %v3289
    %3418 = vst [vmem:[#allocation4 + $0x380] sm:$0xff] %v3290
    %3419 = vst [vmem:[#allocation4 + $0x388] sm:$0xff] %v3291
    %3420 = vst [vmem:[#allocation4 + $0x390] sm:$0xff] %v3292
    %3421 = vst [vmem:[#allocation4 + $0x398] sm:$0xff] %v3293
    %3422 = vst [vmem:[#allocation4 + $0x3a0] sm:$0xff] %v3294
    %3423 = vst [vmem:[#allocation4 + $0x3a8] sm:$0xff] %v3295
    %3424 = vst [vmem:[#allocation4 + $0x3b0] sm:$0xff] %v3296
    %3425 = vst [vmem:[#allocation4 + $0x3b8] sm:$0xff] %v3297
    %3426 = vst [vmem:[#allocation4 + $0x3c0] sm:$0xff] %v3298
    %3427 = vst [vmem:[#allocation4 + $0x3c8] sm:$0xff] %v3299
    %3428 = vst [vmem:[#allocation4 + $0x3d0] sm:$0xff] %v3300
    %3429 = vst [vmem:[#allocation4 + $0x3d8] sm:$0xff] %v3301
    %3430 = vst [vmem:[#allocation4 + $0x3e0] sm:$0xff] %v3302
    %3431 = vst [vmem:[#allocation4 + $0x3e8] sm:$0xff] %v3303
    %3432 = vst [vmem:[#allocation4 + $0x3f0] sm:$0xff] %v3304
    %3433 = vst [vmem:[#allocation4 + $0x3f8] sm:$0xff] %v3305
    %v3434 = vld [vmem:[#allocation10] sm:$0xff]
    %v3435 = vld [vmem:[#allocation10 + $0x8] sm:$0xff]
    %s3436 = smul.u32 0, 16
    %s3437 = scalar_lea.vmem [#allocation2], %s3436
    %v3438 = vld [vmem:[%s3437] sm:$0xff]
    %v3439 = vld [vmem:[%s3437 + $0x8] sm:$0xff]
    %v3440 = vld [vmem:[%s3437 + $0x10] sm:$0xff]
    %v3441 = vld [vmem:[%s3437 + $0x18] sm:$0xff]
    %v3442 = vld [vmem:[%s3437 + $0x20] sm:$0xff]
    %v3443 = vld [vmem:[%s3437 + $0x28] sm:$0xff]
    %v3444 = vld [vmem:[%s3437 + $0x30] sm:$0xff]
    %v3445 = vld [vmem:[%s3437 + $0x38] sm:$0xff]
    %v3446 = vld [vmem:[%s3437 + $0x40] sm:$0xff]
    %v3447 = vld [vmem:[%s3437 + $0x48] sm:$0xff]
    %v3448 = vld [vmem:[%s3437 + $0x50] sm:$0xff]
    %v3449 = vld [vmem:[%s3437 + $0x58] sm:$0xff]
    %v3450 = vld [vmem:[%s3437 + $0x60] sm:$0xff]
    %v3451 = vld [vmem:[%s3437 + $0x68] sm:$0xff]
    %v3452 = vld [vmem:[%s3437 + $0x70] sm:$0xff]
    %v3453 = vld [vmem:[%s3437 + $0x78] sm:$0xff]
    %v3454 = vmul.f32 %v3438, %v3434
    %v3455 = vmul.f32 %v3439, %v3435
    %v3456 = vmul.f32 %v3440, %v3434
    %v3457 = vmul.f32 %v3441, %v3435
    %v3458 = vmul.f32 %v3442, %v3434
    %v3459 = vmul.f32 %v3443, %v3435
    %v3460 = vmul.f32 %v3444, %v3434
    %v3461 = vmul.f32 %v3445, %v3435
    %v3462 = vmul.f32 %v3446, %v3434
    %v3463 = vmul.f32 %v3447, %v3435
    %v3464 = vmul.f32 %v3448, %v3434
    %v3465 = vmul.f32 %v3449, %v3435
    %v3466 = vmul.f32 %v3450, %v3434
    %v3467 = vmul.f32 %v3451, %v3435
    %v3468 = vmul.f32 %v3452, %v3434
    %v3469 = vmul.f32 %v3453, %v3435
    %v3470 = vadd.f32 %v3454, %v3455
    %v3471 = vrot.slane %v3470, 4
    %v3472 = vadd.f32 %v3470, %v3471
    %v3473 = vrot.slane %v3472, 2
    %v3474 = vadd.f32 %v3472, %v3473
    %v3475 = vrot.slane %v3474, 1
    %v3476 = vadd.f32 %v3474, %v3475
    %v3477 = vadd.f32 %v3456, %v3457
    %v3478 = vrot.slane %v3477, 4
    %v3479 = vadd.f32 %v3477, %v3478
    %v3480 = vrot.slane %v3479, 2
    %v3481 = vadd.f32 %v3479, %v3480
    %v3482 = vrot.slane %v3481, 1
    %v3483 = vadd.f32 %v3481, %v3482
    %v3484 = vadd.f32 %v3458, %v3459
    %v3485 = vrot.slane %v3484, 4
    %v3486 = vadd.f32 %v3484, %v3485
    %v3487 = vrot.slane %v3486, 2
    %v3488 = vadd.f32 %v3486, %v3487
    %v3489 = vrot.slane %v3488, 1
    %v3490 = vadd.f32 %v3488, %v3489
    %v3491 = vadd.f32 %v3460, %v3461
    %v3492 = vrot.slane %v3491, 4
    %v3493 = vadd.f32 %v3491, %v3492
    %v3494 = vrot.slane %v3493, 2
    %v3495 = vadd.f32 %v3493, %v3494
    %v3496 = vrot.slane %v3495, 1
    %v3497 = vadd.f32 %v3495, %v3496
    %v3498 = vadd.f32 %v3462, %v3463
    %v3499 = vrot.slane %v3498, 4
    %v3500 = vadd.f32 %v3498, %v3499
    %v3501 = vrot.slane %v3500, 2
    %v3502 = vadd.f32 %v3500, %v3501
    %v3503 = vrot.slane %v3502, 1
    %v3504 = vadd.f32 %v3502, %v3503
    %v3505 = vadd.f32 %v3464, %v3465
    %v3506 = vrot.slane %v3505, 4
    %v3507 = vadd.f32 %v3505, %v3506
    %v3508 = vrot.slane %v3507, 2
    %v3509 = vadd.f32 %v3507, %v3508
    %v3510 = vrot.slane %v3509, 1
    %v3511 = vadd.f32 %v3509, %v3510
    %v3512 = vadd.f32 %v3466, %v3467
    %v3513 = vrot.slane %v3512, 4
    %v3514 = vadd.f32 %v3512, %v3513
    %v3515 = vrot.slane %v3514, 2
    %v3516 = vadd.f32 %v3514, %v3515
    %v3517 = vrot.slane %v3516, 1
    %v3518 = vadd.f32 %v3516, %v3517
    %v3519 = vadd.f32 %v3468, %v3469
    %v3520 = vrot.slane %v3519, 4
    %v3521 = vadd.f32 %v3519, %v3520
    %v3522 = vrot.slane %v3521, 2
    %v3523 = vadd.f32 %v3521, %v3522
    %v3524 = vrot.slane %v3523, 1
    %v3525 = vadd.f32 %v3523, %v3524
    %vm3534 = vcmask 1041409
    %v3535 = vsel %vm3534, %v3483, %v3476
    %vm3536 = vcmask 1042434
    %v3537 = vsel %vm3536, %v3490, %v3535
    %vm3538 = vcmask 1043459
    %v3539 = vsel %vm3538, %v3497, %v3537
    %vm3540 = vcmask 1044484
    %v3541 = vsel %vm3540, %v3504, %v3539
    %vm3542 = vcmask 1045509
    %v3543 = vsel %vm3542, %v3511, %v3541
    %vm3544 = vcmask 1046534
    %v3545 = vsel %vm3544, %v3518, %v3543
    %vm3546 = vcmask 1047559
    %v3547 = vsel %vm3546, %v3525, %v3545
    %3549 = vst [vmem:[#allocation5] sm:$0xff] %v3547
    %s3550 = scalar_lea.vmem [#allocation3], %s3436
    %v3551 = vld [vmem:[%s3550] sm:$0xff]
    %v3552 = vld [vmem:[%s3550 + $0x8] sm:$0xff]
    %v3553 = vld [vmem:[%s3550 + $0x10] sm:$0xff]
    %v3554 = vld [vmem:[%s3550 + $0x18] sm:$0xff]
    %v3555 = vld [vmem:[%s3550 + $0x20] sm:$0xff]
    %v3556 = vld [vmem:[%s3550 + $0x28] sm:$0xff]
    %v3557 = vld [vmem:[%s3550 + $0x30] sm:$0xff]
    %v3558 = vld [vmem:[%s3550 + $0x38] sm:$0xff]
    %v3559 = vld [vmem:[%s3550 + $0x40] sm:$0xff]
    %v3560 = vld [vmem:[%s3550 + $0x48] sm:$0xff]
    %v3561 = vld [vmem:[%s3550 + $0x50] sm:$0xff]
    %v3562 = vld [vmem:[%s3550 + $0x58] sm:$0xff]
    %v3563 = vld [vmem:[%s3550 + $0x60] sm:$0xff]
    %v3564 = vld [vmem:[%s3550 + $0x68] sm:$0xff]
    %v3565 = vld [vmem:[%s3550 + $0x70] sm:$0xff]
    %v3566 = vld [vmem:[%s3550 + $0x78] sm:$0xff]
    %v3567 = vmul.f32 %v3434, %v3551
    %v3568 = vmul.f32 %v3435, %v3552
    %v3569 = vmul.f32 %v3434, %v3553
    %v3570 = vmul.f32 %v3435, %v3554
    %v3571 = vmul.f32 %v3434, %v3555
    %v3572 = vmul.f32 %v3435, %v3556
    %v3573 = vmul.f32 %v3434, %v3557
    %v3574 = vmul.f32 %v3435, %v3558
    %v3575 = vmul.f32 %v3434, %v3559
    %v3576 = vmul.f32 %v3435, %v3560
    %v3577 = vmul.f32 %v3434, %v3561
    %v3578 = vmul.f32 %v3435, %v3562
    %v3579 = vmul.f32 %v3434, %v3563
    %v3580 = vmul.f32 %v3435, %v3564
    %v3581 = vmul.f32 %v3434, %v3565
    %v3582 = vmul.f32 %v3435, %v3566
    %s3583 = scalar_lea.vmem [#allocation4], %s3436
    %v3584 = vld [vmem:[%s3583] sm:$0xff]
    %v3585 = vld [vmem:[%s3583 + $0x8] sm:$0xff]
    %v3586 = vld [vmem:[%s3583 + $0x10] sm:$0xff]
    %v3587 = vld [vmem:[%s3583 + $0x18] sm:$0xff]
    %v3588 = vld [vmem:[%s3583 + $0x20] sm:$0xff]
    %v3589 = vld [vmem:[%s3583 + $0x28] sm:$0xff]
    %v3590 = vld [vmem:[%s3583 + $0x30] sm:$0xff]
    %v3591 = vld [vmem:[%s3583 + $0x38] sm:$0xff]
    %v3592 = vld [vmem:[%s3583 + $0x40] sm:$0xff]
    %v3593 = vld [vmem:[%s3583 + $0x48] sm:$0xff]
    %v3594 = vld [vmem:[%s3583 + $0x50] sm:$0xff]
    %v3595 = vld [vmem:[%s3583 + $0x58] sm:$0xff]
    %v3596 = vld [vmem:[%s3583 + $0x60] sm:$0xff]
    %v3597 = vld [vmem:[%s3583 + $0x68] sm:$0xff]
    %v3598 = vld [vmem:[%s3583 + $0x70] sm:$0xff]
    %v3599 = vld [vmem:[%s3583 + $0x78] sm:$0xff]
    %v3600 = vadd.f32 %v3567, %v3584
    %v3601 = vadd.f32 %v3568, %v3585
    %v3602 = vadd.f32 %v3569, %v3586
    %v3603 = vadd.f32 %v3570, %v3587
    %v3604 = vadd.f32 %v3571, %v3588
    %v3605 = vadd.f32 %v3572, %v3589
    %v3606 = vadd.f32 %v3573, %v3590
    %v3607 = vadd.f32 %v3574, %v3591
    %v3608 = vadd.f32 %v3575, %v3592
    %v3609 = vadd.f32 %v3576, %v3593
    %v3610 = vadd.f32 %v3577, %v3594
    %v3611 = vadd.f32 %v3578, %v3595
    %v3612 = vadd.f32 %v3579, %v3596
    %v3613 = vadd.f32 %v3580, %v3597
    %v3614 = vadd.f32 %v3581, %v3598
    %v3615 = vadd.f32 %v3582, %v3599
    %s3616 = smul.u32 8, 16
    %s3617 = scalar_lea.vmem [#allocation2], %s3616
    %v3618 = vld [vmem:[%s3617] sm:$0xff]
    %v3619 = vld [vmem:[%s3617 + $0x8] sm:$0xff]
    %v3620 = vld [vmem:[%s3617 + $0x10] sm:$0xff]
    %v3621 = vld [vmem:[%s3617 + $0x18] sm:$0xff]
    %v3622 = vld [vmem:[%s3617 + $0x20] sm:$0xff]
    %v3623 = vld [vmem:[%s3617 + $0x28] sm:$0xff]
    %v3624 = vld [vmem:[%s3617 + $0x30] sm:$0xff]
    %v3625 = vld [vmem:[%s3617 + $0x38] sm:$0xff]
    %v3626 = vld [vmem:[%s3617 + $0x40] sm:$0xff]
    %v3627 = vld [vmem:[%s3617 + $0x48] sm:$0xff]
    %v3628 = vld [vmem:[%s3617 + $0x50] sm:$0xff]
    %v3629 = vld [vmem:[%s3617 + $0x58] sm:$0xff]
    %v3630 = vld [vmem:[%s3617 + $0x60] sm:$0xff]
    %v3631 = vld [vmem:[%s3617 + $0x68] sm:$0xff]
    %v3632 = vld [vmem:[%s3617 + $0x70] sm:$0xff]
    %v3633 = vld [vmem:[%s3617 + $0x78] sm:$0xff]
    %v3634 = vmul.f32 %v3618, %v3600
    %v3635 = vmul.f32 %v3619, %v3601
    %v3636 = vmul.f32 %v3620, %v3602
    %v3637 = vmul.f32 %v3621, %v3603
    %v3638 = vmul.f32 %v3622, %v3604
    %v3639 = vmul.f32 %v3623, %v3605
    %v3640 = vmul.f32 %v3624, %v3606
    %v3641 = vmul.f32 %v3625, %v3607
    %v3642 = vmul.f32 %v3626, %v3608
    %v3643 = vmul.f32 %v3627, %v3609
    %v3644 = vmul.f32 %v3628, %v3610
    %v3645 = vmul.f32 %v3629, %v3611
    %v3646 = vmul.f32 %v3630, %v3612
    %v3647 = vmul.f32 %v3631, %v3613
    %v3648 = vmul.f32 %v3632, %v3614
    %v3649 = vmul.f32 %v3633, %v3615
    %v3650 = vadd.f32 %v3634, %v3635
    %v3651 = vrot.slane %v3650, 4
    %v3652 = vadd.f32 %v3650, %v3651
    %v3653 = vrot.slane %v3652, 2
    %v3654 = vadd.f32 %v3652, %v3653
    %v3655 = vrot.slane %v3654, 1
    %v3656 = vadd.f32 %v3654, %v3655
    %v3657 = vadd.f32 %v3636, %v3637
    %v3658 = vrot.slane %v3657, 4
    %v3659 = vadd.f32 %v3657, %v3658
    %v3660 = vrot.slane %v3659, 2
    %v3661 = vadd.f32 %v3659, %v3660
    %v3662 = vrot.slane %v3661, 1
    %v3663 = vadd.f32 %v3661, %v3662
    %v3664 = vadd.f32 %v3638, %v3639
    %v3665 = vrot.slane %v3664, 4
    %v3666 = vadd.f32 %v3664, %v3665
    %v3667 = vrot.slane %v3666, 2
    %v3668 = vadd.f32 %v3666, %v3667
    %v3669 = vrot.slane %v3668, 1
    %v3670 = vadd.f32 %v3668, %v3669
    %v3671 = vadd.f32 %v3640, %v3641
    %v3672 = vrot.slane %v3671, 4
    %v3673 = vadd.f32 %v3671, %v3672
    %v3674 = vrot.slane %v3673, 2
    %v3675 = vadd.f32 %v3673, %v3674
    %v3676 = vrot.slane %v3675, 1
    %v3677 = vadd.f32 %v3675, %v3676
    %v3678 = vadd.f32 %v3642, %v3643
    %v3679 = vrot.slane %v3678, 4
    %v3680 = vadd.f32 %v3678, %v3679
    %v3681 = vrot.slane %v3680, 2
    %v3682 = vadd.f32 %v3680, %v3681
    %v3683 = vrot.slane %v3682, 1
    %v3684 = vadd.f32 %v3682, %v3683
    %v3685 = vadd.f32 %v3644, %v3645
    %v3686 = vrot.slane %v3685, 4
    %v3687 = vadd.f32 %v3685, %v3686
    %v3688 = vrot.slane %v3687, 2
    %v3689 = vadd.f32 %v3687, %v3688
    %v3690 = vrot.slane %v3689, 1
    %v3691 = vadd.f32 %v3689, %v3690
    %v3692 = vadd.f32 %v3646, %v3647
    %v3693 = vrot.slane %v3692, 4
    %v3694 = vadd.f32 %v3692, %v3693
    %v3695 = vrot.slane %v3694, 2
    %v3696 = vadd.f32 %v3694, %v3695
    %v3697 = vrot.slane %v3696, 1
    %v3698 = vadd.f32 %v3696, %v3697
    %v3699 = vadd.f32 %v3648, %v3649
    %v3700 = vrot.slane %v3699, 4
    %v3701 = vadd.f32 %v3699, %v3700
    %v3702 = vrot.slane %v3701, 2
    %v3703 = vadd.f32 %v3701, %v3702
    %v3704 = vrot.slane %v3703, 1
    %v3705 = vadd.f32 %v3703, %v3704
    %v3714 = vsel %vm3534, %v3663, %v3656
    %v3715 = vsel %vm3536, %v3670, %v3714
    %v3716 = vsel %vm3538, %v3677, %v3715
    %v3717 = vsel %vm3540, %v3684, %v3716
    %v3718 = vsel %vm3542, %v3691, %v3717
    %v3719 = vsel %vm3544, %v3698, %v3718
    %v3720 = vsel %vm3546, %v3705, %v3719
    %s3722 = scalar_lea.vmem [#allocation5], 8
    %3723 = vst [vmem:[%s3722] sm:$0xff] %v3720
    %s3724 = scalar_lea.vmem [#allocation3], %s3616
    %v3725 = vld [vmem:[%s3724] sm:$0xff]
    %v3726 = vld [vmem:[%s3724 + $0x8] sm:$0xff]
    %v3727 = vld [vmem:[%s3724 + $0x10] sm:$0xff]
    %v3728 = vld [vmem:[%s3724 + $0x18] sm:$0xff]
    %v3729 = vld [vmem:[%s3724 + $0x20] sm:$0xff]
    %v3730 = vld [vmem:[%s3724 + $0x28] sm:$0xff]
    %v3731 = vld [vmem:[%s3724 + $0x30] sm:$0xff]
    %v3732 = vld [vmem:[%s3724 + $0x38] sm:$0xff]
    %v3733 = vld [vmem:[%s3724 + $0x40] sm:$0xff]
    %v3734 = vld [vmem:[%s3724 + $0x48] sm:$0xff]
    %v3735 = vld [vmem:[%s3724 + $0x50] sm:$0xff]
    %v3736 = vld [vmem:[%s3724 + $0x58] sm:$0xff]
    %v3737 = vld [vmem:[%s3724 + $0x60] sm:$0xff]
    %v3738 = vld [vmem:[%s3724 + $0x68] sm:$0xff]
    %v3739 = vld [vmem:[%s3724 + $0x70] sm:$0xff]
    %v3740 = vld [vmem:[%s3724 + $0x78] sm:$0xff]
    %v3741 = vmul.f32 %v3600, %v3725
    %v3742 = vmul.f32 %v3601, %v3726
    %v3743 = vmul.f32 %v3602, %v3727
    %v3744 = vmul.f32 %v3603, %v3728
    %v3745 = vmul.f32 %v3604, %v3729
    %v3746 = vmul.f32 %v3605, %v3730
    %v3747 = vmul.f32 %v3606, %v3731
    %v3748 = vmul.f32 %v3607, %v3732
    %v3749 = vmul.f32 %v3608, %v3733
    %v3750 = vmul.f32 %v3609, %v3734
    %v3751 = vmul.f32 %v3610, %v3735
    %v3752 = vmul.f32 %v3611, %v3736
    %v3753 = vmul.f32 %v3612, %v3737
    %v3754 = vmul.f32 %v3613, %v3738
    %v3755 = vmul.f32 %v3614, %v3739
    %v3756 = vmul.f32 %v3615, %v3740
    %s3757 = scalar_lea.vmem [#allocation4], %s3616
    %v3758 = vld [vmem:[%s3757] sm:$0xff]
    %v3759 = vld [vmem:[%s3757 + $0x8] sm:$0xff]
    %v3760 = vld [vmem:[%s3757 + $0x10] sm:$0xff]
    %v3761 = vld [vmem:[%s3757 + $0x18] sm:$0xff]
    %v3762 = vld [vmem:[%s3757 + $0x20] sm:$0xff]
    %v3763 = vld [vmem:[%s3757 + $0x28] sm:$0xff]
    %v3764 = vld [vmem:[%s3757 + $0x30] sm:$0xff]
    %v3765 = vld [vmem:[%s3757 + $0x38] sm:$0xff]
    %v3766 = vld [vmem:[%s3757 + $0x40] sm:$0xff]
    %v3767 = vld [vmem:[%s3757 + $0x48] sm:$0xff]
    %v3768 = vld [vmem:[%s3757 + $0x50] sm:$0xff]
    %v3769 = vld [vmem:[%s3757 + $0x58] sm:$0xff]
    %v3770 = vld [vmem:[%s3757 + $0x60] sm:$0xff]
    %v3771 = vld [vmem:[%s3757 + $0x68] sm:$0xff]
    %v3772 = vld [vmem:[%s3757 + $0x70] sm:$0xff]
    %v3773 = vld [vmem:[%s3757 + $0x78] sm:$0xff]
    %v3774 = vadd.f32 %v3741, %v3758
    %v3775 = vadd.f32 %v3742, %v3759
    %v3776 = vadd.f32 %v3743, %v3760
    %v3777 = vadd.f32 %v3744, %v3761
    %v3778 = vadd.f32 %v3745, %v3762
    %v3779 = vadd.f32 %v3746, %v3763
    %v3780 = vadd.f32 %v3747, %v3764
    %v3781 = vadd.f32 %v3748, %v3765
    %v3782 = vadd.f32 %v3749, %v3766
    %v3783 = vadd.f32 %v3750, %v3767
    %v3784 = vadd.f32 %v3751, %v3768
    %v3785 = vadd.f32 %v3752, %v3769
    %v3786 = vadd.f32 %v3753, %v3770
    %v3787 = vadd.f32 %v3754, %v3771
    %v3788 = vadd.f32 %v3755, %v3772
    %v3789 = vadd.f32 %v3756, %v3773
    %s3790 = smul.u32 16, 16
    %s3791 = scalar_lea.vmem [#allocation2], %s3790
    %v3792 = vld [vmem:[%s3791] sm:$0xff]
    %v3793 = vld [vmem:[%s3791 + $0x8] sm:$0xff]
    %v3794 = vld [vmem:[%s3791 + $0x10] sm:$0xff]
    %v3795 = vld [vmem:[%s3791 + $0x18] sm:$0xff]
    %v3796 = vld [vmem:[%s3791 + $0x20] sm:$0xff]
    %v3797 = vld [vmem:[%s3791 + $0x28] sm:$0xff]
    %v3798 = vld [vmem:[%s3791 + $0x30] sm:$0xff]
    %v3799 = vld [vmem:[%s3791 + $0x38] sm:$0xff]
    %v3800 = vld [vmem:[%s3791 + $0x40] sm:$0xff]
    %v3801 = vld [vmem:[%s3791 + $0x48] sm:$0xff]
    %v3802 = vld [vmem:[%s3791 + $0x50] sm:$0xff]
    %v3803 = vld [vmem:[%s3791 + $0x58] sm:$0xff]
    %v3804 = vld [vmem:[%s3791 + $0x60] sm:$0xff]
    %v3805 = vld [vmem:[%s3791 + $0x68] sm:$0xff]
    %v3806 = vld [vmem:[%s3791 + $0x70] sm:$0xff]
    %v3807 = vld [vmem:[%s3791 + $0x78] sm:$0xff]
    %v3808 = vmul.f32 %v3792, %v3774
    %v3809 = vmul.f32 %v3793, %v3775
    %v3810 = vmul.f32 %v3794, %v3776
    %v3811 = vmul.f32 %v3795, %v3777
    %v3812 = vmul.f32 %v3796, %v3778
    %v3813 = vmul.f32 %v3797, %v3779
    %v3814 = vmul.f32 %v3798, %v3780
    %v3815 = vmul.f32 %v3799, %v3781
    %v3816 = vmul.f32 %v3800, %v3782
    %v3817 = vmul.f32 %v3801, %v3783
    %v3818 = vmul.f32 %v3802, %v3784
    %v3819 = vmul.f32 %v3803, %v3785
    %v3820 = vmul.f32 %v3804, %v3786
    %v3821 = vmul.f32 %v3805, %v3787
    %v3822 = vmul.f32 %v3806, %v3788
    %v3823 = vmul.f32 %v3807, %v3789
    %v3824 = vadd.f32 %v3808, %v3809
    %v3825 = vrot.slane %v3824, 4
    %v3826 = vadd.f32 %v3824, %v3825
    %v3827 = vrot.slane %v3826, 2
    %v3828 = vadd.f32 %v3826, %v3827
    %v3829 = vrot.slane %v3828, 1
    %v3830 = vadd.f32 %v3828, %v3829
    %v3831 = vadd.f32 %v3810, %v3811
    %v3832 = vrot.slane %v3831, 4
    %v3833 = vadd.f32 %v3831, %v3832
    %v3834 = vrot.slane %v3833, 2
    %v3835 = vadd.f32 %v3833, %v3834
    %v3836 = vrot.slane %v3835, 1
    %v3837 = vadd.f32 %v3835, %v3836
    %v3838 = vadd.f32 %v3812, %v3813
    %v3839 = vrot.slane %v3838, 4
    %v3840 = vadd.f32 %v3838, %v3839
    %v3841 = vrot.slane %v3840, 2
    %v3842 = vadd.f32 %v3840, %v3841
    %v3843 = vrot.slane %v3842, 1
    %v3844 = vadd.f32 %v3842, %v3843
    %v3845 = vadd.f32 %v3814, %v3815
    %v3846 = vrot.slane %v3845, 4
    %v3847 = vadd.f32 %v3845, %v3846
    %v3848 = vrot.slane %v3847, 2
    %v3849 = vadd.f32 %v3847, %v3848
    %v3850 = vrot.slane %v3849, 1
    %v3851 = vadd.f32 %v3849, %v3850
    %v3852 = vadd.f32 %v3816, %v3817
    %v3853 = vrot.slane %v3852, 4
    %v3854 = vadd.f32 %v3852, %v3853
    %v3855 = vrot.slane %v3854, 2
    %v3856 = vadd.f32 %v3854, %v3855
    %v3857 = vrot.slane %v3856, 1
    %v3858 = vadd.f32 %v3856, %v3857
    %v3859 = vadd.f32 %v3818, %v3819
    %v3860 = vrot.slane %v3859, 4
    %v3861 = vadd.f32 %v3859, %v3860
    %v3862 = vrot.slane %v3861, 2
    %v3863 = vadd.f32 %v3861, %v3862
    %v3864 = vrot.slane %v3863, 1
    %v3865 = vadd.f32 %v3863, %v3864
    %v3866 = vadd.f32 %v3820, %v3821
    %v3867 = vrot.slane %v3866, 4
    %v3868 = vadd.f32 %v3866, %v3867
    %v3869 = vrot.slane %v3868, 2
    %v3870 = vadd.f32 %v3868, %v3869
    %v3871 = vrot.slane %v3870, 1
    %v3872 = vadd.f32 %v3870, %v3871
    %v3873 = vadd.f32 %v3822, %v3823
    %v3874 = vrot.slane %v3873, 4
    %v3875 = vadd.f32 %v3873, %v3874
    %v3876 = vrot.slane %v3875, 2
    %v3877 = vadd.f32 %v3875, %v3876
    %v3878 = vrot.slane %v3877, 1
    %v3879 = vadd.f32 %v3877, %v3878
    %v3888 = vsel %vm3534, %v3837, %v3830
    %v3889 = vsel %vm3536, %v3844, %v3888
    %v3890 = vsel %vm3538, %v3851, %v3889
    %v3891 = vsel %vm3540, %v3858, %v3890
    %v3892 = vsel %vm3542, %v3865, %v3891
    %v3893 = vsel %vm3544, %v3872, %v3892
    %v3894 = vsel %vm3546, %v3879, %v3893
    %s3896 = scalar_lea.vmem [#allocation5], 16
    %3897 = vst [vmem:[%s3896] sm:$0xff] %v3894
    %s3898 = scalar_lea.vmem [#allocation3], %s3790
    %v3899 = vld [vmem:[%s3898] sm:$0xff]
    %v3900 = vld [vmem:[%s3898 + $0x8] sm:$0xff]
    %v3901 = vld [vmem:[%s3898 + $0x10] sm:$0xff]
    %v3902 = vld [vmem:[%s3898 + $0x18] sm:$0xff]
    %v3903 = vld [vmem:[%s3898 + $0x20] sm:$0xff]
    %v3904 = vld [vmem:[%s3898 + $0x28] sm:$0xff]
    %v3905 = vld [vmem:[%s3898 + $0x30] sm:$0xff]
    %v3906 = vld [vmem:[%s3898 + $0x38] sm:$0xff]
    %v3907 = vld [vmem:[%s3898 + $0x40] sm:$0xff]
    %v3908 = vld [vmem:[%s3898 + $0x48] sm:$0xff]
    %v3909 = vld [vmem:[%s3898 + $0x50] sm:$0xff]
    %v3910 = vld [vmem:[%s3898 + $0x58] sm:$0xff]
    %v3911 = vld [vmem:[%s3898 + $0x60] sm:$0xff]
    %v3912 = vld [vmem:[%s3898 + $0x68] sm:$0xff]
    %v3913 = vld [vmem:[%s3898 + $0x70] sm:$0xff]
    %v3914 = vld [vmem:[%s3898 + $0x78] sm:$0xff]
    %v3915 = vmul.f32 %v3774, %v3899
    %v3916 = vmul.f32 %v3775, %v3900
    %v3917 = vmul.f32 %v3776, %v3901
    %v3918 = vmul.f32 %v3777, %v3902
    %v3919 = vmul.f32 %v3778, %v3903
    %v3920 = vmul.f32 %v3779, %v3904
    %v3921 = vmul.f32 %v3780, %v3905
    %v3922 = vmul.f32 %v3781, %v3906
    %v3923 = vmul.f32 %v3782, %v3907
    %v3924 = vmul.f32 %v3783, %v3908
    %v3925 = vmul.f32 %v3784, %v3909
    %v3926 = vmul.f32 %v3785, %v3910
    %v3927 = vmul.f32 %v3786, %v3911
    %v3928 = vmul.f32 %v3787, %v3912
    %v3929 = vmul.f32 %v3788, %v3913
    %v3930 = vmul.f32 %v3789, %v3914
    %s3931 = scalar_lea.vmem [#allocation4], %s3790
    %v3932 = vld [vmem:[%s3931] sm:$0xff]
    %v3933 = vld [vmem:[%s3931 + $0x8] sm:$0xff]
    %v3934 = vld [vmem:[%s3931 + $0x10] sm:$0xff]
    %v3935 = vld [vmem:[%s3931 + $0x18] sm:$0xff]
    %v3936 = vld [vmem:[%s3931 + $0x20] sm:$0xff]
    %v3937 = vld [vmem:[%s3931 + $0x28] sm:$0xff]
    %v3938 = vld [vmem:[%s3931 + $0x30] sm:$0xff]
    %v3939 = vld [vmem:[%s3931 + $0x38] sm:$0xff]
    %v3940 = vld [vmem:[%s3931 + $0x40] sm:$0xff]
    %v3941 = vld [vmem:[%s3931 + $0x48] sm:$0xff]
    %v3942 = vld [vmem:[%s3931 + $0x50] sm:$0xff]
    %v3943 = vld [vmem:[%s3931 + $0x58] sm:$0xff]
    %v3944 = vld [vmem:[%s3931 + $0x60] sm:$0xff]
    %v3945 = vld [vmem:[%s3931 + $0x68] sm:$0xff]
    %v3946 = vld [vmem:[%s3931 + $0x70] sm:$0xff]
    %v3947 = vld [vmem:[%s3931 + $0x78] sm:$0xff]
    %v3948 = vadd.f32 %v3915, %v3932
    %v3949 = vadd.f32 %v3916, %v3933
    %v3950 = vadd.f32 %v3917, %v3934
    %v3951 = vadd.f32 %v3918, %v3935
    %v3952 = vadd.f32 %v3919, %v3936
    %v3953 = vadd.f32 %v3920, %v3937
    %v3954 = vadd.f32 %v3921, %v3938
    %v3955 = vadd.f32 %v3922, %v3939
    %v3956 = vadd.f32 %v3923, %v3940
    %v3957 = vadd.f32 %v3924, %v3941
    %v3958 = vadd.f32 %v3925, %v3942
    %v3959 = vadd.f32 %v3926, %v3943
    %v3960 = vadd.f32 %v3927, %v3944
    %v3961 = vadd.f32 %v3928, %v3945
    %v3962 = vadd.f32 %v3929, %v3946
    %v3963 = vadd.f32 %v3930, %v3947
    %s3964 = smul.u32 24, 16
    %s3965 = scalar_lea.vmem [#allocation2], %s3964
    %v3966 = vld [vmem:[%s3965] sm:$0xff]
    %v3967 = vld [vmem:[%s3965 + $0x8] sm:$0xff]
    %v3968 = vld [vmem:[%s3965 + $0x10] sm:$0xff]
    %v3969 = vld [vmem:[%s3965 + $0x18] sm:$0xff]
    %v3970 = vld [vmem:[%s3965 + $0x20] sm:$0xff]
    %v3971 = vld [vmem:[%s3965 + $0x28] sm:$0xff]
    %v3972 = vld [vmem:[%s3965 + $0x30] sm:$0xff]
    %v3973 = vld [vmem:[%s3965 + $0x38] sm:$0xff]
    %v3974 = vld [vmem:[%s3965 + $0x40] sm:$0xff]
    %v3975 = vld [vmem:[%s3965 + $0x48] sm:$0xff]
    %v3976 = vld [vmem:[%s3965 + $0x50] sm:$0xff]
    %v3977 = vld [vmem:[%s3965 + $0x58] sm:$0xff]
    %v3978 = vld [vmem:[%s3965 + $0x60] sm:$0xff]
    %v3979 = vld [vmem:[%s3965 + $0x68] sm:$0xff]
    %v3980 = vld [vmem:[%s3965 + $0x70] sm:$0xff]
    %v3981 = vld [vmem:[%s3965 + $0x78] sm:$0xff]
    %v3982 = vmul.f32 %v3966, %v3948
    %v3983 = vmul.f32 %v3967, %v3949
    %v3984 = vmul.f32 %v3968, %v3950
    %v3985 = vmul.f32 %v3969, %v3951
    %v3986 = vmul.f32 %v3970, %v3952
    %v3987 = vmul.f32 %v3971, %v3953
    %v3988 = vmul.f32 %v3972, %v3954
    %v3989 = vmul.f32 %v3973, %v3955
    %v3990 = vmul.f32 %v3974, %v3956
    %v3991 = vmul.f32 %v3975, %v3957
    %v3992 = vmul.f32 %v3976, %v3958
    %v3993 = vmul.f32 %v3977, %v3959
    %v3994 = vmul.f32 %v3978, %v3960
    %v3995 = vmul.f32 %v3979, %v3961
    %v3996 = vmul.f32 %v3980, %v3962
    %v3997 = vmul.f32 %v3981, %v3963
    %v3998 = vadd.f32 %v3982, %v3983
    %v3999 = vrot.slane %v3998, 4
    %v4000 = vadd.f32 %v3998, %v3999
    %v4001 = vrot.slane %v4000, 2
    %v4002 = vadd.f32 %v4000, %v4001
    %v4003 = vrot.slane %v4002, 1
    %v4004 = vadd.f32 %v4002, %v4003
    %v4005 = vadd.f32 %v3984, %v3985
    %v4006 = vrot.slane %v4005, 4
    %v4007 = vadd.f32 %v4005, %v4006
    %v4008 = vrot.slane %v4007, 2
    %v4009 = vadd.f32 %v4007, %v4008
    %v4010 = vrot.slane %v4009, 1
    %v4011 = vadd.f32 %v4009, %v4010
    %v4012 = vadd.f32 %v3986, %v3987
    %v4013 = vrot.slane %v4012, 4
    %v4014 = vadd.f32 %v4012, %v4013
    %v4015 = vrot.slane %v4014, 2
    %v4016 = vadd.f32 %v4014, %v4015
    %v4017 = vrot.slane %v4016, 1
    %v4018 = vadd.f32 %v4016, %v4017
    %v4019 = vadd.f32 %v3988, %v3989
    %v4020 = vrot.slane %v4019, 4
    %v4021 = vadd.f32 %v4019, %v4020
    %v4022 = vrot.slane %v4021, 2
    %v4023 = vadd.f32 %v4021, %v4022
    %v4024 = vrot.slane %v4023, 1
    %v4025 = vadd.f32 %v4023, %v4024
    %v4026 = vadd.f32 %v3990, %v3991
    %v4027 = vrot.slane %v4026, 4
    %v4028 = vadd.f32 %v4026, %v4027
    %v4029 = vrot.slane %v4028, 2
    %v4030 = vadd.f32 %v4028, %v4029
    %v4031 = vrot.slane %v4030, 1
    %v4032 = vadd.f32 %v4030, %v4031
    %v4033 = vadd.f32 %v3992, %v3993
    %v4034 = vrot.slane %v4033, 4
    %v4035 = vadd.f32 %v4033, %v4034
    %v4036 = vrot.slane %v4035, 2
    %v4037 = vadd.f32 %v4035, %v4036
    %v4038 = vrot.slane %v4037, 1
    %v4039 = vadd.f32 %v4037, %v4038
    %v4040 = vadd.f32 %v3994, %v3995
    %v4041 = vrot.slane %v4040, 4
    %v4042 = vadd.f32 %v4040, %v4041
    %v4043 = vrot.slane %v4042, 2
    %v4044 = vadd.f32 %v4042, %v4043
    %v4045 = vrot.slane %v4044, 1
    %v4046 = vadd.f32 %v4044, %v4045
    %v4047 = vadd.f32 %v3996, %v3997
    %v4048 = vrot.slane %v4047, 4
    %v4049 = vadd.f32 %v4047, %v4048
    %v4050 = vrot.slane %v4049, 2
    %v4051 = vadd.f32 %v4049, %v4050
    %v4052 = vrot.slane %v4051, 1
    %v4053 = vadd.f32 %v4051, %v4052
    %v4062 = vsel %vm3534, %v4011, %v4004
    %v4063 = vsel %vm3536, %v4018, %v4062
    %v4064 = vsel %vm3538, %v4025, %v4063
    %v4065 = vsel %vm3540, %v4032, %v4064
    %v4066 = vsel %vm3542, %v4039, %v4065
    %v4067 = vsel %vm3544, %v4046, %v4066
    %v4068 = vsel %vm3546, %v4053, %v4067
    %s4070 = scalar_lea.vmem [#allocation5], 24
    %4071 = vst [vmem:[%s4070] sm:$0xff] %v4068
    %s4072 = scalar_lea.vmem [#allocation3], %s3964
    %v4073 = vld [vmem:[%s4072] sm:$0xff]
    %v4074 = vld [vmem:[%s4072 + $0x8] sm:$0xff]
    %v4075 = vld [vmem:[%s4072 + $0x10] sm:$0xff]
    %v4076 = vld [vmem:[%s4072 + $0x18] sm:$0xff]
    %v4077 = vld [vmem:[%s4072 + $0x20] sm:$0xff]
    %v4078 = vld [vmem:[%s4072 + $0x28] sm:$0xff]
    %v4079 = vld [vmem:[%s4072 + $0x30] sm:$0xff]
    %v4080 = vld [vmem:[%s4072 + $0x38] sm:$0xff]
    %v4081 = vld [vmem:[%s4072 + $0x40] sm:$0xff]
    %v4082 = vld [vmem:[%s4072 + $0x48] sm:$0xff]
    %v4083 = vld [vmem:[%s4072 + $0x50] sm:$0xff]
    %v4084 = vld [vmem:[%s4072 + $0x58] sm:$0xff]
    %v4085 = vld [vmem:[%s4072 + $0x60] sm:$0xff]
    %v4086 = vld [vmem:[%s4072 + $0x68] sm:$0xff]
    %v4087 = vld [vmem:[%s4072 + $0x70] sm:$0xff]
    %v4088 = vld [vmem:[%s4072 + $0x78] sm:$0xff]
    %v4089 = vmul.f32 %v3948, %v4073
    %v4090 = vmul.f32 %v3949, %v4074
    %v4091 = vmul.f32 %v3950, %v4075
    %v4092 = vmul.f32 %v3951, %v4076
    %v4093 = vmul.f32 %v3952, %v4077
    %v4094 = vmul.f32 %v3953, %v4078
    %v4095 = vmul.f32 %v3954, %v4079
    %v4096 = vmul.f32 %v3955, %v4080
    %v4097 = vmul.f32 %v3956, %v4081
    %v4098 = vmul.f32 %v3957, %v4082
    %v4099 = vmul.f32 %v3958, %v4083
    %v4100 = vmul.f32 %v3959, %v4084
    %v4101 = vmul.f32 %v3960, %v4085
    %v4102 = vmul.f32 %v3961, %v4086
    %v4103 = vmul.f32 %v3962, %v4087
    %v4104 = vmul.f32 %v3963, %v4088
    %s4105 = scalar_lea.vmem [#allocation4], %s3964
    %v4106 = vld [vmem:[%s4105] sm:$0xff]
    %v4107 = vld [vmem:[%s4105 + $0x8] sm:$0xff]
    %v4108 = vld [vmem:[%s4105 + $0x10] sm:$0xff]
    %v4109 = vld [vmem:[%s4105 + $0x18] sm:$0xff]
    %v4110 = vld [vmem:[%s4105 + $0x20] sm:$0xff]
    %v4111 = vld [vmem:[%s4105 + $0x28] sm:$0xff]
    %v4112 = vld [vmem:[%s4105 + $0x30] sm:$0xff]
    %v4113 = vld [vmem:[%s4105 + $0x38] sm:$0xff]
    %v4114 = vld [vmem:[%s4105 + $0x40] sm:$0xff]
    %v4115 = vld [vmem:[%s4105 + $0x48] sm:$0xff]
    %v4116 = vld [vmem:[%s4105 + $0x50] sm:$0xff]
    %v4117 = vld [vmem:[%s4105 + $0x58] sm:$0xff]
    %v4118 = vld [vmem:[%s4105 + $0x60] sm:$0xff]
    %v4119 = vld [vmem:[%s4105 + $0x68] sm:$0xff]
    %v4120 = vld [vmem:[%s4105 + $0x70] sm:$0xff]
    %v4121 = vld [vmem:[%s4105 + $0x78] sm:$0xff]
    %v4122 = vadd.f32 %v4089, %v4106
    %v4123 = vadd.f32 %v4090, %v4107
    %v4124 = vadd.f32 %v4091, %v4108
    %v4125 = vadd.f32 %v4092, %v4109
    %v4126 = vadd.f32 %v4093, %v4110
    %v4127 = vadd.f32 %v4094, %v4111
    %v4128 = vadd.f32 %v4095, %v4112
    %v4129 = vadd.f32 %v4096, %v4113
    %v4130 = vadd.f32 %v4097, %v4114
    %v4131 = vadd.f32 %v4098, %v4115
    %v4132 = vadd.f32 %v4099, %v4116
    %v4133 = vadd.f32 %v4100, %v4117
    %v4134 = vadd.f32 %v4101, %v4118
    %v4135 = vadd.f32 %v4102, %v4119
    %v4136 = vadd.f32 %v4103, %v4120
    %v4137 = vadd.f32 %v4104, %v4121
    %s4138 = smul.u32 32, 16
    %s4139 = scalar_lea.vmem [#allocation2], %s4138
    %v4140 = vld [vmem:[%s4139] sm:$0xff]
    %v4141 = vld [vmem:[%s4139 + $0x8] sm:$0xff]
    %v4142 = vld [vmem:[%s4139 + $0x10] sm:$0xff]
    %v4143 = vld [vmem:[%s4139 + $0x18] sm:$0xff]
    %v4144 = vld [vmem:[%s4139 + $0x20] sm:$0xff]
    %v4145 = vld [vmem:[%s4139 + $0x28] sm:$0xff]
    %v4146 = vld [vmem:[%s4139 + $0x30] sm:$0xff]
    %v4147 = vld [vmem:[%s4139 + $0x38] sm:$0xff]
    %v4148 = vld [vmem:[%s4139 + $0x40] sm:$0xff]
    %v4149 = vld [vmem:[%s4139 + $0x48] sm:$0xff]
    %v4150 = vld [vmem:[%s4139 + $0x50] sm:$0xff]
    %v4151 = vld [vmem:[%s4139 + $0x58] sm:$0xff]
    %v4152 = vld [vmem:[%s4139 + $0x60] sm:$0xff]
    %v4153 = vld [vmem:[%s4139 + $0x68] sm:$0xff]
    %v4154 = vld [vmem:[%s4139 + $0x70] sm:$0xff]
    %v4155 = vld [vmem:[%s4139 + $0x78] sm:$0xff]
    %v4156 = vmul.f32 %v4140, %v4122
    %v4157 = vmul.f32 %v4141, %v4123
    %v4158 = vmul.f32 %v4142, %v4124
    %v4159 = vmul.f32 %v4143, %v4125
    %v4160 = vmul.f32 %v4144, %v4126
    %v4161 = vmul.f32 %v4145, %v4127
    %v4162 = vmul.f32 %v4146, %v4128
    %v4163 = vmul.f32 %v4147, %v4129
    %v4164 = vmul.f32 %v4148, %v4130
    %v4165 = vmul.f32 %v4149, %v4131
    %v4166 = vmul.f32 %v4150, %v4132
    %v4167 = vmul.f32 %v4151, %v4133
    %v4168 = vmul.f32 %v4152, %v4134
    %v4169 = vmul.f32 %v4153, %v4135
    %v4170 = vmul.f32 %v4154, %v4136
    %v4171 = vmul.f32 %v4155, %v4137
    %v4172 = vadd.f32 %v4156, %v4157
    %v4173 = vrot.slane %v4172, 4
    %v4174 = vadd.f32 %v4172, %v4173
    %v4175 = vrot.slane %v4174, 2
    %v4176 = vadd.f32 %v4174, %v4175
    %v4177 = vrot.slane %v4176, 1
    %v4178 = vadd.f32 %v4176, %v4177
    %v4179 = vadd.f32 %v4158, %v4159
    %v4180 = vrot.slane %v4179, 4
    %v4181 = vadd.f32 %v4179, %v4180
    %v4182 = vrot.slane %v4181, 2
    %v4183 = vadd.f32 %v4181, %v4182
    %v4184 = vrot.slane %v4183, 1
    %v4185 = vadd.f32 %v4183, %v4184
    %v4186 = vadd.f32 %v4160, %v4161
    %v4187 = vrot.slane %v4186, 4
    %v4188 = vadd.f32 %v4186, %v4187
    %v4189 = vrot.slane %v4188, 2
    %v4190 = vadd.f32 %v4188, %v4189
    %v4191 = vrot.slane %v4190, 1
    %v4192 = vadd.f32 %v4190, %v4191
    %v4193 = vadd.f32 %v4162, %v4163
    %v4194 = vrot.slane %v4193, 4
    %v4195 = vadd.f32 %v4193, %v4194
    %v4196 = vrot.slane %v4195, 2
    %v4197 = vadd.f32 %v4195, %v4196
    %v4198 = vrot.slane %v4197, 1
    %v4199 = vadd.f32 %v4197, %v4198
    %v4200 = vadd.f32 %v4164, %v4165
    %v4201 = vrot.slane %v4200, 4
    %v4202 = vadd.f32 %v4200, %v4201
    %v4203 = vrot.slane %v4202, 2
    %v4204 = vadd.f32 %v4202, %v4203
    %v4205 = vrot.slane %v4204, 1
    %v4206 = vadd.f32 %v4204, %v4205
    %v4207 = vadd.f32 %v4166, %v4167
    %v4208 = vrot.slane %v4207, 4
    %v4209 = vadd.f32 %v4207, %v4208
    %v4210 = vrot.slane %v4209, 2
    %v4211 = vadd.f32 %v4209, %v4210
    %v4212 = vrot.slane %v4211, 1
    %v4213 = vadd.f32 %v4211, %v4212
    %v4214 = vadd.f32 %v4168, %v4169
    %v4215 = vrot.slane %v4214, 4
    %v4216 = vadd.f32 %v4214, %v4215
    %v4217 = vrot.slane %v4216, 2
    %v4218 = vadd.f32 %v4216, %v4217
    %v4219 = vrot.slane %v4218, 1
    %v4220 = vadd.f32 %v4218, %v4219
    %v4221 = vadd.f32 %v4170, %v4171
    %v4222 = vrot.slane %v4221, 4
    %v4223 = vadd.f32 %v4221, %v4222
    %v4224 = vrot.slane %v4223, 2
    %v4225 = vadd.f32 %v4223, %v4224
    %v4226 = vrot.slane %v4225, 1
    %v4227 = vadd.f32 %v4225, %v4226
    %v4236 = vsel %vm3534, %v4185, %v4178
    %v4237 = vsel %vm3536, %v4192, %v4236
    %v4238 = vsel %vm3538, %v4199, %v4237
    %v4239 = vsel %vm3540, %v4206, %v4238
    %v4240 = vsel %vm3542, %v4213, %v4239
    %v4241 = vsel %vm3544, %v4220, %v4240
    %v4242 = vsel %vm3546, %v4227, %v4241
    %s4244 = scalar_lea.vmem [#allocation5], 32
    %4245 = vst [vmem:[%s4244] sm:$0xff] %v4242
    %s4246 = scalar_lea.vmem [#allocation3], %s4138
    %v4247 = vld [vmem:[%s4246] sm:$0xff]
    %v4248 = vld [vmem:[%s4246 + $0x8] sm:$0xff]
    %v4249 = vld [vmem:[%s4246 + $0x10] sm:$0xff]
    %v4250 = vld [vmem:[%s4246 + $0x18] sm:$0xff]
    %v4251 = vld [vmem:[%s4246 + $0x20] sm:$0xff]
    %v4252 = vld [vmem:[%s4246 + $0x28] sm:$0xff]
    %v4253 = vld [vmem:[%s4246 + $0x30] sm:$0xff]
    %v4254 = vld [vmem:[%s4246 + $0x38] sm:$0xff]
    %v4255 = vld [vmem:[%s4246 + $0x40] sm:$0xff]
    %v4256 = vld [vmem:[%s4246 + $0x48] sm:$0xff]
    %v4257 = vld [vmem:[%s4246 + $0x50] sm:$0xff]
    %v4258 = vld [vmem:[%s4246 + $0x58] sm:$0xff]
    %v4259 = vld [vmem:[%s4246 + $0x60] sm:$0xff]
    %v4260 = vld [vmem:[%s4246 + $0x68] sm:$0xff]
    %v4261 = vld [vmem:[%s4246 + $0x70] sm:$0xff]
    %v4262 = vld [vmem:[%s4246 + $0x78] sm:$0xff]
    %v4263 = vmul.f32 %v4122, %v4247
    %v4264 = vmul.f32 %v4123, %v4248
    %v4265 = vmul.f32 %v4124, %v4249
    %v4266 = vmul.f32 %v4125, %v4250
    %v4267 = vmul.f32 %v4126, %v4251
    %v4268 = vmul.f32 %v4127, %v4252
    %v4269 = vmul.f32 %v4128, %v4253
    %v4270 = vmul.f32 %v4129, %v4254
    %v4271 = vmul.f32 %v4130, %v4255
    %v4272 = vmul.f32 %v4131, %v4256
    %v4273 = vmul.f32 %v4132, %v4257
    %v4274 = vmul.f32 %v4133, %v4258
    %v4275 = vmul.f32 %v4134, %v4259
    %v4276 = vmul.f32 %v4135, %v4260
    %v4277 = vmul.f32 %v4136, %v4261
    %v4278 = vmul.f32 %v4137, %v4262
    %s4279 = scalar_lea.vmem [#allocation4], %s4138
    %v4280 = vld [vmem:[%s4279] sm:$0xff]
    %v4281 = vld [vmem:[%s4279 + $0x8] sm:$0xff]
    %v4282 = vld [vmem:[%s4279 + $0x10] sm:$0xff]
    %v4283 = vld [vmem:[%s4279 + $0x18] sm:$0xff]
    %v4284 = vld [vmem:[%s4279 + $0x20] sm:$0xff]
    %v4285 = vld [vmem:[%s4279 + $0x28] sm:$0xff]
    %v4286 = vld [vmem:[%s4279 + $0x30] sm:$0xff]
    %v4287 = vld [vmem:[%s4279 + $0x38] sm:$0xff]
    %v4288 = vld [vmem:[%s4279 + $0x40] sm:$0xff]
    %v4289 = vld [vmem:[%s4279 + $0x48] sm:$0xff]
    %v4290 = vld [vmem:[%s4279 + $0x50] sm:$0xff]
    %v4291 = vld [vmem:[%s4279 + $0x58] sm:$0xff]
    %v4292 = vld [vmem:[%s4279 + $0x60] sm:$0xff]
    %v4293 = vld [vmem:[%s4279 + $0x68] sm:$0xff]
    %v4294 = vld [vmem:[%s4279 + $0x70] sm:$0xff]
    %v4295 = vld [vmem:[%s4279 + $0x78] sm:$0xff]
    %v4296 = vadd.f32 %v4263, %v4280
    %v4297 = vadd.f32 %v4264, %v4281
    %v4298 = vadd.f32 %v4265, %v4282
    %v4299 = vadd.f32 %v4266, %v4283
    %v4300 = vadd.f32 %v4267, %v4284
    %v4301 = vadd.f32 %v4268, %v4285
    %v4302 = vadd.f32 %v4269, %v4286
    %v4303 = vadd.f32 %v4270, %v4287
    %v4304 = vadd.f32 %v4271, %v4288
    %v4305 = vadd.f32 %v4272, %v4289
    %v4306 = vadd.f32 %v4273, %v4290
    %v4307 = vadd.f32 %v4274, %v4291
    %v4308 = vadd.f32 %v4275, %v4292
    %v4309 = vadd.f32 %v4276, %v4293
    %v4310 = vadd.f32 %v4277, %v4294
    %v4311 = vadd.f32 %v4278, %v4295
    %s4312 = smul.u32 40, 16
    %s4313 = scalar_lea.vmem [#allocation2], %s4312
    %v4314 = vld [vmem:[%s4313] sm:$0xff]
    %v4315 = vld [vmem:[%s4313 + $0x8] sm:$0xff]
    %v4316 = vld [vmem:[%s4313 + $0x10] sm:$0xff]
    %v4317 = vld [vmem:[%s4313 + $0x18] sm:$0xff]
    %v4318 = vld [vmem:[%s4313 + $0x20] sm:$0xff]
    %v4319 = vld [vmem:[%s4313 + $0x28] sm:$0xff]
    %v4320 = vld [vmem:[%s4313 + $0x30] sm:$0xff]
    %v4321 = vld [vmem:[%s4313 + $0x38] sm:$0xff]
    %v4322 = vld [vmem:[%s4313 + $0x40] sm:$0xff]
    %v4323 = vld [vmem:[%s4313 + $0x48] sm:$0xff]
    %v4324 = vld [vmem:[%s4313 + $0x50] sm:$0xff]
    %v4325 = vld [vmem:[%s4313 + $0x58] sm:$0xff]
    %v4326 = vld [vmem:[%s4313 + $0x60] sm:$0xff]
    %v4327 = vld [vmem:[%s4313 + $0x68] sm:$0xff]
    %v4328 = vld [vmem:[%s4313 + $0x70] sm:$0xff]
    %v4329 = vld [vmem:[%s4313 + $0x78] sm:$0xff]
    %v4330 = vmul.f32 %v4314, %v4296
    %v4331 = vmul.f32 %v4315, %v4297
    %v4332 = vmul.f32 %v4316, %v4298
    %v4333 = vmul.f32 %v4317, %v4299
    %v4334 = vmul.f32 %v4318, %v4300
    %v4335 = vmul.f32 %v4319, %v4301
    %v4336 = vmul.f32 %v4320, %v4302
    %v4337 = vmul.f32 %v4321, %v4303
    %v4338 = vmul.f32 %v4322, %v4304
    %v4339 = vmul.f32 %v4323, %v4305
    %v4340 = vmul.f32 %v4324, %v4306
    %v4341 = vmul.f32 %v4325, %v4307
    %v4342 = vmul.f32 %v4326, %v4308
    %v4343 = vmul.f32 %v4327, %v4309
    %v4344 = vmul.f32 %v4328, %v4310
    %v4345 = vmul.f32 %v4329, %v4311
    %v4346 = vadd.f32 %v4330, %v4331
    %v4347 = vrot.slane %v4346, 4
    %v4348 = vadd.f32 %v4346, %v4347
    %v4349 = vrot.slane %v4348, 2
    %v4350 = vadd.f32 %v4348, %v4349
    %v4351 = vrot.slane %v4350, 1
    %v4352 = vadd.f32 %v4350, %v4351
    %v4353 = vadd.f32 %v4332, %v4333
    %v4354 = vrot.slane %v4353, 4
    %v4355 = vadd.f32 %v4353, %v4354
    %v4356 = vrot.slane %v4355, 2
    %v4357 = vadd.f32 %v4355, %v4356
    %v4358 = vrot.slane %v4357, 1
    %v4359 = vadd.f32 %v4357, %v4358
    %v4360 = vadd.f32 %v4334, %v4335
    %v4361 = vrot.slane %v4360, 4
    %v4362 = vadd.f32 %v4360, %v4361
    %v4363 = vrot.slane %v4362, 2
    %v4364 = vadd.f32 %v4362, %v4363
    %v4365 = vrot.slane %v4364, 1
    %v4366 = vadd.f32 %v4364, %v4365
    %v4367 = vadd.f32 %v4336, %v4337
    %v4368 = vrot.slane %v4367, 4
    %v4369 = vadd.f32 %v4367, %v4368
    %v4370 = vrot.slane %v4369, 2
    %v4371 = vadd.f32 %v4369, %v4370
    %v4372 = vrot.slane %v4371, 1
    %v4373 = vadd.f32 %v4371, %v4372
    %v4374 = vadd.f32 %v4338, %v4339
    %v4375 = vrot.slane %v4374, 4
    %v4376 = vadd.f32 %v4374, %v4375
    %v4377 = vrot.slane %v4376, 2
    %v4378 = vadd.f32 %v4376, %v4377
    %v4379 = vrot.slane %v4378, 1
    %v4380 = vadd.f32 %v4378, %v4379
    %v4381 = vadd.f32 %v4340, %v4341
    %v4382 = vrot.slane %v4381, 4
    %v4383 = vadd.f32 %v4381, %v4382
    %v4384 = vrot.slane %v4383, 2
    %v4385 = vadd.f32 %v4383, %v4384
    %v4386 = vrot.slane %v4385, 1
    %v4387 = vadd.f32 %v4385, %v4386
    %v4388 = vadd.f32 %v4342, %v4343
    %v4389 = vrot.slane %v4388, 4
    %v4390 = vadd.f32 %v4388, %v4389
    %v4391 = vrot.slane %v4390, 2
    %v4392 = vadd.f32 %v4390, %v4391
    %v4393 = vrot.slane %v4392, 1
    %v4394 = vadd.f32 %v4392, %v4393
    %v4395 = vadd.f32 %v4344, %v4345
    %v4396 = vrot.slane %v4395, 4
    %v4397 = vadd.f32 %v4395, %v4396
    %v4398 = vrot.slane %v4397, 2
    %v4399 = vadd.f32 %v4397, %v4398
    %v4400 = vrot.slane %v4399, 1
    %v4401 = vadd.f32 %v4399, %v4400
    %v4410 = vsel %vm3534, %v4359, %v4352
    %v4411 = vsel %vm3536, %v4366, %v4410
    %v4412 = vsel %vm3538, %v4373, %v4411
    %v4413 = vsel %vm3540, %v4380, %v4412
    %v4414 = vsel %vm3542, %v4387, %v4413
    %v4415 = vsel %vm3544, %v4394, %v4414
    %v4416 = vsel %vm3546, %v4401, %v4415
    %s4418 = scalar_lea.vmem [#allocation5], 40
    %4419 = vst [vmem:[%s4418] sm:$0xff] %v4416
    %s4420 = scalar_lea.vmem [#allocation3], %s4312
    %v4421 = vld [vmem:[%s4420] sm:$0xff]
    %v4422 = vld [vmem:[%s4420 + $0x8] sm:$0xff]
    %v4423 = vld [vmem:[%s4420 + $0x10] sm:$0xff]
    %v4424 = vld [vmem:[%s4420 + $0x18] sm:$0xff]
    %v4425 = vld [vmem:[%s4420 + $0x20] sm:$0xff]
    %v4426 = vld [vmem:[%s4420 + $0x28] sm:$0xff]
    %v4427 = vld [vmem:[%s4420 + $0x30] sm:$0xff]
    %v4428 = vld [vmem:[%s4420 + $0x38] sm:$0xff]
    %v4429 = vld [vmem:[%s4420 + $0x40] sm:$0xff]
    %v4430 = vld [vmem:[%s4420 + $0x48] sm:$0xff]
    %v4431 = vld [vmem:[%s4420 + $0x50] sm:$0xff]
    %v4432 = vld [vmem:[%s4420 + $0x58] sm:$0xff]
    %v4433 = vld [vmem:[%s4420 + $0x60] sm:$0xff]
    %v4434 = vld [vmem:[%s4420 + $0x68] sm:$0xff]
    %v4435 = vld [vmem:[%s4420 + $0x70] sm:$0xff]
    %v4436 = vld [vmem:[%s4420 + $0x78] sm:$0xff]
    %v4437 = vmul.f32 %v4296, %v4421
    %v4438 = vmul.f32 %v4297, %v4422
    %v4439 = vmul.f32 %v4298, %v4423
    %v4440 = vmul.f32 %v4299, %v4424
    %v4441 = vmul.f32 %v4300, %v4425
    %v4442 = vmul.f32 %v4301, %v4426
    %v4443 = vmul.f32 %v4302, %v4427
    %v4444 = vmul.f32 %v4303, %v4428
    %v4445 = vmul.f32 %v4304, %v4429
    %v4446 = vmul.f32 %v4305, %v4430
    %v4447 = vmul.f32 %v4306, %v4431
    %v4448 = vmul.f32 %v4307, %v4432
    %v4449 = vmul.f32 %v4308, %v4433
    %v4450 = vmul.f32 %v4309, %v4434
    %v4451 = vmul.f32 %v4310, %v4435
    %v4452 = vmul.f32 %v4311, %v4436
    %s4453 = scalar_lea.vmem [#allocation4], %s4312
    %v4454 = vld [vmem:[%s4453] sm:$0xff]
    %v4455 = vld [vmem:[%s4453 + $0x8] sm:$0xff]
    %v4456 = vld [vmem:[%s4453 + $0x10] sm:$0xff]
    %v4457 = vld [vmem:[%s4453 + $0x18] sm:$0xff]
    %v4458 = vld [vmem:[%s4453 + $0x20] sm:$0xff]
    %v4459 = vld [vmem:[%s4453 + $0x28] sm:$0xff]
    %v4460 = vld [vmem:[%s4453 + $0x30] sm:$0xff]
    %v4461 = vld [vmem:[%s4453 + $0x38] sm:$0xff]
    %v4462 = vld [vmem:[%s4453 + $0x40] sm:$0xff]
    %v4463 = vld [vmem:[%s4453 + $0x48] sm:$0xff]
    %v4464 = vld [vmem:[%s4453 + $0x50] sm:$0xff]
    %v4465 = vld [vmem:[%s4453 + $0x58] sm:$0xff]
    %v4466 = vld [vmem:[%s4453 + $0x60] sm:$0xff]
    %v4467 = vld [vmem:[%s4453 + $0x68] sm:$0xff]
    %v4468 = vld [vmem:[%s4453 + $0x70] sm:$0xff]
    %v4469 = vld [vmem:[%s4453 + $0x78] sm:$0xff]
    %v4470 = vadd.f32 %v4437, %v4454
    %v4471 = vadd.f32 %v4438, %v4455
    %v4472 = vadd.f32 %v4439, %v4456
    %v4473 = vadd.f32 %v4440, %v4457
    %v4474 = vadd.f32 %v4441, %v4458
    %v4475 = vadd.f32 %v4442, %v4459
    %v4476 = vadd.f32 %v4443, %v4460
    %v4477 = vadd.f32 %v4444, %v4461
    %v4478 = vadd.f32 %v4445, %v4462
    %v4479 = vadd.f32 %v4446, %v4463
    %v4480 = vadd.f32 %v4447, %v4464
    %v4481 = vadd.f32 %v4448, %v4465
    %v4482 = vadd.f32 %v4449, %v4466
    %v4483 = vadd.f32 %v4450, %v4467
    %v4484 = vadd.f32 %v4451, %v4468
    %v4485 = vadd.f32 %v4452, %v4469
    %s4486 = smul.u32 48, 16
    %s4487 = scalar_lea.vmem [#allocation2], %s4486
    %v4488 = vld [vmem:[%s4487] sm:$0xff]
    %v4489 = vld [vmem:[%s4487 + $0x8] sm:$0xff]
    %v4490 = vld [vmem:[%s4487 + $0x10] sm:$0xff]
    %v4491 = vld [vmem:[%s4487 + $0x18] sm:$0xff]
    %v4492 = vld [vmem:[%s4487 + $0x20] sm:$0xff]
    %v4493 = vld [vmem:[%s4487 + $0x28] sm:$0xff]
    %v4494 = vld [vmem:[%s4487 + $0x30] sm:$0xff]
    %v4495 = vld [vmem:[%s4487 + $0x38] sm:$0xff]
    %v4496 = vld [vmem:[%s4487 + $0x40] sm:$0xff]
    %v4497 = vld [vmem:[%s4487 + $0x48] sm:$0xff]
    %v4498 = vld [vmem:[%s4487 + $0x50] sm:$0xff]
    %v4499 = vld [vmem:[%s4487 + $0x58] sm:$0xff]
    %v4500 = vld [vmem:[%s4487 + $0x60] sm:$0xff]
    %v4501 = vld [vmem:[%s4487 + $0x68] sm:$0xff]
    %v4502 = vld [vmem:[%s4487 + $0x70] sm:$0xff]
    %v4503 = vld [vmem:[%s4487 + $0x78] sm:$0xff]
    %v4504 = vmul.f32 %v4488, %v4470
    %v4505 = vmul.f32 %v4489, %v4471
    %v4506 = vmul.f32 %v4490, %v4472
    %v4507 = vmul.f32 %v4491, %v4473
    %v4508 = vmul.f32 %v4492, %v4474
    %v4509 = vmul.f32 %v4493, %v4475
    %v4510 = vmul.f32 %v4494, %v4476
    %v4511 = vmul.f32 %v4495, %v4477
    %v4512 = vmul.f32 %v4496, %v4478
    %v4513 = vmul.f32 %v4497, %v4479
    %v4514 = vmul.f32 %v4498, %v4480
    %v4515 = vmul.f32 %v4499, %v4481
    %v4516 = vmul.f32 %v4500, %v4482
    %v4517 = vmul.f32 %v4501, %v4483
    %v4518 = vmul.f32 %v4502, %v4484
    %v4519 = vmul.f32 %v4503, %v4485
    %v4520 = vadd.f32 %v4504, %v4505
    %v4521 = vrot.slane %v4520, 4
    %v4522 = vadd.f32 %v4520, %v4521
    %v4523 = vrot.slane %v4522, 2
    %v4524 = vadd.f32 %v4522, %v4523
    %v4525 = vrot.slane %v4524, 1
    %v4526 = vadd.f32 %v4524, %v4525
    %v4527 = vadd.f32 %v4506, %v4507
    %v4528 = vrot.slane %v4527, 4
    %v4529 = vadd.f32 %v4527, %v4528
    %v4530 = vrot.slane %v4529, 2
    %v4531 = vadd.f32 %v4529, %v4530
    %v4532 = vrot.slane %v4531, 1
    %v4533 = vadd.f32 %v4531, %v4532
    %v4534 = vadd.f32 %v4508, %v4509
    %v4535 = vrot.slane %v4534, 4
    %v4536 = vadd.f32 %v4534, %v4535
    %v4537 = vrot.slane %v4536, 2
    %v4538 = vadd.f32 %v4536, %v4537
    %v4539 = vrot.slane %v4538, 1
    %v4540 = vadd.f32 %v4538, %v4539
    %v4541 = vadd.f32 %v4510, %v4511
    %v4542 = vrot.slane %v4541, 4
    %v4543 = vadd.f32 %v4541, %v4542
    %v4544 = vrot.slane %v4543, 2
    %v4545 = vadd.f32 %v4543, %v4544
    %v4546 = vrot.slane %v4545, 1
    %v4547 = vadd.f32 %v4545, %v4546
    %v4548 = vadd.f32 %v4512, %v4513
    %v4549 = vrot.slane %v4548, 4
    %v4550 = vadd.f32 %v4548, %v4549
    %v4551 = vrot.slane %v4550, 2
    %v4552 = vadd.f32 %v4550, %v4551
    %v4553 = vrot.slane %v4552, 1
    %v4554 = vadd.f32 %v4552, %v4553
    %v4555 = vadd.f32 %v4514, %v4515
    %v4556 = vrot.slane %v4555, 4
    %v4557 = vadd.f32 %v4555, %v4556
    %v4558 = vrot.slane %v4557, 2
    %v4559 = vadd.f32 %v4557, %v4558
    %v4560 = vrot.slane %v4559, 1
    %v4561 = vadd.f32 %v4559, %v4560
    %v4562 = vadd.f32 %v4516, %v4517
    %v4563 = vrot.slane %v4562, 4
    %v4564 = vadd.f32 %v4562, %v4563
    %v4565 = vrot.slane %v4564, 2
    %v4566 = vadd.f32 %v4564, %v4565
    %v4567 = vrot.slane %v4566, 1
    %v4568 = vadd.f32 %v4566, %v4567
    %v4569 = vadd.f32 %v4518, %v4519
    %v4570 = vrot.slane %v4569, 4
    %v4571 = vadd.f32 %v4569, %v4570
    %v4572 = vrot.slane %v4571, 2
    %v4573 = vadd.f32 %v4571, %v4572
    %v4574 = vrot.slane %v4573, 1
    %v4575 = vadd.f32 %v4573, %v4574
    %v4584 = vsel %vm3534, %v4533, %v4526
    %v4585 = vsel %vm3536, %v4540, %v4584
    %v4586 = vsel %vm3538, %v4547, %v4585
    %v4587 = vsel %vm3540, %v4554, %v4586
    %v4588 = vsel %vm3542, %v4561, %v4587
    %v4589 = vsel %vm3544, %v4568, %v4588
    %v4590 = vsel %vm3546, %v4575, %v4589
    %s4592 = scalar_lea.vmem [#allocation5], 48
    %4593 = vst [vmem:[%s4592] sm:$0xff] %v4590
    %s4594 = scalar_lea.vmem [#allocation3], %s4486
    %v4595 = vld [vmem:[%s4594] sm:$0xff]
    %v4596 = vld [vmem:[%s4594 + $0x8] sm:$0xff]
    %v4597 = vld [vmem:[%s4594 + $0x10] sm:$0xff]
    %v4598 = vld [vmem:[%s4594 + $0x18] sm:$0xff]
    %v4599 = vld [vmem:[%s4594 + $0x20] sm:$0xff]
    %v4600 = vld [vmem:[%s4594 + $0x28] sm:$0xff]
    %v4601 = vld [vmem:[%s4594 + $0x30] sm:$0xff]
    %v4602 = vld [vmem:[%s4594 + $0x38] sm:$0xff]
    %v4603 = vld [vmem:[%s4594 + $0x40] sm:$0xff]
    %v4604 = vld [vmem:[%s4594 + $0x48] sm:$0xff]
    %v4605 = vld [vmem:[%s4594 + $0x50] sm:$0xff]
    %v4606 = vld [vmem:[%s4594 + $0x58] sm:$0xff]
    %v4607 = vld [vmem:[%s4594 + $0x60] sm:$0xff]
    %v4608 = vld [vmem:[%s4594 + $0x68] sm:$0xff]
    %v4609 = vld [vmem:[%s4594 + $0x70] sm:$0xff]
    %v4610 = vld [vmem:[%s4594 + $0x78] sm:$0xff]
    %v4611 = vmul.f32 %v4470, %v4595
    %v4612 = vmul.f32 %v4471, %v4596
    %v4613 = vmul.f32 %v4472, %v4597
    %v4614 = vmul.f32 %v4473, %v4598
    %v4615 = vmul.f32 %v4474, %v4599
    %v4616 = vmul.f32 %v4475, %v4600
    %v4617 = vmul.f32 %v4476, %v4601
    %v4618 = vmul.f32 %v4477, %v4602
    %v4619 = vmul.f32 %v4478, %v4603
    %v4620 = vmul.f32 %v4479, %v4604
    %v4621 = vmul.f32 %v4480, %v4605
    %v4622 = vmul.f32 %v4481, %v4606
    %v4623 = vmul.f32 %v4482, %v4607
    %v4624 = vmul.f32 %v4483, %v4608
    %v4625 = vmul.f32 %v4484, %v4609
    %v4626 = vmul.f32 %v4485, %v4610
    %s4627 = scalar_lea.vmem [#allocation4], %s4486
    %v4628 = vld [vmem:[%s4627] sm:$0xff]
    %v4629 = vld [vmem:[%s4627 + $0x8] sm:$0xff]
    %v4630 = vld [vmem:[%s4627 + $0x10] sm:$0xff]
    %v4631 = vld [vmem:[%s4627 + $0x18] sm:$0xff]
    %v4632 = vld [vmem:[%s4627 + $0x20] sm:$0xff]
    %v4633 = vld [vmem:[%s4627 + $0x28] sm:$0xff]
    %v4634 = vld [vmem:[%s4627 + $0x30] sm:$0xff]
    %v4635 = vld [vmem:[%s4627 + $0x38] sm:$0xff]
    %v4636 = vld [vmem:[%s4627 + $0x40] sm:$0xff]
    %v4637 = vld [vmem:[%s4627 + $0x48] sm:$0xff]
    %v4638 = vld [vmem:[%s4627 + $0x50] sm:$0xff]
    %v4639 = vld [vmem:[%s4627 + $0x58] sm:$0xff]
    %v4640 = vld [vmem:[%s4627 + $0x60] sm:$0xff]
    %v4641 = vld [vmem:[%s4627 + $0x68] sm:$0xff]
    %v4642 = vld [vmem:[%s4627 + $0x70] sm:$0xff]
    %v4643 = vld [vmem:[%s4627 + $0x78] sm:$0xff]
    %v4644 = vadd.f32 %v4611, %v4628
    %v4645 = vadd.f32 %v4612, %v4629
    %v4646 = vadd.f32 %v4613, %v4630
    %v4647 = vadd.f32 %v4614, %v4631
    %v4648 = vadd.f32 %v4615, %v4632
    %v4649 = vadd.f32 %v4616, %v4633
    %v4650 = vadd.f32 %v4617, %v4634
    %v4651 = vadd.f32 %v4618, %v4635
    %v4652 = vadd.f32 %v4619, %v4636
    %v4653 = vadd.f32 %v4620, %v4637
    %v4654 = vadd.f32 %v4621, %v4638
    %v4655 = vadd.f32 %v4622, %v4639
    %v4656 = vadd.f32 %v4623, %v4640
    %v4657 = vadd.f32 %v4624, %v4641
    %v4658 = vadd.f32 %v4625, %v4642
    %v4659 = vadd.f32 %v4626, %v4643
    %s4660 = smul.u32 56, 16
    %s4661 = scalar_lea.vmem [#allocation2], %s4660
    %v4662 = vld [vmem:[%s4661] sm:$0xff]
    %v4663 = vld [vmem:[%s4661 + $0x8] sm:$0xff]
    %v4664 = vld [vmem:[%s4661 + $0x10] sm:$0xff]
    %v4665 = vld [vmem:[%s4661 + $0x18] sm:$0xff]
    %v4666 = vld [vmem:[%s4661 + $0x20] sm:$0xff]
    %v4667 = vld [vmem:[%s4661 + $0x28] sm:$0xff]
    %v4668 = vld [vmem:[%s4661 + $0x30] sm:$0xff]
    %v4669 = vld [vmem:[%s4661 + $0x38] sm:$0xff]
    %v4670 = vld [vmem:[%s4661 + $0x40] sm:$0xff]
    %v4671 = vld [vmem:[%s4661 + $0x48] sm:$0xff]
    %v4672 = vld [vmem:[%s4661 + $0x50] sm:$0xff]
    %v4673 = vld [vmem:[%s4661 + $0x58] sm:$0xff]
    %v4674 = vld [vmem:[%s4661 + $0x60] sm:$0xff]
    %v4675 = vld [vmem:[%s4661 + $0x68] sm:$0xff]
    %v4676 = vld [vmem:[%s4661 + $0x70] sm:$0xff]
    %v4677 = vld [vmem:[%s4661 + $0x78] sm:$0xff]
    %v4678 = vmul.f32 %v4662, %v4644
    %v4679 = vmul.f32 %v4663, %v4645
    %v4680 = vmul.f32 %v4664, %v4646
    %v4681 = vmul.f32 %v4665, %v4647
    %v4682 = vmul.f32 %v4666, %v4648
    %v4683 = vmul.f32 %v4667, %v4649
    %v4684 = vmul.f32 %v4668, %v4650
    %v4685 = vmul.f32 %v4669, %v4651
    %v4686 = vmul.f32 %v4670, %v4652
    %v4687 = vmul.f32 %v4671, %v4653
    %v4688 = vmul.f32 %v4672, %v4654
    %v4689 = vmul.f32 %v4673, %v4655
    %v4690 = vmul.f32 %v4674, %v4656
    %v4691 = vmul.f32 %v4675, %v4657
    %v4692 = vmul.f32 %v4676, %v4658
    %v4693 = vmul.f32 %v4677, %v4659
    %v4694 = vadd.f32 %v4678, %v4679
    %v4695 = vrot.slane %v4694, 4
    %v4696 = vadd.f32 %v4694, %v4695
    %v4697 = vrot.slane %v4696, 2
    %v4698 = vadd.f32 %v4696, %v4697
    %v4699 = vrot.slane %v4698, 1
    %v4700 = vadd.f32 %v4698, %v4699
    %v4701 = vadd.f32 %v4680, %v4681
    %v4702 = vrot.slane %v4701, 4
    %v4703 = vadd.f32 %v4701, %v4702
    %v4704 = vrot.slane %v4703, 2
    %v4705 = vadd.f32 %v4703, %v4704
    %v4706 = vrot.slane %v4705, 1
    %v4707 = vadd.f32 %v4705, %v4706
    %v4708 = vadd.f32 %v4682, %v4683
    %v4709 = vrot.slane %v4708, 4
    %v4710 = vadd.f32 %v4708, %v4709
    %v4711 = vrot.slane %v4710, 2
    %v4712 = vadd.f32 %v4710, %v4711
    %v4713 = vrot.slane %v4712, 1
    %v4714 = vadd.f32 %v4712, %v4713
    %v4715 = vadd.f32 %v4684, %v4685
    %v4716 = vrot.slane %v4715, 4
    %v4717 = vadd.f32 %v4715, %v4716
    %v4718 = vrot.slane %v4717, 2
    %v4719 = vadd.f32 %v4717, %v4718
    %v4720 = vrot.slane %v4719, 1
    %v4721 = vadd.f32 %v4719, %v4720
    %v4722 = vadd.f32 %v4686, %v4687
    %v4723 = vrot.slane %v4722, 4
    %v4724 = vadd.f32 %v4722, %v4723
    %v4725 = vrot.slane %v4724, 2
    %v4726 = vadd.f32 %v4724, %v4725
    %v4727 = vrot.slane %v4726, 1
    %v4728 = vadd.f32 %v4726, %v4727
    %v4729 = vadd.f32 %v4688, %v4689
    %v4730 = vrot.slane %v4729, 4
    %v4731 = vadd.f32 %v4729, %v4730
    %v4732 = vrot.slane %v4731, 2
    %v4733 = vadd.f32 %v4731, %v4732
    %v4734 = vrot.slane %v4733, 1
    %v4735 = vadd.f32 %v4733, %v4734
    %v4736 = vadd.f32 %v4690, %v4691
    %v4737 = vrot.slane %v4736, 4
    %v4738 = vadd.f32 %v4736, %v4737
    %v4739 = vrot.slane %v4738, 2
    %v4740 = vadd.f32 %v4738, %v4739
    %v4741 = vrot.slane %v4740, 1
    %v4742 = vadd.f32 %v4740, %v4741
    %v4743 = vadd.f32 %v4692, %v4693
    %v4744 = vrot.slane %v4743, 4
    %v4745 = vadd.f32 %v4743, %v4744
    %v4746 = vrot.slane %v4745, 2
    %v4747 = vadd.f32 %v4745, %v4746
    %v4748 = vrot.slane %v4747, 1
    %v4749 = vadd.f32 %v4747, %v4748
    %v4758 = vsel %vm3534, %v4707, %v4700
    %v4759 = vsel %vm3536, %v4714, %v4758
    %v4760 = vsel %vm3538, %v4721, %v4759
    %v4761 = vsel %vm3540, %v4728, %v4760
    %v4762 = vsel %vm3542, %v4735, %v4761
    %v4763 = vsel %vm3544, %v4742, %v4762
    %v4764 = vsel %vm3546, %v4749, %v4763
    %s4766 = scalar_lea.vmem [#allocation5], 56
    %4767 = vst [vmem:[%s4766] sm:$0xff] %v4764
    %v4768 = vld [vmem:[#allocation5] sm:$0xff]
    %v4769 = vld [vmem:[#allocation5 + $0x8] sm:$0xff]
    %v4770 = vld [vmem:[#allocation5 + $0x10] sm:$0xff]
    %v4771 = vld [vmem:[#allocation5 + $0x18] sm:$0xff]
    %v4772 = vld [vmem:[#allocation5 + $0x20] sm:$0xff]
    %v4773 = vld [vmem:[#allocation5 + $0x28] sm:$0xff]
    %v4774 = vld [vmem:[#allocation5 + $0x30] sm:$0xff]
    %v4775 = vld [vmem:[#allocation5 + $0x38] sm:$0xff]
    %v4776 = vld [vmem:[%s6] sm:$0xff]
    %v4777 = vld [vmem:[%s6 + $0x8] sm:$0xff]
    %v4778 = vld [vmem:[%s6 + $0x10] sm:$0xff]
    %v4779 = vld [vmem:[%s6 + $0x18] sm:$0xff]
    %v4780 = vld [vmem:[%s6 + $0x20] sm:$0xff]
    %v4781 = vld [vmem:[%s6 + $0x28] sm:$0xff]
    %v4782 = vld [vmem:[%s6 + $0x30] sm:$0xff]
    %v4783 = vld [vmem:[%s6 + $0x38] sm:$0xff]
    %v4784 = vld [vmem:[%s6 + $0x40] sm:$0xff]
    %v4785 = vld [vmem:[%s6 + $0x48] sm:$0xff]
    %v4786 = vld [vmem:[%s6 + $0x50] sm:$0xff]
    %v4787 = vld [vmem:[%s6 + $0x58] sm:$0xff]
    %v4788 = vld [vmem:[%s6 + $0x60] sm:$0xff]
    %v4789 = vld [vmem:[%s6 + $0x68] sm:$0xff]
    %v4790 = vld [vmem:[%s6 + $0x70] sm:$0xff]
    %v4791 = vld [vmem:[%s6 + $0x78] sm:$0xff]
    %4800 = vrot.lane.b32.xlu0 %v182, 112
    %v4801 = vpop.permute.xlu0 %4800
    %4802 = vrot.lane.b32.xlu0 %v187, 112
    %v4803 = vpop.permute.xlu0 %4802
    %4804 = vrot.lane.b32.xlu0 %v192, 112
    %v4805 = vpop.permute.xlu0 %4804
    %4806 = vrot.lane.b32.xlu0 %v197, 112
    %v4807 = vpop.permute.xlu0 %4806
    %4808 = vrot.lane.b32.xlu0 %v202, 112
    %v4809 = vpop.permute.xlu0 %4808
    %4810 = vrot.lane.b32.xlu0 %v207, 112
    %v4811 = vpop.permute.xlu0 %4810
    %4812 = vrot.lane.b32.xlu0 %v212, 112
    %v4813 = vpop.permute.xlu0 %4812
    %4814 = vrot.lane.b32.xlu0 %v217, 112
    %v4815 = vpop.permute.xlu0 %4814
    %4824 = vmatprep.subr.mxu0 0.0
    %4825 = vmatpush1.msra.mxu0 %v4791
    %4826 = vmatprep.subr.mxu0 0.0
    %4827 = vmatpush1.msra.mxu0 %v4790
    %4828 = vmatprep.subr.mxu0 0.0
    %4829 = vmatpush1.msra.mxu0 %v4789
    %4830 = vmatprep.subr.mxu0 0.0
    %4831 = vmatpush1.msra.mxu0 %v4788
    %4832 = vmatprep.subr.mxu0 0.0
    %4833 = vmatpush1.msra.mxu0 %v4787
    %4834 = vmatprep.subr.mxu0 0.0
    %4835 = vmatpush1.msra.mxu0 %v4786
    %4836 = vmatprep.subr.mxu0 0.0
    %4837 = vmatpush1.msra.mxu0 %v4785
    %4838 = vmatprep.subr.mxu0 0.0
    %4839 = vmatpush1.msra.mxu0 %v4784
    %4840 = vmatprep.subr.mxu0 0.0
    %4841 = vmatpush1.msra.mxu0 %v4783
    %4842 = vmatprep.subr.mxu0 0.0
    %4843 = vmatpush1.msra.mxu0 %v4782
    %4844 = vmatprep.subr.mxu0 0.0
    %4845 = vmatpush1.msra.mxu0 %v4781
    %4846 = vmatprep.subr.mxu0 0.0
    %4847 = vmatpush1.msra.mxu0 %v4780
    %4848 = vmatprep.subr.mxu0 0.0
    %4849 = vmatpush1.msra.mxu0 %v4779
    %4850 = vmatprep.subr.mxu0 0.0
    %4851 = vmatpush1.msra.mxu0 %v4778
    %4852 = vmatprep.subr.mxu0 0.0
    %4853 = vmatpush1.msra.mxu0 %v4777
    %4854 = vmatprep.subr.mxu0 0.0
    %4855 = vmatpush1.msra.mxu0 %v4776
    %4856 = vmatprep.subr.mxu0 0.0
    %4857 = vmatpush2.msra.mxu0 0.0
    %4858 = vmatprep.subr.mxu0 0.0
    %4859 = vmatpush2.msra.mxu0 0.0
    %4860 = vmatprep.subr.mxu0 0.0
    %4861 = vmatpush2.msra.mxu0 0.0
    %4862 = vmatprep.subr.mxu0 0.0
    %4863 = vmatpush2.msra.mxu0 0.0
    %4864 = vmatprep.subr.mxu0 0.0
    %4865 = vmatpush2.msra.mxu0 0.0
    %4866 = vmatprep.subr.mxu0 0.0
    %4867 = vmatpush2.msra.mxu0 0.0
    %4868 = vmatprep.subr.mxu0 0.0
    %4869 = vmatpush2.msra.mxu0 0.0
    %4870 = vmatprep.subr.mxu0 0.0
    %4871 = vmatpush2.msra.mxu0 0.0
    %4872 = vmatprep.subr.mxu0 0.0
    %4873 = vmatpush2.msra.mxu0 0.0
    %4874 = vmatprep.subr.mxu0 0.0
    %4875 = vmatpush2.msra.mxu0 0.0
    %4876 = vmatprep.subr.mxu0 0.0
    %4877 = vmatpush2.msra.mxu0 0.0
    %4878 = vmatprep.subr.mxu0 0.0
    %4879 = vmatpush2.msra.mxu0 0.0
    %4880 = vmatprep.subr.mxu0 0.0
    %4881 = vmatpush2.msra.mxu0 0.0
    %4882 = vmatprep.subr.mxu0 0.0
    %4883 = vmatpush2.msra.mxu0 0.0
    %4884 = vmatprep.subr.mxu0 0.0
    %4885 = vmatpush2.msra.mxu0 0.0
    %4886 = vmatprep.subr.mxu0 0.0
    %4887 = vmatpush2.msra.mxu0 0.0
    %4888 = vmatprep.mubr.f32.mxu0 0.0
    %4889 = vmatmul.mubr.f32.gmra.mxu0 %v4768
    %v4890 = vpop.f32.mrf.mxu0
    %v4891 = vadd.f32 %v4801, %v4890
    %v4892 = vpop.f32.mrf.mxu0
    %4893 = vmatprep.mubr.f32.mxu0 0.0
    %4894 = vmatmul.mubr.f32.gmra.mxu0 %v4769
    %v4895 = vpop.f32.mrf.mxu0
    %v4896 = vadd.f32 %v4803, %v4895
    %v4897 = vpop.f32.mrf.mxu0
    %4898 = vmatprep.mubr.f32.mxu0 0.0
    %4899 = vmatmul.mubr.f32.gmra.mxu0 %v4770
    %v4900 = vpop.f32.mrf.mxu0
    %v4901 = vadd.f32 %v4805, %v4900
    %v4902 = vpop.f32.mrf.mxu0
    %4903 = vmatprep.mubr.f32.mxu0 0.0
    %4904 = vmatmul.mubr.f32.gmra.mxu0 %v4771
    %v4905 = vpop.f32.mrf.mxu0
    %v4906 = vadd.f32 %v4807, %v4905
    %v4907 = vpop.f32.mrf.mxu0
    %4908 = vmatprep.mubr.f32.mxu0 0.0
    %4909 = vmatmul.mubr.f32.gmra.mxu0 %v4772
    %v4910 = vpop.f32.mrf.mxu0
    %v4911 = vadd.f32 %v4809, %v4910
    %v4912 = vpop.f32.mrf.mxu0
    %4913 = vmatprep.mubr.f32.mxu0 0.0
    %4914 = vmatmul.mubr.f32.gmra.mxu0 %v4773
    %v4915 = vpop.f32.mrf.mxu0
    %v4916 = vadd.f32 %v4811, %v4915
    %v4917 = vpop.f32.mrf.mxu0
    %4918 = vmatprep.mubr.f32.mxu0 0.0
    %4919 = vmatmul.mubr.f32.gmra.mxu0 %v4774
    %v4920 = vpop.f32.mrf.mxu0
    %v4921 = vadd.f32 %v4813, %v4920
    %v4922 = vpop.f32.mrf.mxu0
    %4923 = vmatprep.mubr.f32.mxu0 0.0
    %4924 = vmatmul.mubr.f32.gmra.mxu0 %v4775
    %v4925 = vpop.f32.mrf.mxu0
    %v4926 = vadd.f32 %v4815, %v4925
    %v4927 = vpop.f32.mrf.mxu0
    %4928 = vdwg.mxu0
    %v4929 = vld [vmem:[%s7] sm:$0x1]
    %v4931 = vlaneseq
    %v4932 = vshrl.u32 %v4931, 7
    %v4933 = vsub.s32 0, %v4932
    %v4934 = vrot.slane %v4929, %v4933
    %v4936 = vadd.f32 %v4891, %v4934
    %v4937 = vadd.f32 %v4896, %v4934
    %v4938 = vadd.f32 %v4901, %v4934
    %v4939 = vadd.f32 %v4906, %v4934
    %v4940 = vadd.f32 %v4911, %v4934
    %v4941 = vadd.f32 %v4916, %v4934
    %v4942 = vadd.f32 %v4921, %v4934
    %v4943 = vadd.f32 %v4926, %v4934
    %v4944 = vtanh.pop %v4936
    %v4945 = vtanh.pop %v4937
    %v4946 = vtanh.pop %v4938
    %v4947 = vtanh.pop %v4939
    %v4948 = vtanh.pop %v4940
    %v4949 = vtanh.pop %v4941
    %v4950 = vtanh.pop %v4942
    %v4951 = vtanh.pop %v4943
    %4952 = vst.msk [vmem:[%s8] sm:$0xff] %vm90, %v4944
    %4953 = vst.msk [vmem:[%s8 + $0x8] sm:$0xff] %vm90, %v4945
    %4954 = vst.msk [vmem:[%s8 + $0x10] sm:$0xff] %vm90, %v4946
    %4955 = vst.msk [vmem:[%s8 + $0x18] sm:$0xff] %vm90, %v4947
    %4956 = vst.msk [vmem:[%s8 + $0x20] sm:$0xff] %vm90, %v4948
    %4957 = vst.msk [vmem:[%s8 + $0x28] sm:$0xff] %vm90, %v4949
    %4958 = vst.msk [vmem:[%s8 + $0x30] sm:$0xff] %vm90, %v4950
    %4959 = vst.msk [vmem:[%s8 + $0x38] sm:$0xff] %vm90, %v4951
    // Predicated region
    $region46: #{tpu_custom_call.1} parent=1 // pred_check
      _
    $region47: #{tpu_custom_call.1} parent=1 // pred_check_branch
      %4961 = sbr.rel (0) target = $region49
    $region48: #{tpu_custom_call.1} parent=1 // pred_region
      _
    $region49: #{tpu_custom_call.1} parent=1 // pred_fallthru
      _
    // Predicated region
    $region50: #{tpu_custom_call.1} parent=1 // pred_check
      _
    $region51: #{tpu_custom_call.1} parent=1 // pred_check_branch
      %4963 = sbr.rel (0) target = $region53
    $region52: #{tpu_custom_call.1} parent=1 // pred_region
      _
    $region53: #{tpu_custom_call.1} parent=1 // pred_fallthru
      _
    %4964 = vsyncpa [#allocation7], 1
    %4965 = vsyncpa [#allocation9], 1

</llo_original>
